<compile_context>
chip_gen: v5e
topology: v5e:2x2
jax: 0.10.0
libtpu: 0.0.40
codegen_flags: <defaults>
</compile_context>

<pallas_src>
import functools

import jax
import jax.numpy as jnp
from jax.experimental import pallas as pl
from jax.experimental.pallas import tpu as pltpu


# ------------------------------- helpers -------------------------------------


def _fit_block(dim, target):
    """Use `target` if it evenly tiles `dim`, else the full dim (satisfies the
    (8,128) rule via the full-dim escape hatch)."""
    return dim if (dim <= target or dim % target != 0) else target


# ----------------------------- Pallas kernels --------------------------------


def pallas_matmul_bias(x, w, b, activation=None, tm=256, tn=256, tk=512):
    """y = activation(x @ w + b); x:[M,K] f32, w:[K,N] (bf16 ok), b:[N] f32 -> [M,N] f32.
    Tiled (M,N,K) grid, bf16 MXU operands, f32 VMEM accumulator."""
    M, K = x.shape
    _, N = w.shape
    tm, tn, tk = _fit_block(M, tm), _fit_block(N, tn), _fit_block(K, tk)

    def kernel(x_ref, w_ref, b_ref, o_ref, acc_ref):
        @pl.when(pl.program_id(2) == 0)
        def _():
            acc_ref[...] = jnp.zeros_like(acc_ref)

        acc_ref[...] += jnp.dot(x_ref[...].astype(jnp.bfloat16),
                                w_ref[...].astype(jnp.bfloat16),
                                preferred_element_type=jnp.float32)

        @pl.when(pl.program_id(2) == pl.num_programs(2) - 1)
        def _():
            y = acc_ref[...] + b_ref[...].astype(jnp.float32)
            if activation == "gelu":
                y = jax.nn.gelu(y, approximate=True)
            o_ref[...] = y.astype(o_ref.dtype)

    return pl.pallas_call(
        kernel,
        out_shape=jax.ShapeDtypeStruct((M, N), jnp.float32),
        grid=(M // tm, N // tn, K // tk),
        in_specs=[
            pl.BlockSpec((tm, tk), lambda i, j, k: (i, k)),
            pl.BlockSpec((tk, tn), lambda i, j, k: (k, j)),
            pl.BlockSpec((1, tn), lambda i, j, k: (0, j)),
        ],
        out_specs=pl.BlockSpec((tm, tn), lambda i, j, k: (i, j)),
        scratch_shapes=[pltpu.VMEM((tm, tn), jnp.float32)],
        compiler_params=pltpu.CompilerParams(
            dimension_semantics=("parallel", "parallel", "arbitrary")),
    )(x, w, b.reshape(1, N))


def pallas_layernorm(x, gamma, beta, residual=None, eps=1e-12):
    """LayerNorm over the last dim with (optional) fused residual add.
    x, residual: [M,H] f32; gamma/beta: [H]."""
    M, H = x.shape
    tm = _fit_block(M, 256)

    def kernel(*refs):
        if residual is not None:
            x_ref, r_ref, g_ref, b_ref, o_ref = refs
            xv = x_ref[...].astype(jnp.float32) + r_ref[...].astype(jnp.float32)
        else:
            x_ref, g_ref, b_ref, o_ref = refs
            xv = x_ref[...].astype(jnp.float32)
        mu = jnp.mean(xv, axis=-1, keepdims=True)
        var = jnp.mean(jnp.square(xv - mu), axis=-1, keepdims=True)
        o_ref[...] = ((xv - mu) * jax.lax.rsqrt(var + eps)
                      * g_ref[...] + b_ref[...]).astype(o_ref.dtype)

    row_spec = pl.BlockSpec((tm, H), lambda i: (i, 0))
    vec_spec = pl.BlockSpec((1, H), lambda i: (0, 0))
    in_specs = [row_spec]
    args = [x]
    if residual is not None:
        in_specs.append(row_spec)
        args.append(residual)
    in_specs += [vec_spec, vec_spec]
    args += [gamma.reshape(1, H), beta.reshape(1, H)]

    return pl.pallas_call(
        kernel,
        out_shape=jax.ShapeDtypeStruct((M, H), jnp.float32),
        grid=(M // tm,),
        in_specs=in_specs,
        out_specs=row_spec,
        compiler_params=pltpu.CompilerParams(dimension_semantics=("parallel",)),
    )(*args)


def _head_attention(qh, kh, vh, scale, causal):
    """Single-head attention. qh:[Sq,Dh], kh/vh:[Sk,Dh] f32 -> [Sq,Dh] f32."""
    s = jax.lax.dot_general(
        (qh * scale).astype(jnp.bfloat16), kh.astype(jnp.bfloat16),
        dimension_numbers=(((1,), (1,)), ((), ())),
        preferred_element_type=jnp.float32)                      # [Sq,Sk]
    if causal:
        qi = jax.lax.broadcasted_iota(jnp.int32, s.shape, 0)
        kj = jax.lax.broadcasted_iota(jnp.int32, s.shape, 1)
        s = jnp.where(kj <= qi, s, -1e30)
    m = jnp.max(s, axis=-1, keepdims=True)
    p = jnp.exp(s - m)
    inv = pl.reciprocal(jnp.sum(p, axis=-1, keepdims=True), approx=True)
    o = jnp.dot(p.astype(jnp.bfloat16), vh.astype(jnp.bfloat16),
                preferred_element_type=jnp.float32)              # [Sq,Dh]
    return o * inv


def pallas_self_attention(qkv, nH, causal):
    """Self-attention from a packed [B,S,3H] QKV tensor (heads split in-kernel)."""
    B, S, H3 = qkv.shape
    H = H3 // 3
    Dh = H // nH
    scale = 1.0 / float(Dh) ** 0.5

    def kernel(qkv_ref, o_ref):
        x = qkv_ref[0].astype(jnp.float32)                       # [S, 3H]
        outs = []
        for h in range(nH):                                       # static unroll
            lo = h * Dh
            outs.append(_head_attention(x[:, lo:lo + Dh],
                                        x[:, H + lo:H + lo + Dh],
                                        x[:, 2 * H + lo:2 * H + lo + Dh],
                                        scale, causal))
        o_ref[0] = jnp.concatenate(outs, axis=-1).astype(o_ref.dtype)

    return pl.pallas_call(
        kernel,
        out_shape=jax.ShapeDtypeStruct((B, S, H), jnp.float32),
        grid=(B,),
        in_specs=[pl.BlockSpec((1, S, H3), lambda b: (b, 0, 0))],
        out_specs=pl.BlockSpec((1, S, H), lambda b: (b, 0, 0)),
        compiler_params=pltpu.CompilerParams(dimension_semantics=("parallel",)),
    )(qkv)


def pallas_cross_attention(q, kv, nH):
    """Cross-attention: q:[B,Sq,H], kv:[B,Sk,2H] (K|V packed)."""
    B, Sq, H = q.shape
    _, Sk, H2 = kv.shape
    Dh = H // nH
    scale = 1.0 / float(Dh) ** 0.5

    def kernel(q_ref, kv_ref, o_ref):
        qx = q_ref[0].astype(jnp.float32)                        # [Sq, H]
        kx = kv_ref[0].astype(jnp.float32)                       # [Sk, 2H]
        outs = []
        for h in range(nH):
            lo = h * Dh
            outs.append(_head_attention(qx[:, lo:lo + Dh],
                                        kx[:, lo:lo + Dh],
                                        kx[:, H + lo:H + lo + Dh],
                                        scale, False))
        o_ref[0] = jnp.concatenate(outs, axis=-1).astype(o_ref.dtype)

    return pl.pallas_call(
        kernel,
        out_shape=jax.ShapeDtypeStruct((B, Sq, H), jnp.float32),
        grid=(B,),
        in_specs=[pl.BlockSpec((1, Sq, H), lambda b: (b, 0, 0)),
                  pl.BlockSpec((1, Sk, H2), lambda b: (b, 0, 0))],
        out_specs=pl.BlockSpec((1, Sq, H), lambda b: (b, 0, 0)),
        compiler_params=pltpu.CompilerParams(dimension_semantics=("parallel",)),
    )(q, kv)


def pallas_lm_head_loss(x, w, b, labels, mask, tv=2048):
    """Fused LM head + mean token cross-entropy ("flash-CE").
    x:[M,H] f32, w:[H,V] (bf16 ok), b:[V] f32, labels:[M,1] i32, mask:[M,1] f32 -> [1,1].
    Tiles the vocab axis with an online logsumexp; logits never leave VMEM."""
    M, H = x.shape
    _, V = w.shape
    tv = _fit_block(V, tv)
    nv = V // tv

    def kernel(x_ref, w_ref, b_ref, y_ref, mk_ref, loss_ref, mx_sc, l_sc, pick_sc):
        v = pl.program_id(0)

        @pl.when(v == 0)
        def _():
            mx_sc[...] = jnp.full_like(mx_sc, -1e30)
            l_sc[...] = jnp.zeros_like(l_sc)
            pick_sc[...] = jnp.zeros_like(pick_sc)

        logits = jnp.dot(x_ref[...].astype(jnp.bfloat16),
                         w_ref[...].astype(jnp.bfloat16),
                         preferred_element_type=jnp.float32)
        logits = logits + b_ref[...].astype(jnp.float32)         # [M, tv]

        m_prev = mx_sc[...]
        m_new = jnp.maximum(m_prev, jnp.max(logits, axis=-1, keepdims=True))
        l_sc[...] = (l_sc[...] * jnp.exp(m_prev - m_new)
                     + jnp.sum(jnp.exp(logits - m_new), axis=-1, keepdims=True))
        mx_sc[...] = m_new

        col = jax.lax.broadcasted_iota(jnp.int32, logits.shape, 1) + v * tv
        onehot = (col == y_ref[...]).astype(jnp.float32)          # label in exactly one tile
        pick_sc[...] += jnp.sum(logits * onehot, axis=-1, keepdims=True)

        @pl.when(v == pl.num_programs(0) - 1)
        def _():
            msk = mk_ref[...].astype(jnp.float32)
            per_tok = (mx_sc[...] + jnp.log(l_sc[...]) - pick_sc[...]) * msk
            total = jnp.sum(per_tok, axis=0, keepdims=True)       # [1,1]
            cnt = jnp.sum(msk, axis=0, keepdims=True)             # [1,1]
            loss_ref[...] = total / jnp.maximum(cnt, 1.0)

    return pl.pallas_call(
        kernel,
        out_shape=jax.ShapeDtypeStruct((1, 1), jnp.float32),
        grid=(nv,),
        in_specs=[
            pl.BlockSpec((M, H), lambda v_: (0, 0)),     # stays VMEM-resident across v
            pl.BlockSpec((H, tv), lambda v_: (0, v_)),
            pl.BlockSpec((1, tv), lambda v_: (0, v_)),
            pl.BlockSpec((M, 1), lambda v_: (0, 0)),
            pl.BlockSpec((M, 1), lambda v_: (0, 0)),
        ],
        out_specs=pl.BlockSpec((1, 1), lambda v_: (0, 0)),
        scratch_shapes=[pltpu.VMEM((M, 1), jnp.float32)] * 3,
        compiler_params=pltpu.CompilerParams(dimension_semantics=("arbitrary",)),
    )(x, w, b.reshape(1, V), labels, mask)


# ------------------------------ model (glue) ----------------------------------


def init_params(key, cfg):
    H, F, V, P = cfg["hidden"], cfg["ffn"], cfg["vocab"], cfg["max_pos"]
    kit = iter(jax.random.split(key, 32))

    def dense(i, o):  # weights stored bf16 (MXU operand dtype), bias f32
        return {"w": (0.02 * jax.random.normal(next(kit), (i, o), jnp.float32)
                      ).astype(jnp.bfloat16),
                "b": jnp.zeros((o,), jnp.float32)}

    def ln():
        return {"g": jnp.ones((H,), jnp.float32), "b": jnp.zeros((H,), jnp.float32)}

    return {
        "tok_emb": 0.02 * jax.random.normal(next(kit), (V, H), jnp.float32),
        "pos_emb": 0.02 * jax.random.normal(next(kit), (P, H), jnp.float32),
        "emb_ln_enc": ln(),
        "emb_ln_dec": ln(),
        "enc": {"qkv": dense(H, 3 * H), "o": dense(H, H), "ln1": ln(),
                "ff1": dense(H, F), "ff2": dense(F, H), "ln2": ln()},
        "dec": {"qkv": dense(H, 3 * H), "so": dense(H, H), "ln1": ln(),
                "cq": dense(H, H), "ckv": dense(H, 2 * H), "co": dense(H, H),
                "ln2": ln(),
                "ff1": dense(H, F), "ff2": dense(F, H), "ln3": ln()},
        "lm_head": dense(H, V),
    }


def augmentor_forward(params, src_ids, tgt_labels, cfg):
    """Seq2seq LM loss, mirroring Augmentor.forward on tokenized ids."""
    B, Ss = src_ids.shape
    _, St = tgt_labels.shape
    H, nH = cfg["hidden"], cfg["heads"]

    # ---- encoder ----
    enc_x = params["tok_emb"][src_ids] + params["pos_emb"][:Ss][None]
    enc_h = pallas_layernorm(enc_x.reshape(B * Ss, H),
                             params["emb_ln_enc"]["g"], params["emb_ln_enc"]["b"])
    pe = params["enc"]
    qkv = pallas_matmul_bias(enc_h, pe["qkv"]["w"], pe["qkv"]["b"])          # [B*Ss, 3H]
    attn = pallas_self_attention(qkv.reshape(B, Ss, 3 * H), nH=nH, causal=False)
    a = pallas_matmul_bias(attn.reshape(B * Ss, H), pe["o"]["w"], pe["o"]["b"])
    h = pallas_layernorm(a, pe["ln1"]["g"], pe["ln1"]["b"], residual=enc_h)
    f = pallas_matmul_bias(h, pe["ff1"]["w"], pe["ff1"]["b"], activation="gelu")
    f = pallas_matmul_bias(f, pe["ff2"]["w"], pe["ff2"]["b"])
    enc_out = pallas_layernorm(f, pe["ln2"]["g"], pe["ln2"]["b"], residual=h)  # [B*Ss, H]

    # ---- decoder (inputs = labels shifted right, start token = CLS) ----
    dec_in = jnp.concatenate(
        [jnp.full((B, 1), cfg["cls_id"], tgt_labels.dtype), tgt_labels[:, :-1]], axis=1)
    dec_x = params["tok_emb"][dec_in] + params["pos_emb"][:St][None]
    dec_h = pallas_layernorm(dec_x.reshape(B * St, H),
                             params["emb_ln_dec"]["g"], params["emb_ln_dec"]["b"])
    pd = params["dec"]
    qkv = pallas_matmul_bias(dec_h, pd["qkv"]["w"], pd["qkv"]["b"])          # [B*St, 3H]
    attn = pallas_self_attention(qkv.reshape(B, St, 3 * H), nH=nH, causal=True)
    a = pallas_matmul_bias(attn.reshape(B * St, H), pd["so"]["w"], pd["so"]["b"])
    h = pallas_layernorm(a, pd["ln1"]["g"], pd["ln1"]["b"], residual=dec_h)

    q = pallas_matmul_bias(h, pd["cq"]["w"], pd["cq"]["b"])                  # [B*St, H]
    kv = pallas_matmul_bias(enc_out, pd["ckv"]["w"], pd["ckv"]["b"])         # [B*Ss, 2H]
    attn = pallas_cross_attention(q.reshape(B, St, H), kv.reshape(B, Ss, 2 * H), nH=nH)
    a = pallas_matmul_bias(attn.reshape(B * St, H), pd["co"]["w"], pd["co"]["b"])
    h = pallas_layernorm(a, pd["ln2"]["g"], pd["ln2"]["b"], residual=h)
    f = pallas_matmul_bias(h, pd["ff1"]["w"], pd["ff1"]["b"], activation="gelu")
    f = pallas_matmul_bias(f, pd["ff2"]["w"], pd["ff2"]["b"])
    h = pallas_layernorm(f, pd["ln3"]["g"], pd["ln3"]["b"], residual=h)

    # ---- fused LM head + cross-entropy (ignore_index = -100, as HF) ----
    labels_flat = tgt_labels.reshape(B * St, 1).astype(jnp.int32)
    mask = (labels_flat != -100).astype(jnp.float32)
    loss = pallas_lm_head_loss(h, params["lm_head"]["w"], params["lm_head"]["b"],
                               labels_flat, mask)
    return loss[0, 0]


# --------------------------------- main ---------------------------------------


if __name__ == "__main__":
    cfg = dict(vocab=128, hidden=32, heads=2, ffn=64, max_pos=16,
               cls_id=1, pad_id=0)

    key = jax.random.PRNGKey(0)
    k_src, k_tgt = jax.random.split(key)
    B, Ss, St = 2, 8, 8
    # pre-tokenized ids (src: no special tokens; tgt: CLS-prefixed like the tokenizer)
    src_ids = jax.random.randint(k_src, (B, Ss), 5, cfg["vocab"], dtype=jnp.int32)
    tgt_ids = jax.random.randint(k_tgt, (B, St), 5, cfg["vocab"], dtype=jnp.int32)
    tgt_ids = tgt_ids.at[:, 0].set(cfg["cls_id"])

    params = init_params(jax.random.PRNGKey(42), cfg)

    fwd = jax.jit(functools.partial(augmentor_forward, params, cfg=cfg))
    loss = fwd(src_ids, tgt_ids)
    jax.block_until_ready(loss)
    assert loss.shape == () and jnp.isfinite(loss)
    print("KERNEL_OK")
</pallas_src>

<mosaic_0001>
module attributes {stable_mosaic.version = 11 : i64} {
  func.func @kernel(%arg0: i32, %arg1: memref<16x32xf32, #tpu.memory_space<vmem>>, %arg2: memref<1x32xf32, #tpu.memory_space<vmem>>, %arg3: memref<1x32xf32, #tpu.memory_space<vmem>>, %arg4: memref<16x32xf32, #tpu.memory_space<vmem>>) attributes {dimension_semantics = [#tpu.dimension_semantics<parallel>], iteration_bounds = array<i64: 1>, scalar_prefetch = 0 : i64, scratch_operands = 0 : i64, tpu.core_type = #tpu.core_type<tc>, window_params = [{transform_indices = @transform_0, window_bounds = array<i64: 16, 32>}, {pipeline_mode = #tpu.pipeline_mode<synchronous>, transform_indices = @transform_1, window_bounds = array<i64: 1, 32>}, {pipeline_mode = #tpu.pipeline_mode<synchronous>, transform_indices = @transform_2, window_bounds = array<i64: 1, 32>}, {transform_indices = @transform_3, window_bounds = array<i64: 16, 32>}]} {
    %c0 = arith.constant 0 : index
    %c0_0 = arith.constant 0 : index
    %0 = vector.load %arg1[%c0, %c0_0] : memref<16x32xf32, #tpu.memory_space<vmem>>, vector<16x32xf32>
    %cst = arith.constant dense<0.000000e+00> : vector<16xf32>
    %1 = vector.multi_reduction <add>, %0, %cst [1] : vector<16x32xf32> to vector<16xf32>
    %2 = vector.shape_cast %1 : vector<16xf32> to vector<16x1xf32>
    %cst_1 = arith.constant 3.200000e+01 : f32
    %3 = vector.broadcast %cst_1 : f32 to vector<16x1xf32>
    %4 = arith.divf %2, %3 : vector<16x1xf32>
    %5 = vector.broadcast %4 : vector<16x1xf32> to vector<16x32xf32>
    %6 = arith.subf %0, %5 : vector<16x32xf32>
    %7 = arith.mulf %6, %6 : vector<16x32xf32>
    %cst_2 = arith.constant dense<0.000000e+00> : vector<16xf32>
    %8 = vector.multi_reduction <add>, %7, %cst_2 [1] : vector<16x32xf32> to vector<16xf32>
    %9 = vector.shape_cast %8 : vector<16xf32> to vector<16x1xf32>
    %cst_3 = arith.constant 3.200000e+01 : f32
    %10 = vector.broadcast %cst_3 : f32 to vector<16x1xf32>
    %11 = arith.divf %9, %10 : vector<16x1xf32>
    %12 = vector.broadcast %4 : vector<16x1xf32> to vector<16x32xf32>
    %13 = arith.subf %0, %12 : vector<16x32xf32>
    %cst_4 = arith.constant 9.99999996E-13 : f32
    %14 = vector.broadcast %cst_4 : f32 to vector<16x1xf32>
    %15 = arith.addf %11, %14 : vector<16x1xf32>
    %16 = math.rsqrt %15 : vector<16x1xf32>
    %17 = vector.broadcast %16 : vector<16x1xf32> to vector<16x32xf32>
    %18 = arith.mulf %13, %17 : vector<16x32xf32>
    %c0_5 = arith.constant 0 : index
    %c0_6 = arith.constant 0 : index
    %19 = vector.load %arg2[%c0_5, %c0_6] : memref<1x32xf32, #tpu.memory_space<vmem>>, vector<1x32xf32>
    %20 = vector.broadcast %19 : vector<1x32xf32> to vector<16x32xf32>
    %21 = arith.mulf %18, %20 : vector<16x32xf32>
    %c0_7 = arith.constant 0 : index
    %c0_8 = arith.constant 0 : index
    %22 = vector.load %arg3[%c0_7, %c0_8] : memref<1x32xf32, #tpu.memory_space<vmem>>, vector<1x32xf32>
    %23 = vector.broadcast %22 : vector<1x32xf32> to vector<16x32xf32>
    %24 = arith.addf %21, %23 : vector<16x32xf32>
    %c0_9 = arith.constant 0 : index
    %c0_10 = arith.constant 0 : index
    %25 = vector.load %arg4[%c0_9, %c0_10] : memref<16x32xf32, #tpu.memory_space<vmem>>, vector<16x32xf32>
    tpu.vector_store %arg4[%c0_9, %c0_10], %24 {strides = array<i32>} : memref<16x32xf32, #tpu.memory_space<vmem>>, vector<16x32xf32>,
    return
  }
  func.func @transform_0(%arg0: i32) -> (i32, i32) {
    %c0_i32 = arith.constant 0 : i32
    %c0_i32_0 = arith.constant 0 : i32
    return %arg0, %c0_i32 : i32, i32
  }
  func.func @transform_1(%arg0: i32) -> (i32, i32) {
    %c0_i32 = arith.constant 0 : i32
    %c0_i32_0 = arith.constant 0 : i32
    %c0_i32_1 = arith.constant 0 : i32
    return %c0_i32, %c0_i32_0 : i32, i32
  }
  func.func @transform_2(%arg0: i32) -> (i32, i32) {
    %c0_i32 = arith.constant 0 : i32
    %c0_i32_0 = arith.constant 0 : i32
    %c0_i32_1 = arith.constant 0 : i32
    return %c0_i32, %c0_i32_0 : i32, i32
  }
  func.func @transform_3(%arg0: i32) -> (i32, i32) {
    %c0_i32 = arith.constant 0 : i32
    %c0_i32_0 = arith.constant 0 : i32
    return %arg0, %c0_i32 : i32, i32
  }
}

module attributes {stable_mosaic.version = 11 : i64} {
  func.func @kernel(%arg0: i32, %arg1: i32, %arg2: i32, %arg3: memref<16x32xf32, #tpu.memory_space<vmem>>, %arg4: memref<32x96xbf16, #tpu.memory_space<vmem>>, %arg5: memref<1x96xf32, #tpu.memory_space<vmem>>, %arg6: memref<16x96xf32, #tpu.memory_space<vmem>>, %arg7: memref<16x96xf32, #tpu.memory_space<vmem>>) attributes {dimension_semantics = [#tpu.dimension_semantics<parallel>, #tpu.dimension_semantics<parallel>, #tpu.dimension_semantics<arbitrary>], iteration_bounds = array<i64: 1, 1, 1>, scalar_prefetch = 0 : i64, scratch_operands = 1 : i64, tpu.core_type = #tpu.core_type<tc>, window_params = [{transform_indices = @transform_0, window_bounds = array<i64: 16, 32>}, {transform_indices = @transform_1, window_bounds = array<i64: 32, 96>}, {transform_indices = @transform_2, window_bounds = array<i64: 1, 96>}, {transform_indices = @transform_3, window_bounds = array<i64: 16, 96>}]} {
    %c0_i32 = arith.constant 0 : i32
    %0 = arith.cmpi eq, %arg2, %c0_i32 : i32
    %1 = arith.extui %0 : i1 to i32
    %c0_i32_0 = arith.constant 0 : i32
    %2 = arith.cmpi ne, %1, %c0_i32_0 : i32
    scf.if %2 {
      %cst_10 = arith.constant 0.000000e+00 : f32
      %13 = vector.broadcast %cst_10 : f32 to vector<16x96xf32>
      %c0_11 = arith.constant 0 : index
      %c0_12 = arith.constant 0 : index
      %14 = vector.load %arg7[%c0_11, %c0_12] : memref<16x96xf32, #tpu.memory_space<vmem>>, vector<16x96xf32>
      tpu.vector_store %arg7[%c0_11, %c0_12], %13 {strides = array<i32>} : memref<16x96xf32, #tpu.memory_space<vmem>>, vector<16x96xf32>,
    } else {
    }
    %c0 = arith.constant 0 : index
    %c0_1 = arith.constant 0 : index
    %3 = vector.load %arg7[%c0, %c0_1] : memref<16x96xf32, #tpu.memory_space<vmem>>, vector<16x96xf32>
    %c0_2 = arith.constant 0 : index
    %c0_3 = arith.constant 0 : index
    %4 = vector.load %arg3[%c0_2, %c0_3] : memref<16x32xf32, #tpu.memory_space<vmem>>, vector<16x32xf32>
    %5 = arith.truncf %4 : vector<16x32xf32> to vector<16x32xbf16>
    %c0_4 = arith.constant 0 : index
    %c0_5 = arith.constant 0 : index
    %6 = vector.load %arg4[%c0_4, %c0_5] : memref<32x96xbf16, #tpu.memory_space<vmem>>, vector<32x96xbf16>
    %cst = arith.constant dense<0.000000e+00> : vector<16x96xf32>
    %7 = tpu.matmul %5, %6, %cst {dimension_numbers = #tpu.dot_dimension_numbers<[1], [0], [0], [1], [0, 0, 1, 1], [], []>} : vector<16x32xbf16>, vector<32x96xbf16>, vector<16x96xf32> -> vector<16x96xf32>
    %8 = arith.addf %3, %7 : vector<16x96xf32>
    %c0_6 = arith.constant 0 : index
    %c0_7 = arith.constant 0 : index
    %9 = vector.load %arg7[%c0_6, %c0_7] : memref<16x96xf32, #tpu.memory_space<vmem>>, vector<16x96xf32>
    tpu.vector_store %arg7[%c0_6, %c0_7], %8 {strides = array<i32>} : memref<16x96xf32, #tpu.memory_space<vmem>>, vector<16x96xf32>,
    %c0_i32_8 = arith.constant 0 : i32
    %10 = arith.cmpi eq, %arg2, %c0_i32_8 : i32
    %11 = arith.extui %10 : i1 to i32
    %c0_i32_9 = arith.constant 0 : i32
    %12 = arith.cmpi ne, %11, %c0_i32_9 : i32
    scf.if %12 {
      %c0_10 = arith.constant 0 : index
      %c0_11 = arith.constant 0 : index
      %13 = vector.load %arg7[%c0_10, %c0_11] : memref<16x96xf32, #tpu.memory_space<vmem>>, vector<16x96xf32>
      %c0_12 = arith.constant 0 : index
      %c0_13 = arith.constant 0 : index
      %14 = vector.load %arg5[%c0_12, %c0_13] : memref<1x96xf32, #tpu.memory_space<vmem>>, vector<1x96xf32>
      %15 = vector.broadcast %14 : vector<1x96xf32> to vector<16x96xf32>
      %16 = arith.addf %13, %15 : vector<16x96xf32>
      %c0_14 = arith.constant 0 : index
      %c0_15 = arith.constant 0 : index
      %17 = vector.load %arg6[%c0_14, %c0_15] : memref<16x96xf32, #tpu.memory_space<vmem>>, vector<16x96xf32>
      tpu.vector_store %arg6[%c0_14, %c0_15], %16 {strides = array<i32>} : memref<16x96xf32, #tpu.memory_space<vmem>>, vector<16x96xf32>,
    } else {
    }
    return
  }
  func.func @transform_0(%arg0: i32, %arg1: i32, %arg2: i32) -> (i32, i32) {
    %c0_i32 = arith.constant 0 : i32
    return %arg0, %arg2 : i32, i32
  }
  func.func @transform_1(%arg0: i32, %arg1: i32, %arg2: i32) -> (i32, i32) {
    %c0_i32 = arith.constant 0 : i32
    return %arg2, %arg1 : i32, i32
  }
  func.func @transform_2(%arg0: i32, %arg1: i32, %arg2: i32) -> (i32, i32) {
    %c0_i32 = arith.constant 0 : i32
    %c0_i32_0 = arith.constant 0 : i32
    return %c0_i32, %arg1 : i32, i32
  }
  func.func @transform_3(%arg0: i32, %arg1: i32, %arg2: i32) -> (i32, i32) {
    %c0_i32 = arith.constant 0 : i32
    return %arg0, %arg1 : i32, i32
  }
}

module attributes {stable_mosaic.version = 11 : i64} {
  func.func @kernel(%arg0: i32, %arg1: i32, %arg2: i32, %arg3: memref<16x32xf32, #tpu.memory_space<vmem>>, %arg4: memref<32x32xbf16, #tpu.memory_space<vmem>>, %arg5: memref<1x32xf32, #tpu.memory_space<vmem>>, %arg6: memref<16x32xf32, #tpu.memory_space<vmem>>, %arg7: memref<16x32xf32, #tpu.memory_space<vmem>>) attributes {dimension_semantics = [#tpu.dimension_semantics<parallel>, #tpu.dimension_semantics<parallel>, #tpu.dimension_semantics<arbitrary>], iteration_bounds = array<i64: 1, 1, 1>, scalar_prefetch = 0 : i64, scratch_operands = 1 : i64, tpu.core_type = #tpu.core_type<tc>, window_params = [{transform_indices = @transform_0, window_bounds = array<i64: 16, 32>}, {transform_indices = @transform_1, window_bounds = array<i64: 32, 32>}, {transform_indices = @transform_2, window_bounds = array<i64: 1, 32>}, {transform_indices = @transform_3, window_bounds = array<i64: 16, 32>}]} {
    %c0_i32 = arith.constant 0 : i32
    %0 = arith.cmpi eq, %arg2, %c0_i32 : i32
    %1 = arith.extui %0 : i1 to i32
    %c0_i32_0 = arith.constant 0 : i32
    %2 = arith.cmpi ne, %1, %c0_i32_0 : i32
    scf.if %2 {
      %cst_10 = arith.constant 0.000000e+00 : f32
      %13 = vector.broadcast %cst_10 : f32 to vector<16x32xf32>
      %c0_11 = arith.constant 0 : index
      %c0_12 = arith.constant 0 : index
      %14 = vector.load %arg7[%c0_11, %c0_12] : memref<16x32xf32, #tpu.memory_space<vmem>>, vector<16x32xf32>
      tpu.vector_store %arg7[%c0_11, %c0_12], %13 {strides = array<i32>} : memref<16x32xf32, #tpu.memory_space<vmem>>, vector<16x32xf32>,
    } else {
    }
    %c0 = arith.constant 0 : index
    %c0_1 = arith.constant 0 : index
    %3 = vector.load %arg7[%c0, %c0_1] : memref<16x32xf32, #tpu.memory_space<vmem>>, vector<16x32xf32>
    %c0_2 = arith.constant 0 : index
    %c0_3 = arith.constant 0 : index
    %4 = vector.load %arg3[%c0_2, %c0_3] : memref<16x32xf32, #tpu.memory_space<vmem>>, vector<16x32xf32>
    %5 = arith.truncf %4 : vector<16x32xf32> to vector<16x32xbf16>
    %c0_4 = arith.constant 0 : index
    %c0_5 = arith.constant 0 : index
    %6 = vector.load %arg4[%c0_4, %c0_5] : memref<32x32xbf16, #tpu.memory_space<vmem>>, vector<32x32xbf16>
    %cst = arith.constant dense<0.000000e+00> : vector<16x32xf32>
    %7 = tpu.matmul %5, %6, %cst {dimension_numbers = #tpu.dot_dimension_numbers<[1], [0], [0], [1], [0, 0, 1, 1], [], []>} : vector<16x32xbf16>, vector<32x32xbf16>, vector<16x32xf32> -> vector<16x32xf32>
    %8 = arith.addf %3, %7 : vector<16x32xf32>
    %c0_6 = arith.constant 0 : index
    %c0_7 = arith.constant 0 : index
    %9 = vector.load %arg7[%c0_6, %c0_7] : memref<16x32xf32, #tpu.memory_space<vmem>>, vector<16x32xf32>
    tpu.vector_store %arg7[%c0_6, %c0_7], %8 {strides = array<i32>} : memref<16x32xf32, #tpu.memory_space<vmem>>, vector<16x32xf32>,
    %c0_i32_8 = arith.constant 0 : i32
    %10 = arith.cmpi eq, %arg2, %c0_i32_8 : i32
    %11 = arith.extui %10 : i1 to i32
    %c0_i32_9 = arith.constant 0 : i32
    %12 = arith.cmpi ne, %11, %c0_i32_9 : i32
    scf.if %12 {
      %c0_10 = arith.constant 0 : index
      %c0_11 = arith.constant 0 : index
      %13 = vector.load %arg7[%c0_10, %c0_11] : memref<16x32xf32, #tpu.memory_space<vmem>>, vector<16x32xf32>
      %c0_12 = arith.constant 0 : index
      %c0_13 = arith.constant 0 : index
      %14 = vector.load %arg5[%c0_12, %c0_13] : memref<1x32xf32, #tpu.memory_space<vmem>>, vector<1x32xf32>
      %15 = vector.broadcast %14 : vector<1x32xf32> to vector<16x32xf32>
      %16 = arith.addf %13, %15 : vector<16x32xf32>
      %c0_14 = arith.constant 0 : index
      %c0_15 = arith.constant 0 : index
      %17 = vector.load %arg6[%c0_14, %c0_15] : memref<16x32xf32, #tpu.memory_space<vmem>>, vector<16x32xf32>
      tpu.vector_store %arg6[%c0_14, %c0_15], %16 {strides = array<i32>} : memref<16x32xf32, #tpu.memory_space<vmem>>, vector<16x32xf32>,
    } else {
    }
    return
  }
  func.func @transform_0(%arg0: i32, %arg1: i32, %arg2: i32) -> (i32, i32) {
    %c0_i32 = arith.constant 0 : i32
    return %arg0, %arg2 : i32, i32
  }
  func.func @transform_1(%arg0: i32, %arg1: i32, %arg2: i32) -> (i32, i32) {
    %c0_i32 = arith.constant 0 : i32
    return %arg2, %arg1 : i32, i32
  }
  func.func @transform_2(%arg0: i32, %arg1: i32, %arg2: i32) -> (i32, i32) {
    %c0_i32 = arith.constant 0 : i32
    %c0_i32_0 = arith.constant 0 : i32
    return %c0_i32, %arg1 : i32, i32
  }
  func.func @transform_3(%arg0: i32, %arg1: i32, %arg2: i32) -> (i32, i32) {
    %c0_i32 = arith.constant 0 : i32
    return %arg0, %arg1 : i32, i32
  }
}

module attributes {stable_mosaic.version = 11 : i64} {
  func.func @kernel(%arg0: i32, %arg1: memref<1x8x96xf32, #tpu.memory_space<vmem>>, %arg2: memref<1x8x32xf32, #tpu.memory_space<vmem>>) attributes {dimension_semantics = [#tpu.dimension_semantics<parallel>], iteration_bounds = array<i64: 2>, scalar_prefetch = 0 : i64, scratch_operands = 0 : i64, tpu.core_type = #tpu.core_type<tc>, window_params = [{transform_indices = @transform_0, window_bounds = array<i64: 1, 8, 96>}, {transform_indices = @transform_1, window_bounds = array<i64: 1, 8, 32>}]} {
    %c0 = arith.constant 0 : index
    %c0_0 = arith.constant 0 : index
    %c0_1 = arith.constant 0 : index
    %0 = vector.load %arg1[%c0, %c0_0, %c0_1] : memref<1x8x96xf32, #tpu.memory_space<vmem>>, vector<1x8x96xf32>
    %1 = vector.shape_cast %0 : vector<1x8x96xf32> to vector<8x96xf32>
    %2 = vector.extract_strided_slice %1 {offsets = [0, 0], sizes = [8, 16], strides = [1, 1]} : vector<8x96xf32> to vector<8x16xf32>
    %3 = vector.extract_strided_slice %1 {offsets = [0, 32], sizes = [8, 16], strides = [1, 1]} : vector<8x96xf32> to vector<8x16xf32>
    %4 = vector.extract_strided_slice %1 {offsets = [0, 64], sizes = [8, 16], strides = [1, 1]} : vector<8x96xf32> to vector<8x16xf32>
    %cst = arith.constant 2.500000e-01 : f32
    %5 = vector.broadcast %cst : f32 to vector<8x16xf32>
    %6 = arith.mulf %2, %5 : vector<8x16xf32>
    %7 = arith.truncf %6 : vector<8x16xf32> to vector<8x16xbf16>
    %8 = arith.truncf %3 : vector<8x16xf32> to vector<8x16xbf16>
    %cst_2 = arith.constant dense<0.000000e+00> : vector<8x8xf32>
    %9 = tpu.matmul %7, %8, %cst_2 {dimension_numbers = #tpu.dot_dimension_numbers<[1], [1], [0], [0], [0, 0, 1, 0], [], []>} : vector<8x16xbf16>, vector<8x16xbf16>, vector<8x8xf32> -> vector<8x8xf32>
    %cst_3 = arith.constant dense<0xFF800000> : vector<8xf32>
    %10 = vector.multi_reduction <maximumf>, %9, %cst_3 [1] : vector<8x8xf32> to vector<8xf32>
    %11 = vector.shape_cast %10 : vector<8xf32> to vector<8x1xf32>
    %12 = vector.broadcast %11 : vector<8x1xf32> to vector<8x8xf32>
    %13 = arith.subf %9, %12 : vector<8x8xf32>
    %14 = math.exp %13 : vector<8x8xf32>
    %cst_4 = arith.constant dense<0.000000e+00> : vector<8xf32>
    %15 = vector.multi_reduction <add>, %14, %cst_4 [1] : vector<8x8xf32> to vector<8xf32>
    %16 = vector.shape_cast %15 : vector<8xf32> to vector<8x1xf32>
    %17 = tpu.reciprocal %16 {approx = true} : vector<8x1xf32> -> vector<8x1xf32>
    %18 = arith.truncf %14 : vector<8x8xf32> to vector<8x8xbf16>
    %19 = arith.truncf %4 : vector<8x16xf32> to vector<8x16xbf16>
    %cst_5 = arith.constant dense<0.000000e+00> : vector<8x16xf32>
    %20 = tpu.matmul %18, %19, %cst_5 {dimension_numbers = #tpu.dot_dimension_numbers<[1], [0], [0], [1], [0, 0, 1, 1], [], []>} : vector<8x8xbf16>, vector<8x16xbf16>, vector<8x16xf32> -> vector<8x16xf32>
    %21 = vector.broadcast %17 : vector<8x1xf32> to vector<8x16xf32>
    %22 = arith.mulf %20, %21 : vector<8x16xf32>
    %23 = vector.extract_strided_slice %1 {offsets = [0, 16], sizes = [8, 16], strides = [1, 1]} : vector<8x96xf32> to vector<8x16xf32>
    %24 = vector.extract_strided_slice %1 {offsets = [0, 48], sizes = [8, 16], strides = [1, 1]} : vector<8x96xf32> to vector<8x16xf32>
    %25 = vector.extract_strided_slice %1 {offsets = [0, 80], sizes = [8, 16], strides = [1, 1]} : vector<8x96xf32> to vector<8x16xf32>
    %cst_6 = arith.constant 2.500000e-01 : f32
    %26 = vector.broadcast %cst_6 : f32 to vector<8x16xf32>
    %27 = arith.mulf %23, %26 : vector<8x16xf32>
    %28 = arith.truncf %27 : vector<8x16xf32> to vector<8x16xbf16>
    %29 = arith.truncf %24 : vector<8x16xf32> to vector<8x16xbf16>
    %cst_7 = arith.constant dense<0.000000e+00> : vector<8x8xf32>
    %30 = tpu.matmul %28, %29, %cst_7 {dimension_numbers = #tpu.dot_dimension_numbers<[1], [1], [0], [0], [0, 0, 1, 0], [], []>} : vector<8x16xbf16>, vector<8x16xbf16>, vector<8x8xf32> -> vector<8x8xf32>
    %cst_8 = arith.constant dense<0xFF800000> : vector<8xf32>
    %31 = vector.multi_reduction <maximumf>, %30, %cst_8 [1] : vector<8x8xf32> to vector<8xf32>
    %32 = vector.shape_cast %31 : vector<8xf32> to vector<8x1xf32>
    %33 = vector.broadcast %32 : vector<8x1xf32> to vector<8x8xf32>
    %34 = arith.subf %30, %33 : vector<8x8xf32>
    %35 = math.exp %34 : vector<8x8xf32>
    %cst_9 = arith.constant dense<0.000000e+00> : vector<8xf32>
    %36 = vector.multi_reduction <add>, %35, %cst_9 [1] : vector<8x8xf32> to vector<8xf32>
    %37 = vector.shape_cast %36 : vector<8xf32> to vector<8x1xf32>
    %38 = tpu.reciprocal %37 {approx = true} : vector<8x1xf32> -> vector<8x1xf32>
    %39 = arith.truncf %35 : vector<8x8xf32> to vector<8x8xbf16>
    %40 = arith.truncf %25 : vector<8x16xf32> to vector<8x16xbf16>
    %cst_10 = arith.constant dense<0.000000e+00> : vector<8x16xf32>
    %41 = tpu.matmul %39, %40, %cst_10 {dimension_numbers = #tpu.dot_dimension_numbers<[1], [0], [0], [1], [0, 0, 1, 1], [], []>} : vector<8x8xbf16>, vector<8x16xbf16>, vector<8x16xf32> -> vector<8x16xf32>
    %42 = vector.broadcast %38 : vector<8x1xf32> to vector<8x16xf32>
    %43 = arith.mulf %41, %42 : vector<8x16xf32>
    %44 = tpu.concatenate %22, %43 in 1 : vector<8x16xf32>, vector<8x16xf32> -> vector<8x32xf32>
    %c0_11 = arith.constant 0 : index
    %c0_12 = arith.constant 0 : index
    %c0_13 = arith.constant 0 : index
    %45 = vector.load %arg2[%c0_11, %c0_12, %c0_13] : memref<1x8x32xf32, #tpu.memory_space<vmem>>, vector<1x8x32xf32>
    %46 = vector.shape_cast %45 : vector<1x8x32xf32> to vector<8x32xf32>
    %47 = vector.shape_cast %44 : vector<8x32xf32> to vector<1x8x32xf32>
    tpu.vector_store %arg2[%c0_11, %c0_12, %c0_13], %47 {strides = array<i32>} : memref<1x8x32xf32, #tpu.memory_space<vmem>>, vector<1x8x32xf32>,
    return
  }
  func.func @transform_0(%arg0: i32) -> (i32, i32, i32) {
    %c0_i32 = arith.constant 0 : i32
    %c0_i32_0 = arith.constant 0 : i32
    %c0_i32_1 = arith.constant 0 : i32
    return %arg0, %c0_i32, %c0_i32_0 : i32, i32, i32
  }
  func.func @transform_1(%arg0: i32) -> (i32, i32, i32) {
    %c0_i32 = arith.constant 0 : i32
    %c0_i32_0 = arith.constant 0 : i32
    %c0_i32_1 = arith.constant 0 : i32
    return %arg0, %c0_i32, %c0_i32_0 : i32, i32, i32
  }
}

module attributes {stable_mosaic.version = 11 : i64} {
  func.func @kernel(%arg0: i32, %arg1: memref<16x32xf32, #tpu.memory_space<vmem>>, %arg2: memref<16x32xf32, #tpu.memory_space<vmem>>, %arg3: memref<1x32xf32, #tpu.memory_space<vmem>>, %arg4: memref<1x32xf32, #tpu.memory_space<vmem>>, %arg5: memref<16x32xf32, #tpu.memory_space<vmem>>) attributes {dimension_semantics = [#tpu.dimension_semantics<parallel>], iteration_bounds = array<i64: 1>, scalar_prefetch = 0 : i64, scratch_operands = 0 : i64, tpu.core_type = #tpu.core_type<tc>, window_params = [{transform_indices = @transform_0, window_bounds = array<i64: 16, 32>}, {transform_indices = @transform_1, window_bounds = array<i64: 16, 32>}, {pipeline_mode = #tpu.pipeline_mode<synchronous>, transform_indices = @transform_2, window_bounds = array<i64: 1, 32>}, {pipeline_mode = #tpu.pipeline_mode<synchronous>, transform_indices = @transform_3, window_bounds = array<i64: 1, 32>}, {transform_indices = @transform_4, window_bounds = array<i64: 16, 32>}]} {
    %c0 = arith.constant 0 : index
    %c0_0 = arith.constant 0 : index
    %0 = vector.load %arg1[%c0, %c0_0] : memref<16x32xf32, #tpu.memory_space<vmem>>, vector<16x32xf32>
    %c0_1 = arith.constant 0 : index
    %c0_2 = arith.constant 0 : index
    %1 = vector.load %arg2[%c0_1, %c0_2] : memref<16x32xf32, #tpu.memory_space<vmem>>, vector<16x32xf32>
    %2 = arith.addf %0, %1 : vector<16x32xf32>
    %cst = arith.constant dense<0.000000e+00> : vector<16xf32>
    %3 = vector.multi_reduction <add>, %2, %cst [1] : vector<16x32xf32> to vector<16xf32>
    %4 = vector.shape_cast %3 : vector<16xf32> to vector<16x1xf32>
    %cst_3 = arith.constant 3.200000e+01 : f32
    %5 = vector.broadcast %cst_3 : f32 to vector<16x1xf32>
    %6 = arith.divf %4, %5 : vector<16x1xf32>
    %7 = vector.broadcast %6 : vector<16x1xf32> to vector<16x32xf32>
    %8 = arith.subf %2, %7 : vector<16x32xf32>
    %9 = arith.mulf %8, %8 : vector<16x32xf32>
    %cst_4 = arith.constant dense<0.000000e+00> : vector<16xf32>
    %10 = vector.multi_reduction <add>, %9, %cst_4 [1] : vector<16x32xf32> to vector<16xf32>
    %11 = vector.shape_cast %10 : vector<16xf32> to vector<16x1xf32>
    %cst_5 = arith.constant 3.200000e+01 : f32
    %12 = vector.broadcast %cst_5 : f32 to vector<16x1xf32>
    %13 = arith.divf %11, %12 : vector<16x1xf32>
    %14 = vector.broadcast %6 : vector<16x1xf32> to vector<16x32xf32>
    %15 = arith.subf %2, %14 : vector<16x32xf32>
    %cst_6 = arith.constant 9.99999996E-13 : f32
    %16 = vector.broadcast %cst_6 : f32 to vector<16x1xf32>
    %17 = arith.addf %13, %16 : vector<16x1xf32>
    %18 = math.rsqrt %17 : vector<16x1xf32>
    %19 = vector.broadcast %18 : vector<16x1xf32> to vector<16x32xf32>
    %20 = arith.mulf %15, %19 : vector<16x32xf32>
    %c0_7 = arith.constant 0 : index
    %c0_8 = arith.constant 0 : index
    %21 = vector.load %arg3[%c0_7, %c0_8] : memref<1x32xf32, #tpu.memory_space<vmem>>, vector<1x32xf32>
    %22 = vector.broadcast %21 : vector<1x32xf32> to vector<16x32xf32>
    %23 = arith.mulf %20, %22 : vector<16x32xf32>
    %c0_9 = arith.constant 0 : index
    %c0_10 = arith.constant 0 : index
    %24 = vector.load %arg4[%c0_9, %c0_10] : memref<1x32xf32, #tpu.memory_space<vmem>>, vector<1x32xf32>
    %25 = vector.broadcast %24 : vector<1x32xf32> to vector<16x32xf32>
    %26 = arith.addf %23, %25 : vector<16x32xf32>
    %c0_11 = arith.constant 0 : index
    %c0_12 = arith.constant 0 : index
    %27 = vector.load %arg5[%c0_11, %c0_12] : memref<16x32xf32, #tpu.memory_space<vmem>>, vector<16x32xf32>
    tpu.vector_store %arg5[%c0_11, %c0_12], %26 {strides = array<i32>} : memref<16x32xf32, #tpu.memory_space<vmem>>, vector<16x32xf32>,
    return
  }
  func.func @transform_0(%arg0: i32) -> (i32, i32) {
    %c0_i32 = arith.constant 0 : i32
    %c0_i32_0 = arith.constant 0 : i32
    return %arg0, %c0_i32 : i32, i32
  }
  func.func @transform_1(%arg0: i32) -> (i32, i32) {
    %c0_i32 = arith.constant 0 : i32
    %c0_i32_0 = arith.constant 0 : i32
    return %arg0, %c0_i32 : i32, i32
  }
  func.func @transform_2(%arg0: i32) -> (i32, i32) {
    %c0_i32 = arith.constant 0 : i32
    %c0_i32_0 = arith.constant 0 : i32
    %c0_i32_1 = arith.constant 0 : i32
    return %c0_i32, %c0_i32_0 : i32, i32
  }
  func.func @transform_3(%arg0: i32) -> (i32, i32) {
    %c0_i32 = arith.constant 0 : i32
    %c0_i32_0 = arith.constant 0 : i32
    %c0_i32_1 = arith.constant 0 : i32
    return %c0_i32, %c0_i32_0 : i32, i32
  }
  func.func @transform_4(%arg0: i32) -> (i32, i32) {
    %c0_i32 = arith.constant 0 : i32
    %c0_i32_0 = arith.constant 0 : i32
    return %arg0, %c0_i32 : i32, i32
  }
}

module attributes {stable_mosaic.version = 11 : i64} {
  func.func @kernel(%arg0: i32, %arg1: i32, %arg2: i32, %arg3: memref<16x64xf32, #tpu.memory_space<vmem>>, %arg4: memref<64x32xbf16, #tpu.memory_space<vmem>>, %arg5: memref<1x32xf32, #tpu.memory_space<vmem>>, %arg6: memref<16x32xf32, #tpu.memory_space<vmem>>, %arg7: memref<16x32xf32, #tpu.memory_space<vmem>>) attributes {dimension_semantics = [#tpu.dimension_semantics<parallel>, #tpu.dimension_semantics<parallel>, #tpu.dimension_semantics<arbitrary>], iteration_bounds = array<i64: 1, 1, 1>, scalar_prefetch = 0 : i64, scratch_operands = 1 : i64, tpu.core_type = #tpu.core_type<tc>, window_params = [{transform_indices = @transform_0, window_bounds = array<i64: 16, 64>}, {transform_indices = @transform_1, window_bounds = array<i64: 64, 32>}, {transform_indices = @transform_2, window_bounds = array<i64: 1, 32>}, {transform_indices = @transform_3, window_bounds = array<i64: 16, 32>}]} {
    %c0_i32 = arith.constant 0 : i32
    %0 = arith.cmpi eq, %arg2, %c0_i32 : i32
    %1 = arith.extui %0 : i1 to i32
    %c0_i32_0 = arith.constant 0 : i32
    %2 = arith.cmpi ne, %1, %c0_i32_0 : i32
    scf.if %2 {
      %cst_10 = arith.constant 0.000000e+00 : f32
      %13 = vector.broadcast %cst_10 : f32 to vector<16x32xf32>
      %c0_11 = arith.constant 0 : index
      %c0_12 = arith.constant 0 : index
      %14 = vector.load %arg7[%c0_11, %c0_12] : memref<16x32xf32, #tpu.memory_space<vmem>>, vector<16x32xf32>
      tpu.vector_store %arg7[%c0_11, %c0_12], %13 {strides = array<i32>} : memref<16x32xf32, #tpu.memory_space<vmem>>, vector<16x32xf32>,
    } else {
    }
    %c0 = arith.constant 0 : index
    %c0_1 = arith.constant 0 : index
    %3 = vector.load %arg7[%c0, %c0_1] : memref<16x32xf32, #tpu.memory_space<vmem>>, vector<16x32xf32>
    %c0_2 = arith.constant 0 : index
    %c0_3 = arith.constant 0 : index
    %4 = vector.load %arg3[%c0_2, %c0_3] : memref<16x64xf32, #tpu.memory_space<vmem>>, vector<16x64xf32>
    %5 = arith.truncf %4 : vector<16x64xf32> to vector<16x64xbf16>
    %c0_4 = arith.constant 0 : index
    %c0_5 = arith.constant 0 : index
    %6 = vector.load %arg4[%c0_4, %c0_5] : memref<64x32xbf16, #tpu.memory_space<vmem>>, vector<64x32xbf16>
    %cst = arith.constant dense<0.000000e+00> : vector<16x32xf32>
    %7 = tpu.matmul %5, %6, %cst {dimension_numbers = #tpu.dot_dimension_numbers<[1], [0], [0], [1], [0, 0, 1, 1], [], []>} : vector<16x64xbf16>, vector<64x32xbf16>, vector<16x32xf32> -> vector<16x32xf32>
    %8 = arith.addf %3, %7 : vector<16x32xf32>
    %c0_6 = arith.constant 0 : index
    %c0_7 = arith.constant 0 : index
    %9 = vector.load %arg7[%c0_6, %c0_7] : memref<16x32xf32, #tpu.memory_space<vmem>>, vector<16x32xf32>
    tpu.vector_store %arg7[%c0_6, %c0_7], %8 {strides = array<i32>} : memref<16x32xf32, #tpu.memory_space<vmem>>, vector<16x32xf32>,
    %c0_i32_8 = arith.constant 0 : i32
    %10 = arith.cmpi eq, %arg2, %c0_i32_8 : i32
    %11 = arith.extui %10 : i1 to i32
    %c0_i32_9 = arith.constant 0 : i32
    %12 = arith.cmpi ne, %11, %c0_i32_9 : i32
    scf.if %12 {
      %c0_10 = arith.constant 0 : index
      %c0_11 = arith.constant 0 : index
      %13 = vector.load %arg7[%c0_10, %c0_11] : memref<16x32xf32, #tpu.memory_space<vmem>>, vector<16x32xf32>
      %c0_12 = arith.constant 0 : index
      %c0_13 = arith.constant 0 : index
      %14 = vector.load %arg5[%c0_12, %c0_13] : memref<1x32xf32, #tpu.memory_space<vmem>>, vector<1x32xf32>
      %15 = vector.broadcast %14 : vector<1x32xf32> to vector<16x32xf32>
      %16 = arith.addf %13, %15 : vector<16x32xf32>
      %c0_14 = arith.constant 0 : index
      %c0_15 = arith.constant 0 : index
      %17 = vector.load %arg6[%c0_14, %c0_15] : memref<16x32xf32, #tpu.memory_space<vmem>>, vector<16x32xf32>
      tpu.vector_store %arg6[%c0_14, %c0_15], %16 {strides = array<i32>} : memref<16x32xf32, #tpu.memory_space<vmem>>, vector<16x32xf32>,
    } else {
    }
    return
  }
  func.func @transform_0(%arg0: i32, %arg1: i32, %arg2: i32) -> (i32, i32) {
    %c0_i32 = arith.constant 0 : i32
    return %arg0, %arg2 : i32, i32
  }
  func.func @transform_1(%arg0: i32, %arg1: i32, %arg2: i32) -> (i32, i32) {
    %c0_i32 = arith.constant 0 : i32
    return %arg2, %arg1 : i32, i32
  }
  func.func @transform_2(%arg0: i32, %arg1: i32, %arg2: i32) -> (i32, i32) {
    %c0_i32 = arith.constant 0 : i32
    %c0_i32_0 = arith.constant 0 : i32
    return %c0_i32, %arg1 : i32, i32
  }
  func.func @transform_3(%arg0: i32, %arg1: i32, %arg2: i32) -> (i32, i32) {
    %c0_i32 = arith.constant 0 : i32
    return %arg0, %arg1 : i32, i32
  }
}

module attributes {stable_mosaic.version = 11 : i64} {
  func.func @kernel(%arg0: i32, %arg1: i32, %arg2: i32, %arg3: memref<16x32xf32, #tpu.memory_space<vmem>>, %arg4: memref<32x64xbf16, #tpu.memory_space<vmem>>, %arg5: memref<1x64xf32, #tpu.memory_space<vmem>>, %arg6: memref<16x64xf32, #tpu.memory_space<vmem>>, %arg7: memref<16x64xf32, #tpu.memory_space<vmem>>) attributes {dimension_semantics = [#tpu.dimension_semantics<parallel>, #tpu.dimension_semantics<parallel>, #tpu.dimension_semantics<arbitrary>], iteration_bounds = array<i64: 1, 1, 1>, scalar_prefetch = 0 : i64, scratch_operands = 1 : i64, tpu.core_type = #tpu.core_type<tc>, window_params = [{transform_indices = @transform_0, window_bounds = array<i64: 16, 32>}, {transform_indices = @transform_1, window_bounds = array<i64: 32, 64>}, {transform_indices = @transform_2, window_bounds = array<i64: 1, 64>}, {transform_indices = @transform_3, window_bounds = array<i64: 16, 64>}]} {
    %c0_i32 = arith.constant 0 : i32
    %0 = arith.cmpi eq, %arg2, %c0_i32 : i32
    %1 = arith.extui %0 : i1 to i32
    %c0_i32_0 = arith.constant 0 : i32
    %2 = arith.cmpi ne, %1, %c0_i32_0 : i32
    scf.if %2 {
      %cst_10 = arith.constant 0.000000e+00 : f32
      %13 = vector.broadcast %cst_10 : f32 to vector<16x64xf32>
      %c0_11 = arith.constant 0 : index
      %c0_12 = arith.constant 0 : index
      %14 = vector.load %arg7[%c0_11, %c0_12] : memref<16x64xf32, #tpu.memory_space<vmem>>, vector<16x64xf32>
      tpu.vector_store %arg7[%c0_11, %c0_12], %13 {strides = array<i32>} : memref<16x64xf32, #tpu.memory_space<vmem>>, vector<16x64xf32>,
    } else {
    }
    %c0 = arith.constant 0 : index
    %c0_1 = arith.constant 0 : index
    %3 = vector.load %arg7[%c0, %c0_1] : memref<16x64xf32, #tpu.memory_space<vmem>>, vector<16x64xf32>
    %c0_2 = arith.constant 0 : index
    %c0_3 = arith.constant 0 : index
    %4 = vector.load %arg3[%c0_2, %c0_3] : memref<16x32xf32, #tpu.memory_space<vmem>>, vector<16x32xf32>
    %5 = arith.truncf %4 : vector<16x32xf32> to vector<16x32xbf16>
    %c0_4 = arith.constant 0 : index
    %c0_5 = arith.constant 0 : index
    %6 = vector.load %arg4[%c0_4, %c0_5] : memref<32x64xbf16, #tpu.memory_space<vmem>>, vector<32x64xbf16>
    %cst = arith.constant dense<0.000000e+00> : vector<16x64xf32>
    %7 = tpu.matmul %5, %6, %cst {dimension_numbers = #tpu.dot_dimension_numbers<[1], [0], [0], [1], [0, 0, 1, 1], [], []>} : vector<16x32xbf16>, vector<32x64xbf16>, vector<16x64xf32> -> vector<16x64xf32>
    %8 = arith.addf %3, %7 : vector<16x64xf32>
    %c0_6 = arith.constant 0 : index
    %c0_7 = arith.constant 0 : index
    %9 = vector.load %arg7[%c0_6, %c0_7] : memref<16x64xf32, #tpu.memory_space<vmem>>, vector<16x64xf32>
    tpu.vector_store %arg7[%c0_6, %c0_7], %8 {strides = array<i32>} : memref<16x64xf32, #tpu.memory_space<vmem>>, vector<16x64xf32>,
    %c0_i32_8 = arith.constant 0 : i32
    %10 = arith.cmpi eq, %arg2, %c0_i32_8 : i32
    %11 = arith.extui %10 : i1 to i32
    %c0_i32_9 = arith.constant 0 : i32
    %12 = arith.cmpi ne, %11, %c0_i32_9 : i32
    scf.if %12 {
      %c0_10 = arith.constant 0 : index
      %c0_11 = arith.constant 0 : index
      %13 = vector.load %arg7[%c0_10, %c0_11] : memref<16x64xf32, #tpu.memory_space<vmem>>, vector<16x64xf32>
      %c0_12 = arith.constant 0 : index
      %c0_13 = arith.constant 0 : index
      %14 = vector.load %arg5[%c0_12, %c0_13] : memref<1x64xf32, #tpu.memory_space<vmem>>, vector<1x64xf32>
      %15 = vector.broadcast %14 : vector<1x64xf32> to vector<16x64xf32>
      %16 = arith.addf %13, %15 : vector<16x64xf32>
      %c0_14 = arith.constant 0 : index
      %c0_15 = arith.constant 0 : index
      %17 = vector.load %arg6[%c0_14, %c0_15] : memref<16x64xf32, #tpu.memory_space<vmem>>, vector<16x64xf32>
      tpu.vector_store %arg6[%c0_14, %c0_15], %16 {strides = array<i32>} : memref<16x64xf32, #tpu.memory_space<vmem>>, vector<16x64xf32>,
    } else {
    }
    return
  }
  func.func @transform_0(%arg0: i32, %arg1: i32, %arg2: i32) -> (i32, i32) {
    %c0_i32 = arith.constant 0 : i32
    return %arg0, %arg2 : i32, i32
  }
  func.func @transform_1(%arg0: i32, %arg1: i32, %arg2: i32) -> (i32, i32) {
    %c0_i32 = arith.constant 0 : i32
    return %arg2, %arg1 : i32, i32
  }
  func.func @transform_2(%arg0: i32, %arg1: i32, %arg2: i32) -> (i32, i32) {
    %c0_i32 = arith.constant 0 : i32
    %c0_i32_0 = arith.constant 0 : i32
    return %c0_i32, %arg1 : i32, i32
  }
  func.func @transform_3(%arg0: i32, %arg1: i32, %arg2: i32) -> (i32, i32) {
    %c0_i32 = arith.constant 0 : i32
    return %arg0, %arg1 : i32, i32
  }
}

module attributes {stable_mosaic.version = 11 : i64} {
  func.func @kernel(%arg0: i32, %arg1: i32, %arg2: i32, %arg3: memref<16x32xf32, #tpu.memory_space<vmem>>, %arg4: memref<32x64xbf16, #tpu.memory_space<vmem>>, %arg5: memref<1x64xf32, #tpu.memory_space<vmem>>, %arg6: memref<16x64xf32, #tpu.memory_space<vmem>>, %arg7: memref<16x64xf32, #tpu.memory_space<vmem>>) attributes {dimension_semantics = [#tpu.dimension_semantics<parallel>, #tpu.dimension_semantics<parallel>, #tpu.dimension_semantics<arbitrary>], iteration_bounds = array<i64: 1, 1, 1>, scalar_prefetch = 0 : i64, scratch_operands = 1 : i64, tpu.core_type = #tpu.core_type<tc>, window_params = [{transform_indices = @transform_0, window_bounds = array<i64: 16, 32>}, {transform_indices = @transform_1, window_bounds = array<i64: 32, 64>}, {transform_indices = @transform_2, window_bounds = array<i64: 1, 64>}, {transform_indices = @transform_3, window_bounds = array<i64: 16, 64>}]} {
    %c0_i32 = arith.constant 0 : i32
    %0 = arith.cmpi eq, %arg2, %c0_i32 : i32
    %1 = arith.extui %0 : i1 to i32
    %c0_i32_0 = arith.constant 0 : i32
    %2 = arith.cmpi ne, %1, %c0_i32_0 : i32
    scf.if %2 {
      %cst_10 = arith.constant 0.000000e+00 : f32
      %13 = vector.broadcast %cst_10 : f32 to vector<16x64xf32>
      %c0_11 = arith.constant 0 : index
      %c0_12 = arith.constant 0 : index
      %14 = vector.load %arg7[%c0_11, %c0_12] : memref<16x64xf32, #tpu.memory_space<vmem>>, vector<16x64xf32>
      tpu.vector_store %arg7[%c0_11, %c0_12], %13 {strides = array<i32>} : memref<16x64xf32, #tpu.memory_space<vmem>>, vector<16x64xf32>,
    } else {
    }
    %c0 = arith.constant 0 : index
    %c0_1 = arith.constant 0 : index
    %3 = vector.load %arg7[%c0, %c0_1] : memref<16x64xf32, #tpu.memory_space<vmem>>, vector<16x64xf32>
    %c0_2 = arith.constant 0 : index
    %c0_3 = arith.constant 0 : index
    %4 = vector.load %arg3[%c0_2, %c0_3] : memref<16x32xf32, #tpu.memory_space<vmem>>, vector<16x32xf32>
    %5 = arith.truncf %4 : vector<16x32xf32> to vector<16x32xbf16>
    %c0_4 = arith.constant 0 : index
    %c0_5 = arith.constant 0 : index
    %6 = vector.load %arg4[%c0_4, %c0_5] : memref<32x64xbf16, #tpu.memory_space<vmem>>, vector<32x64xbf16>
    %cst = arith.constant dense<0.000000e+00> : vector<16x64xf32>
    %7 = tpu.matmul %5, %6, %cst {dimension_numbers = #tpu.dot_dimension_numbers<[1], [0], [0], [1], [0, 0, 1, 1], [], []>} : vector<16x32xbf16>, vector<32x64xbf16>, vector<16x64xf32> -> vector<16x64xf32>
    %8 = arith.addf %3, %7 : vector<16x64xf32>
    %c0_6 = arith.constant 0 : index
    %c0_7 = arith.constant 0 : index
    %9 = vector.load %arg7[%c0_6, %c0_7] : memref<16x64xf32, #tpu.memory_space<vmem>>, vector<16x64xf32>
    tpu.vector_store %arg7[%c0_6, %c0_7], %8 {strides = array<i32>} : memref<16x64xf32, #tpu.memory_space<vmem>>, vector<16x64xf32>,
    %c0_i32_8 = arith.constant 0 : i32
    %10 = arith.cmpi eq, %arg2, %c0_i32_8 : i32
    %11 = arith.extui %10 : i1 to i32
    %c0_i32_9 = arith.constant 0 : i32
    %12 = arith.cmpi ne, %11, %c0_i32_9 : i32
    scf.if %12 {
      %c0_10 = arith.constant 0 : index
      %c0_11 = arith.constant 0 : index
      %13 = vector.load %arg7[%c0_10, %c0_11] : memref<16x64xf32, #tpu.memory_space<vmem>>, vector<16x64xf32>
      %c0_12 = arith.constant 0 : index
      %c0_13 = arith.constant 0 : index
      %14 = vector.load %arg5[%c0_12, %c0_13] : memref<1x64xf32, #tpu.memory_space<vmem>>, vector<1x64xf32>
      %15 = vector.broadcast %14 : vector<1x64xf32> to vector<16x64xf32>
      %16 = arith.addf %13, %15 : vector<16x64xf32>
      %17 = arith.mulf %16, %16 : vector<16x64xf32>
      %18 = arith.mulf %16, %17 : vector<16x64xf32>
      %cst_14 = arith.constant 4.471500e-02 : f32
      %19 = vector.broadcast %cst_14 : f32 to vector<16x64xf32>
      %20 = arith.mulf %19, %18 : vector<16x64xf32>
      %21 = arith.addf %16, %20 : vector<16x64xf32>
      %cst_15 = arith.constant 0.797884583 : f32
      %22 = vector.broadcast %cst_15 : f32 to vector<16x64xf32>
      %23 = arith.mulf %22, %21 : vector<16x64xf32>
      %24 = math.tanh %23 : vector<16x64xf32>
      %cst_16 = arith.constant 1.000000e+00 : f32
      %25 = vector.broadcast %cst_16 : f32 to vector<16x64xf32>
      %26 = arith.addf %25, %24 : vector<16x64xf32>
      %cst_17 = arith.constant 5.000000e-01 : f32
      %27 = vector.broadcast %cst_17 : f32 to vector<16x64xf32>
      %28 = arith.mulf %27, %26 : vector<16x64xf32>
      %29 = arith.mulf %16, %28 : vector<16x64xf32>
      %c0_18 = arith.constant 0 : index
      %c0_19 = arith.constant 0 : index
      %30 = vector.load %arg6[%c0_18, %c0_19] : memref<16x64xf32, #tpu.memory_space<vmem>>, vector<16x64xf32>
      tpu.vector_store %arg6[%c0_18, %c0_19], %29 {strides = array<i32>} : memref<16x64xf32, #tpu.memory_space<vmem>>, vector<16x64xf32>,
    } else {
    }
    return
  }
  func.func @transform_0(%arg0: i32, %arg1: i32, %arg2: i32) -> (i32, i32) {
    %c0_i32 = arith.constant 0 : i32
    return %arg0, %arg2 : i32, i32
  }
  func.func @transform_1(%arg0: i32, %arg1: i32, %arg2: i32) -> (i32, i32) {
    %c0_i32 = arith.constant 0 : i32
    return %arg2, %arg1 : i32, i32
  }
  func.func @transform_2(%arg0: i32, %arg1: i32, %arg2: i32) -> (i32, i32) {
    %c0_i32 = arith.constant 0 : i32
    %c0_i32_0 = arith.constant 0 : i32
    return %c0_i32, %arg1 : i32, i32
  }
  func.func @transform_3(%arg0: i32, %arg1: i32, %arg2: i32) -> (i32, i32) {
    %c0_i32 = arith.constant 0 : i32
    return %arg0, %arg1 : i32, i32
  }
}

module attributes {stable_mosaic.version = 11 : i64} {
  func.func @kernel(%arg0: i32, %arg1: memref<1x8x96xf32, #tpu.memory_space<vmem>>, %arg2: memref<1x8x32xf32, #tpu.memory_space<vmem>>) attributes {dimension_semantics = [#tpu.dimension_semantics<parallel>], iteration_bounds = array<i64: 2>, scalar_prefetch = 0 : i64, scratch_operands = 0 : i64, tpu.core_type = #tpu.core_type<tc>, window_params = [{transform_indices = @transform_0, window_bounds = array<i64: 1, 8, 96>}, {transform_indices = @transform_1, window_bounds = array<i64: 1, 8, 32>}]} {
    %c0 = arith.constant 0 : index
    %c0_0 = arith.constant 0 : index
    %c0_1 = arith.constant 0 : index
    %0 = vector.load %arg1[%c0, %c0_0, %c0_1] : memref<1x8x96xf32, #tpu.memory_space<vmem>>, vector<1x8x96xf32>
    %1 = vector.shape_cast %0 : vector<1x8x96xf32> to vector<8x96xf32>
    %2 = vector.extract_strided_slice %1 {offsets = [0, 0], sizes = [8, 16], strides = [1, 1]} : vector<8x96xf32> to vector<8x16xf32>
    %3 = vector.extract_strided_slice %1 {offsets = [0, 32], sizes = [8, 16], strides = [1, 1]} : vector<8x96xf32> to vector<8x16xf32>
    %4 = vector.extract_strided_slice %1 {offsets = [0, 64], sizes = [8, 16], strides = [1, 1]} : vector<8x96xf32> to vector<8x16xf32>
    %cst = arith.constant 2.500000e-01 : f32
    %5 = vector.broadcast %cst : f32 to vector<8x16xf32>
    %6 = arith.mulf %2, %5 : vector<8x16xf32>
    %7 = arith.truncf %6 : vector<8x16xf32> to vector<8x16xbf16>
    %8 = arith.truncf %3 : vector<8x16xf32> to vector<8x16xbf16>
    %cst_2 = arith.constant dense<0.000000e+00> : vector<8x8xf32>
    %9 = tpu.matmul %7, %8, %cst_2 {dimension_numbers = #tpu.dot_dimension_numbers<[1], [1], [0], [0], [0, 0, 1, 0], [], []>} : vector<8x16xbf16>, vector<8x16xbf16>, vector<8x8xf32> -> vector<8x8xf32>
    %10 = tpu.iota {dimensions = array<i32: 0>} : vector<8x8xi32>
    %11 = tpu.iota {dimensions = array<i32: 1>} : vector<8x8xi32>
    %12 = arith.cmpi sle, %11, %10 : vector<8x8xi32>
    %cst_3 = arith.constant -1.000000e+30 : f32
    %13 = vector.broadcast %cst_3 : f32 to vector<8x8xf32>
    %14 = arith.select %12, %9, %13 : vector<8x8xi1>, vector<8x8xf32>
    %cst_4 = arith.constant dense<0xFF800000> : vector<8xf32>
    %15 = vector.multi_reduction <maximumf>, %14, %cst_4 [1] : vector<8x8xf32> to vector<8xf32>
    %16 = vector.shape_cast %15 : vector<8xf32> to vector<8x1xf32>
    %17 = vector.broadcast %16 : vector<8x1xf32> to vector<8x8xf32>
    %18 = arith.subf %14, %17 : vector<8x8xf32>
    %19 = math.exp %18 : vector<8x8xf32>
    %cst_5 = arith.constant dense<0.000000e+00> : vector<8xf32>
    %20 = vector.multi_reduction <add>, %19, %cst_5 [1] : vector<8x8xf32> to vector<8xf32>
    %21 = vector.shape_cast %20 : vector<8xf32> to vector<8x1xf32>
    %22 = tpu.reciprocal %21 {approx = true} : vector<8x1xf32> -> vector<8x1xf32>
    %23 = arith.truncf %19 : vector<8x8xf32> to vector<8x8xbf16>
    %24 = arith.truncf %4 : vector<8x16xf32> to vector<8x16xbf16>
    %cst_6 = arith.constant dense<0.000000e+00> : vector<8x16xf32>
    %25 = tpu.matmul %23, %24, %cst_6 {dimension_numbers = #tpu.dot_dimension_numbers<[1], [0], [0], [1], [0, 0, 1, 1], [], []>} : vector<8x8xbf16>, vector<8x16xbf16>, vector<8x16xf32> -> vector<8x16xf32>
    %26 = vector.broadcast %22 : vector<8x1xf32> to vector<8x16xf32>
    %27 = arith.mulf %25, %26 : vector<8x16xf32>
    %28 = vector.extract_strided_slice %1 {offsets = [0, 16], sizes = [8, 16], strides = [1, 1]} : vector<8x96xf32> to vector<8x16xf32>
    %29 = vector.extract_strided_slice %1 {offsets = [0, 48], sizes = [8, 16], strides = [1, 1]} : vector<8x96xf32> to vector<8x16xf32>
    %30 = vector.extract_strided_slice %1 {offsets = [0, 80], sizes = [8, 16], strides = [1, 1]} : vector<8x96xf32> to vector<8x16xf32>
    %cst_7 = arith.constant 2.500000e-01 : f32
    %31 = vector.broadcast %cst_7 : f32 to vector<8x16xf32>
    %32 = arith.mulf %28, %31 : vector<8x16xf32>
    %33 = arith.truncf %32 : vector<8x16xf32> to vector<8x16xbf16>
    %34 = arith.truncf %29 : vector<8x16xf32> to vector<8x16xbf16>
    %cst_8 = arith.constant dense<0.000000e+00> : vector<8x8xf32>
    %35 = tpu.matmul %33, %34, %cst_8 {dimension_numbers = #tpu.dot_dimension_numbers<[1], [1], [0], [0], [0, 0, 1, 0], [], []>} : vector<8x16xbf16>, vector<8x16xbf16>, vector<8x8xf32> -> vector<8x8xf32>
    %36 = tpu.iota {dimensions = array<i32: 0>} : vector<8x8xi32>
    %37 = tpu.iota {dimensions = array<i32: 1>} : vector<8x8xi32>
    %38 = arith.cmpi sle, %37, %36 : vector<8x8xi32>
    %cst_9 = arith.constant -1.000000e+30 : f32
    %39 = vector.broadcast %cst_9 : f32 to vector<8x8xf32>
    %40 = arith.select %38, %35, %39 : vector<8x8xi1>, vector<8x8xf32>
    %cst_10 = arith.constant dense<0xFF800000> : vector<8xf32>
    %41 = vector.multi_reduction <maximumf>, %40, %cst_10 [1] : vector<8x8xf32> to vector<8xf32>
    %42 = vector.shape_cast %41 : vector<8xf32> to vector<8x1xf32>
    %43 = vector.broadcast %42 : vector<8x1xf32> to vector<8x8xf32>
    %44 = arith.subf %40, %43 : vector<8x8xf32>
    %45 = math.exp %44 : vector<8x8xf32>
    %cst_11 = arith.constant dense<0.000000e+00> : vector<8xf32>
    %46 = vector.multi_reduction <add>, %45, %cst_11 [1] : vector<8x8xf32> to vector<8xf32>
    %47 = vector.shape_cast %46 : vector<8xf32> to vector<8x1xf32>
    %48 = tpu.reciprocal %47 {approx = true} : vector<8x1xf32> -> vector<8x1xf32>
    %49 = arith.truncf %45 : vector<8x8xf32> to vector<8x8xbf16>
    %50 = arith.truncf %30 : vector<8x16xf32> to vector<8x16xbf16>
    %cst_12 = arith.constant dense<0.000000e+00> : vector<8x16xf32>
    %51 = tpu.matmul %49, %50, %cst_12 {dimension_numbers = #tpu.dot_dimension_numbers<[1], [0], [0], [1], [0, 0, 1, 1], [], []>} : vector<8x8xbf16>, vector<8x16xbf16>, vector<8x16xf32> -> vector<8x16xf32>
    %52 = vector.broadcast %48 : vector<8x1xf32> to vector<8x16xf32>
    %53 = arith.mulf %51, %52 : vector<8x16xf32>
    %54 = tpu.concatenate %27, %53 in 1 : vector<8x16xf32>, vector<8x16xf32> -> vector<8x32xf32>
    %c0_13 = arith.constant 0 : index
    %c0_14 = arith.constant 0 : index
    %c0_15 = arith.constant 0 : index
    %55 = vector.load %arg2[%c0_13, %c0_14, %c0_15] : memref<1x8x32xf32, #tpu.memory_space<vmem>>, vector<1x8x32xf32>
    %56 = vector.shape_cast %55 : vector<1x8x32xf32> to vector<8x32xf32>
    %57 = vector.shape_cast %54 : vector<8x32xf32> to vector<1x8x32xf32>
    tpu.vector_store %arg2[%c0_13, %c0_14, %c0_15], %57 {strides = array<i32>} : memref<1x8x32xf32, #tpu.memory_space<vmem>>, vector<1x8x32xf32>,
    return
  }
  func.func @transform_0(%arg0: i32) -> (i32, i32, i32) {
    %c0_i32 = arith.constant 0 : i32
    %c0_i32_0 = arith.constant 0 : i32
    %c0_i32_1 = arith.constant 0 : i32
    return %arg0, %c0_i32, %c0_i32_0 : i32, i32, i32
  }
  func.func @transform_1(%arg0: i32) -> (i32, i32, i32) {
    %c0_i32 = arith.constant 0 : i32
    %c0_i32_0 = arith.constant 0 : i32
    %c0_i32_1 = arith.constant 0 : i32
    return %arg0, %c0_i32, %c0_i32_0 : i32, i32, i32
  }
}

module attributes {stable_mosaic.version = 11 : i64} {
  func.func @kernel(%arg0: i32, %arg1: memref<1x8x32xf32, #tpu.memory_space<vmem>>, %arg2: memref<1x8x64xf32, #tpu.memory_space<vmem>>, %arg3: memref<1x8x32xf32, #tpu.memory_space<vmem>>) attributes {dimension_semantics = [#tpu.dimension_semantics<parallel>], iteration_bounds = array<i64: 2>, scalar_prefetch = 0 : i64, scratch_operands = 0 : i64, tpu.core_type = #tpu.core_type<tc>, window_params = [{transform_indices = @transform_0, window_bounds = array<i64: 1, 8, 32>}, {transform_indices = @transform_1, window_bounds = array<i64: 1, 8, 64>}, {transform_indices = @transform_2, window_bounds = array<i64: 1, 8, 32>}]} {
    %c0 = arith.constant 0 : index
    %c0_0 = arith.constant 0 : index
    %c0_1 = arith.constant 0 : index
    %0 = vector.load %arg1[%c0, %c0_0, %c0_1] : memref<1x8x32xf32, #tpu.memory_space<vmem>>, vector<1x8x32xf32>
    %1 = vector.shape_cast %0 : vector<1x8x32xf32> to vector<8x32xf32>
    %c0_2 = arith.constant 0 : index
    %c0_3 = arith.constant 0 : index
    %c0_4 = arith.constant 0 : index
    %2 = vector.load %arg2[%c0_2, %c0_3, %c0_4] : memref<1x8x64xf32, #tpu.memory_space<vmem>>, vector<1x8x64xf32>
    %3 = vector.shape_cast %2 : vector<1x8x64xf32> to vector<8x64xf32>
    %4 = vector.extract_strided_slice %1 {offsets = [0, 0], sizes = [8, 16], strides = [1, 1]} : vector<8x32xf32> to vector<8x16xf32>
    %5 = vector.extract_strided_slice %3 {offsets = [0, 0], sizes = [8, 16], strides = [1, 1]} : vector<8x64xf32> to vector<8x16xf32>
    %6 = vector.extract_strided_slice %3 {offsets = [0, 32], sizes = [8, 16], strides = [1, 1]} : vector<8x64xf32> to vector<8x16xf32>
    %cst = arith.constant 2.500000e-01 : f32
    %7 = vector.broadcast %cst : f32 to vector<8x16xf32>
    %8 = arith.mulf %4, %7 : vector<8x16xf32>
    %9 = arith.truncf %8 : vector<8x16xf32> to vector<8x16xbf16>
    %10 = arith.truncf %5 : vector<8x16xf32> to vector<8x16xbf16>
    %cst_5 = arith.constant dense<0.000000e+00> : vector<8x8xf32>
    %11 = tpu.matmul %9, %10, %cst_5 {dimension_numbers = #tpu.dot_dimension_numbers<[1], [1], [0], [0], [0, 0, 1, 0], [], []>} : vector<8x16xbf16>, vector<8x16xbf16>, vector<8x8xf32> -> vector<8x8xf32>
    %cst_6 = arith.constant dense<0xFF800000> : vector<8xf32>
    %12 = vector.multi_reduction <maximumf>, %11, %cst_6 [1] : vector<8x8xf32> to vector<8xf32>
    %13 = vector.shape_cast %12 : vector<8xf32> to vector<8x1xf32>
    %14 = vector.broadcast %13 : vector<8x1xf32> to vector<8x8xf32>
    %15 = arith.subf %11, %14 : vector<8x8xf32>
    %16 = math.exp %15 : vector<8x8xf32>
    %cst_7 = arith.constant dense<0.000000e+00> : vector<8xf32>
    %17 = vector.multi_reduction <add>, %16, %cst_7 [1] : vector<8x8xf32> to vector<8xf32>
    %18 = vector.shape_cast %17 : vector<8xf32> to vector<8x1xf32>
    %19 = tpu.reciprocal %18 {approx = true} : vector<8x1xf32> -> vector<8x1xf32>
    %20 = arith.truncf %16 : vector<8x8xf32> to vector<8x8xbf16>
    %21 = arith.truncf %6 : vector<8x16xf32> to vector<8x16xbf16>
    %cst_8 = arith.constant dense<0.000000e+00> : vector<8x16xf32>
    %22 = tpu.matmul %20, %21, %cst_8 {dimension_numbers = #tpu.dot_dimension_numbers<[1], [0], [0], [1], [0, 0, 1, 1], [], []>} : vector<8x8xbf16>, vector<8x16xbf16>, vector<8x16xf32> -> vector<8x16xf32>
    %23 = vector.broadcast %19 : vector<8x1xf32> to vector<8x16xf32>
    %24 = arith.mulf %22, %23 : vector<8x16xf32>
    %25 = vector.extract_strided_slice %1 {offsets = [0, 16], sizes = [8, 16], strides = [1, 1]} : vector<8x32xf32> to vector<8x16xf32>
    %26 = vector.extract_strided_slice %3 {offsets = [0, 16], sizes = [8, 16], strides = [1, 1]} : vector<8x64xf32> to vector<8x16xf32>
    %27 = vector.extract_strided_slice %3 {offsets = [0, 48], sizes = [8, 16], strides = [1, 1]} : vector<8x64xf32> to vector<8x16xf32>
    %cst_9 = arith.constant 2.500000e-01 : f32
    %28 = vector.broadcast %cst_9 : f32 to vector<8x16xf32>
    %29 = arith.mulf %25, %28 : vector<8x16xf32>
    %30 = arith.truncf %29 : vector<8x16xf32> to vector<8x16xbf16>
    %31 = arith.truncf %26 : vector<8x16xf32> to vector<8x16xbf16>
    %cst_10 = arith.constant dense<0.000000e+00> : vector<8x8xf32>
    %32 = tpu.matmul %30, %31, %cst_10 {dimension_numbers = #tpu.dot_dimension_numbers<[1], [1], [0], [0], [0, 0, 1, 0], [], []>} : vector<8x16xbf16>, vector<8x16xbf16>, vector<8x8xf32> -> vector<8x8xf32>
    %cst_11 = arith.constant dense<0xFF800000> : vector<8xf32>
    %33 = vector.multi_reduction <maximumf>, %32, %cst_11 [1] : vector<8x8xf32> to vector<8xf32>
    %34 = vector.shape_cast %33 : vector<8xf32> to vector<8x1xf32>
    %35 = vector.broadcast %34 : vector<8x1xf32> to vector<8x8xf32>
    %36 = arith.subf %32, %35 : vector<8x8xf32>
    %37 = math.exp %36 : vector<8x8xf32>
    %cst_12 = arith.constant dense<0.000000e+00> : vector<8xf32>
    %38 = vector.multi_reduction <add>, %37, %cst_12 [1] : vector<8x8xf32> to vector<8xf32>
    %39 = vector.shape_cast %38 : vector<8xf32> to vector<8x1xf32>
    %40 = tpu.reciprocal %39 {approx = true} : vector<8x1xf32> -> vector<8x1xf32>
    %41 = arith.truncf %37 : vector<8x8xf32> to vector<8x8xbf16>
    %42 = arith.truncf %27 : vector<8x16xf32> to vector<8x16xbf16>
    %cst_13 = arith.constant dense<0.000000e+00> : vector<8x16xf32>
    %43 = tpu.matmul %41, %42, %cst_13 {dimension_numbers = #tpu.dot_dimension_numbers<[1], [0], [0], [1], [0, 0, 1, 1], [], []>} : vector<8x8xbf16>, vector<8x16xbf16>, vector<8x16xf32> -> vector<8x16xf32>
    %44 = vector.broadcast %40 : vector<8x1xf32> to vector<8x16xf32>
    %45 = arith.mulf %43, %44 : vector<8x16xf32>
    %46 = tpu.concatenate %24, %45 in 1 : vector<8x16xf32>, vector<8x16xf32> -> vector<8x32xf32>
    %c0_14 = arith.constant 0 : index
    %c0_15 = arith.constant 0 : index
    %c0_16 = arith.constant 0 : index
    %47 = vector.load %arg3[%c0_14, %c0_15, %c0_16] : memref<1x8x32xf32, #tpu.memory_space<vmem>>, vector<1x8x32xf32>
    %48 = vector.shape_cast %47 : vector<1x8x32xf32> to vector<8x32xf32>
    %49 = vector.shape_cast %46 : vector<8x32xf32> to vector<1x8x32xf32>
    tpu.vector_store %arg3[%c0_14, %c0_15, %c0_16], %49 {strides = array<i32>} : memref<1x8x32xf32, #tpu.memory_space<vmem>>, vector<1x8x32xf32>,
    return
  }
  func.func @transform_0(%arg0: i32) -> (i32, i32, i32) {
    %c0_i32 = arith.constant 0 : i32
    %c0_i32_0 = arith.constant 0 : i32
    %c0_i32_1 = arith.constant 0 : i32
    return %arg0, %c0_i32, %c0_i32_0 : i32, i32, i32
  }
  func.func @transform_1(%arg0: i32) -> (i32, i32, i32) {
    %c0_i32 = arith.constant 0 : i32
    %c0_i32_0 = arith.constant 0 : i32
    %c0_i32_1 = arith.constant 0 : i32
    return %arg0, %c0_i32, %c0_i32_0 : i32, i32, i32
  }
  func.func @transform_2(%arg0: i32) -> (i32, i32, i32) {
    %c0_i32 = arith.constant 0 : i32
    %c0_i32_0 = arith.constant 0 : i32
    %c0_i32_1 = arith.constant 0 : i32
    return %arg0, %c0_i32, %c0_i32_0 : i32, i32, i32
  }
}

module attributes {stable_mosaic.version = 11 : i64} {
  func.func @kernel(%arg0: i32, %arg1: memref<16x32xf32, #tpu.memory_space<vmem>>, %arg2: memref<32x128xbf16, #tpu.memory_space<vmem>>, %arg3: memref<1x128xf32, #tpu.memory_space<vmem>>, %arg4: memref<16x1xi32, #tpu.memory_space<vmem>>, %arg5: memref<16x1xf32, #tpu.memory_space<vmem>>, %arg6: memref<1x1xf32, #tpu.memory_space<vmem>>, %arg7: memref<16x1xf32, #tpu.memory_space<vmem>>, %arg8: memref<16x1xf32, #tpu.memory_space<vmem>>, %arg9: memref<16x1xf32, #tpu.memory_space<vmem>>) attributes {dimension_semantics = [#tpu.dimension_semantics<arbitrary>], iteration_bounds = array<i64: 1>, scalar_prefetch = 0 : i64, scratch_operands = 3 : i64, tpu.core_type = #tpu.core_type<tc>, window_params = [{pipeline_mode = #tpu.pipeline_mode<synchronous>, transform_indices = @transform_0, window_bounds = array<i64: 16, 32>}, {transform_indices = @transform_1, window_bounds = array<i64: 32, 128>}, {transform_indices = @transform_2, window_bounds = array<i64: 1, 128>}, {pipeline_mode = #tpu.pipeline_mode<synchronous>, transform_indices = @transform_3, window_bounds = array<i64: 16, 1>}, {pipeline_mode = #tpu.pipeline_mode<synchronous>, transform_indices = @transform_4, window_bounds = array<i64: 16, 1>}, {pipeline_mode = #tpu.pipeline_mode<synchronous>, transform_indices = @transform_5, window_bounds = array<i64: 1, 1>}]} {
    %c0_i32 = arith.constant 0 : i32
    %0 = arith.cmpi eq, %arg0, %c0_i32 : i32
    %1 = arith.extui %0 : i1 to i32
    %c0_i32_0 = arith.constant 0 : i32
    %2 = arith.cmpi ne, %1, %c0_i32_0 : i32
    scf.if %2 {
      %cst_25 = arith.constant -1.000000e+30 : f32
      %44 = vector.broadcast %cst_25 : f32 to vector<16x1xf32>
      %c0_26 = arith.constant 0 : index
      %c0_27 = arith.constant 0 : index
      %45 = vector.load %arg7[%c0_26, %c0_27] : memref<16x1xf32, #tpu.memory_space<vmem>>, vector<16x1xf32>
      tpu.vector_store %arg7[%c0_26, %c0_27], %44 {strides = array<i32>} : memref<16x1xf32, #tpu.memory_space<vmem>>, vector<16x1xf32>,
      %cst_28 = arith.constant 0.000000e+00 : f32
      %46 = vector.broadcast %cst_28 : f32 to vector<16x1xf32>
      %c0_29 = arith.constant 0 : index
      %c0_30 = arith.constant 0 : index
      %47 = vector.load %arg8[%c0_29, %c0_30] : memref<16x1xf32, #tpu.memory_space<vmem>>, vector<16x1xf32>
      tpu.vector_store %arg8[%c0_29, %c0_30], %46 {strides = array<i32>} : memref<16x1xf32, #tpu.memory_space<vmem>>, vector<16x1xf32>,
      %cst_31 = arith.constant 0.000000e+00 : f32
      %48 = vector.broadcast %cst_31 : f32 to vector<16x1xf32>
      %c0_32 = arith.constant 0 : index
      %c0_33 = arith.constant 0 : index
      %49 = vector.load %arg9[%c0_32, %c0_33] : memref<16x1xf32, #tpu.memory_space<vmem>>, vector<16x1xf32>
      tpu.vector_store %arg9[%c0_32, %c0_33], %48 {strides = array<i32>} : memref<16x1xf32, #tpu.memory_space<vmem>>, vector<16x1xf32>,
    } else {
    }
    %c0 = arith.constant 0 : index
    %c0_1 = arith.constant 0 : index
    %3 = vector.load %arg1[%c0, %c0_1] : memref<16x32xf32, #tpu.memory_space<vmem>>, vector<16x32xf32>
    %4 = arith.truncf %3 : vector<16x32xf32> to vector<16x32xbf16>
    %c0_2 = arith.constant 0 : index
    %c0_3 = arith.constant 0 : index
    %5 = vector.load %arg2[%c0_2, %c0_3] : memref<32x128xbf16, #tpu.memory_space<vmem>>, vector<32x128xbf16>
    %cst = arith.constant dense<0.000000e+00> : vector<16x128xf32>
    %6 = tpu.matmul %4, %5, %cst {dimension_numbers = #tpu.dot_dimension_numbers<[1], [0], [0], [1], [0, 0, 1, 1], [], []>} : vector<16x32xbf16>, vector<32x128xbf16>, vector<16x128xf32> -> vector<16x128xf32>
    %c0_4 = arith.constant 0 : index
    %c0_5 = arith.constant 0 : index
    %7 = vector.load %arg3[%c0_4, %c0_5] : memref<1x128xf32, #tpu.memory_space<vmem>>, vector<1x128xf32>
    %8 = vector.broadcast %7 : vector<1x128xf32> to vector<16x128xf32>
    %9 = arith.addf %6, %8 : vector<16x128xf32>
    %c0_6 = arith.constant 0 : index
    %c0_7 = arith.constant 0 : index
    %10 = vector.load %arg7[%c0_6, %c0_7] : memref<16x1xf32, #tpu.memory_space<vmem>>, vector<16x1xf32>
    %cst_8 = arith.constant dense<0xFF800000> : vector<16xf32>
    %11 = vector.multi_reduction <maximumf>, %9, %cst_8 [1] : vector<16x128xf32> to vector<16xf32>
    %12 = vector.shape_cast %11 : vector<16xf32> to vector<16x1xf32>
    %13 = arith.maximumf %10, %12 : vector<16x1xf32>
    %c0_9 = arith.constant 0 : index
    %c0_10 = arith.constant 0 : index
    %14 = vector.load %arg8[%c0_9, %c0_10] : memref<16x1xf32, #tpu.memory_space<vmem>>, vector<16x1xf32>
    %15 = arith.subf %10, %13 : vector<16x1xf32>
    %16 = math.exp %15 : vector<16x1xf32>
    %17 = arith.mulf %14, %16 : vector<16x1xf32>
    %18 = vector.broadcast %13 : vector<16x1xf32> to vector<16x128xf32>
    %19 = arith.subf %9, %18 : vector<16x128xf32>
    %20 = math.exp %19 : vector<16x128xf32>
    %cst_11 = arith.constant dense<0.000000e+00> : vector<16xf32>
    %21 = vector.multi_reduction <add>, %20, %cst_11 [1] : vector<16x128xf32> to vector<16xf32>
    %22 = vector.shape_cast %21 : vector<16xf32> to vector<16x1xf32>
    %23 = arith.addf %17, %22 : vector<16x1xf32>
    %c0_12 = arith.constant 0 : index
    %c0_13 = arith.constant 0 : index
    %24 = vector.load %arg8[%c0_12, %c0_13] : memref<16x1xf32, #tpu.memory_space<vmem>>, vector<16x1xf32>
    tpu.vector_store %arg8[%c0_12, %c0_13], %23 {strides = array<i32>} : memref<16x1xf32, #tpu.memory_space<vmem>>, vector<16x1xf32>,
    %c0_14 = arith.constant 0 : index
    %c0_15 = arith.constant 0 : index
    %25 = vector.load %arg7[%c0_14, %c0_15] : memref<16x1xf32, #tpu.memory_space<vmem>>, vector<16x1xf32>
    tpu.vector_store %arg7[%c0_14, %c0_15], %13 {strides = array<i32>} : memref<16x1xf32, #tpu.memory_space<vmem>>, vector<16x1xf32>,
    %26 = tpu.iota {dimensions = array<i32: 1>} : vector<16x128xi32>
    %c128_i32 = arith.constant 128 : i32
    %27 = arith.muli %arg0, %c128_i32 : i32
    %28 = vector.broadcast %27 : i32 to vector<16x128xi32>
    %29 = arith.addi %26, %28 : vector<16x128xi32>
    %c0_16 = arith.constant 0 : index
    %c0_17 = arith.constant 0 : index
    %30 = vector.load %arg4[%c0_16, %c0_17] : memref<16x1xi32, #tpu.memory_space<vmem>>, vector<16x1xi32>
    %31 = vector.broadcast %30 : vector<16x1xi32> to vector<16x128xi32>
    %32 = arith.cmpi eq, %29, %31 : vector<16x128xi32>
    %33 = arith.extui %32 : vector<16x128xi1> to vector<16x128xi32>
    %34 = arith.sitofp %33 : vector<16x128xi32> to vector<16x128xf32>
    %c0_18 = arith.constant 0 : index
    %c0_19 = arith.constant 0 : index
    %35 = vector.load %arg9[%c0_18, %c0_19] : memref<16x1xf32, #tpu.memory_space<vmem>>, vector<16x1xf32>
    %36 = arith.mulf %9, %34 : vector<16x128xf32>
    %cst_20 = arith.constant dense<0.000000e+00> : vector<16xf32>
    %37 = vector.multi_reduction <add>, %36, %cst_20 [1] : vector<16x128xf32> to vector<16xf32>
    %38 = vector.shape_cast %37 : vector<16xf32> to vector<16x1xf32>
    %39 = arith.addf %35, %38 : vector<16x1xf32>
    %c0_21 = arith.constant 0 : index
    %c0_22 = arith.constant 0 : index
    %40 = vector.load %arg9[%c0_21, %c0_22] : memref<16x1xf32, #tpu.memory_space<vmem>>, vector<16x1xf32>
    tpu.vector_store %arg9[%c0_21, %c0_22], %39 {strides = array<i32>} : memref<16x1xf32, #tpu.memory_space<vmem>>, vector<16x1xf32>,
    %c0_i32_23 = arith.constant 0 : i32
    %41 = arith.cmpi eq, %arg0, %c0_i32_23 : i32
    %42 = arith.extui %41 : i1 to i32
    %c0_i32_24 = arith.constant 0 : i32
    %43 = arith.cmpi ne, %42, %c0_i32_24 : i32
    scf.if %43 {
      %c0_25 = arith.constant 0 : index
      %c0_26 = arith.constant 0 : index
      %44 = vector.load %arg5[%c0_25, %c0_26] : memref<16x1xf32, #tpu.memory_space<vmem>>, vector<16x1xf32>
      %c0_27 = arith.constant 0 : index
      %c0_28 = arith.constant 0 : index
      %45 = vector.load %arg7[%c0_27, %c0_28] : memref<16x1xf32, #tpu.memory_space<vmem>>, vector<16x1xf32>
      %c0_29 = arith.constant 0 : index
      %c0_30 = arith.constant 0 : index
      %46 = vector.load %arg8[%c0_29, %c0_30] : memref<16x1xf32, #tpu.memory_space<vmem>>, vector<16x1xf32>
      %47 = math.log %46 : vector<16x1xf32>
      %48 = arith.addf %45, %47 : vector<16x1xf32>
      %c0_31 = arith.constant 0 : index
      %c0_32 = arith.constant 0 : index
      %49 = vector.load %arg9[%c0_31, %c0_32] : memref<16x1xf32, #tpu.memory_space<vmem>>, vector<16x1xf32>
      %50 = arith.subf %48, %49 : vector<16x1xf32>
      %51 = arith.mulf %50, %44 : vector<16x1xf32>
      %cst_33 = arith.constant dense<0.000000e+00> : vector<1xf32>
      %52 = vector.multi_reduction <add>, %51, %cst_33 [0] : vector<16x1xf32> to vector<1xf32>
      %53 = vector.shape_cast %52 : vector<1xf32> to vector<1x1xf32>
      %cst_34 = arith.constant dense<0.000000e+00> : vector<1xf32>
      %54 = vector.multi_reduction <add>, %44, %cst_34 [0] : vector<16x1xf32> to vector<1xf32>
      %55 = vector.shape_cast %54 : vector<1xf32> to vector<1x1xf32>
      %cst_35 = arith.constant 1.000000e+00 : f32
      %56 = vector.broadcast %cst_35 : f32 to vector<1x1xf32>
      %57 = arith.maximumf %55, %56 : vector<1x1xf32>
      %58 = arith.divf %53, %57 : vector<1x1xf32>
      %c0_36 = arith.constant 0 : index
      %c0_37 = arith.constant 0 : index
      %59 = vector.load %arg6[%c0_36, %c0_37] : memref<1x1xf32, #tpu.memory_space<vmem>>, vector<1x1xf32>
      tpu.vector_store %arg6[%c0_36, %c0_37], %58 {strides = array<i32>} : memref<1x1xf32, #tpu.memory_space<vmem>>, vector<1x1xf32>,
    } else {
    }
    return
  }
  func.func @transform_0(%arg0: i32) -> (i32, i32) {
    %c0_i32 = arith.constant 0 : i32
    %c0_i32_0 = arith.constant 0 : i32
    %c0_i32_1 = arith.constant 0 : i32
    return %c0_i32, %c0_i32_0 : i32, i32
  }
  func.func @transform_1(%arg0: i32) -> (i32, i32) {
    %c0_i32 = arith.constant 0 : i32
    %c0_i32_0 = arith.constant 0 : i32
    return %c0_i32, %arg0 : i32, i32
  }
  func.func @transform_2(%arg0: i32) -> (i32, i32) {
    %c0_i32 = arith.constant 0 : i32
    %c0_i32_0 = arith.constant 0 : i32
    return %c0_i32, %arg0 : i32, i32
  }
  func.func @transform_3(%arg0: i32) -> (i32, i32) {
    %c0_i32 = arith.constant 0 : i32
    %c0_i32_0 = arith.constant 0 : i32
    %c0_i32_1 = arith.constant 0 : i32
    return %c0_i32, %c0_i32_0 : i32, i32
  }
  func.func @transform_4(%arg0: i32) -> (i32, i32) {
    %c0_i32 = arith.constant 0 : i32
    %c0_i32_0 = arith.constant 0 : i32
    %c0_i32_1 = arith.constant 0 : i32
    return %c0_i32, %c0_i32_0 : i32, i32
  }
  func.func @transform_5(%arg0: i32) -> (i32, i32) {
    %c0_i32 = arith.constant 0 : i32
    %c0_i32_0 = arith.constant 0 : i32
    %c0_i32_1 = arith.constant 0 : i32
    return %c0_i32, %c0_i32_0 : i32, i32
  }
}

</mosaic_0001>

<llo_original>
// kernel: augmentor_forward.22
$region0: #{augmentor_forward.22}
  #allocation0 [shape = 'u32[]', space=smem, size = 0x4, offset = 0x4, fixed_abs, tag = 'smem constant byte address 0x4 - core index']
  #allocation1 [shape = 'u32[72,128]{1,0:T(1,128)}', space=vmem, size = 0x9000, scoped, tag = 'internal scratch']
  %s0 = inlined_call_operand.vmem [shape: f32[16,32], index: 0, kind: input, shape index: {}]
  %s1 = inlined_call_operand.vmem [shape: f32[1,32], index: 1, kind: input, shape index: {}]
  %s2 = inlined_call_operand.vmem [shape: f32[1,32], index: 2, kind: input, shape index: {}]
  %s3 = inlined_call_operand.vmem [shape: f32[16,32], index: 3, kind: output, shape index: {}]
  %s4 = sld [smem:[#allocation0]]
  $region22: #{augmentor_forward.22} parent=0
    _
  %s6 = ssub.s32 1, %s4
  %s7 = scalar_select 0, %s6, %s4
  // Predicated region
  $region2: #{augmentor_forward.22} parent=0 // pred_check
    _
  $region3: #{augmentor_forward.22} parent=0 // pred_check_branch
    %9 = sbr.rel (0) target = $region5
  $region4: #{augmentor_forward.22} parent=0 // pred_region
    _
  $region5: #{augmentor_forward.22} parent=0 // pred_fallthru
    _
  // Predicated region
  $region6: #{augmentor_forward.22} parent=0 // pred_check
    _
  $region7: #{augmentor_forward.22} parent=0 // pred_check_branch
    %11 = sbr.rel (0) target = $region9
  $region8: #{augmentor_forward.22} parent=0 // pred_region
    _
  $region9: #{augmentor_forward.22} parent=0 // pred_fallthru
    _
  // Predicated region
  $region10: #{augmentor_forward.22} parent=0 // pred_check
    _
  $region11: #{augmentor_forward.22} parent=0 // pred_check_branch
    %13 = sbr.rel (0) target = $region13
  $region12: #{augmentor_forward.22} parent=0 // pred_region
    _
  $region13: #{augmentor_forward.22} parent=0 // pred_fallthru
    _
  %v14 = vld [vmem:[%s0] sm:$0xff]
  %v15 = vld [vmem:[%s0 + $0x8] sm:$0xff]
  %vm16 = vcmask 261120
  %v17 = vsel %vm16, %v14, 0.0
  %18 = vadd.xlane.f32.xlu0 %v17
  %v19 = vpop.xlane.xlu0 %18
  %v20 = vsel %vm16, %v15, 0.0
  %21 = vadd.xlane.f32.xlu0 %v20
  %v22 = vpop.xlane.xlu0 %21
  %v23 = vrcp.pop 32.0
  %v24 = vmul.f32 32.0, %v23
  %v25 = vsub.f32 1.0, %v24
  %v26 = vmul.f32 %v23, %v25
  %v27 = vadd.f32 %v23, %v26
  %vm28 = vweird.f32 %v23
  %v29 = vsel %vm28, %v23, %v27
  %v30 = vmul.f32 %v19, %v29
  %v31 = vmul.f32 %v22, %v29
  %v32 = vsub.f32 %v14, %v30
  %v33 = vsub.f32 %v15, %v31
  %v34 = vmul.f32 %v32, %v32
  %v35 = vmul.f32 %v33, %v33
  %v36 = vsel %vm16, %v34, 0.0
  %37 = vadd.xlane.f32.xlu0 %v36
  %v38 = vpop.xlane.xlu0 %37
  %v39 = vsel %vm16, %v35, 0.0
  %40 = vadd.xlane.f32.xlu0 %v39
  %v41 = vpop.xlane.xlu0 %40
  %v42 = vmul.f32 %v38, %v29
  %v43 = vmul.f32 %v41, %v29
  %v44 = vadd.f32 %v42, 1e-12
  %v45 = vadd.f32 %v43, 1e-12
  %v46 = vrsqrt.pop %v44
  %v47 = vmul.f32 %v46, %v44
  %v48 = vmul.f32 %v47, %v46
  %v49 = vmul.f32 0.5, %v48
  %v50 = vsub.f32 1.5, %v49
  %v51 = vmul.f32 %v46, %v50
  %vm52 = vweird.f32 %v44
  %vm53 = vweird.f32 %v46
  %vm54 = vmor %vm52, %vm53
  %v55 = vsel %vm54, %v46, %v51
  %v56 = vrsqrt.pop %v45
  %v57 = vmul.f32 %v56, %v45
  %v58 = vmul.f32 %v57, %v56
  %v59 = vmul.f32 0.5, %v58
  %v60 = vsub.f32 1.5, %v59
  %v61 = vmul.f32 %v56, %v60
  %vm62 = vweird.f32 %v45
  %vm63 = vweird.f32 %v56
  %vm64 = vmor %vm62, %vm63
  %v65 = vsel %vm64, %v56, %v61
  %v66 = vmul.f32 %v32, %v55
  %v67 = vmul.f32 %v33, %v65
  %v68 = vld [vmem:[%s1] sm:$0x1]
  %v70 = vperm.slane %v68, 0
  %v72 = vmul.f32 %v66, %v70
  %v73 = vmul.f32 %v67, %v70
  %v74 = vld [vmem:[%s2] sm:$0x1]
  %v76 = vperm.slane %v74, 0
  %v78 = vadd.f32 %v72, %v76
  %v79 = vadd.f32 %v73, %v76
  %80 = vst.msk [vmem:[%s3] sm:$0xff] %vm16, %v78
  %81 = vst.msk [vmem:[%s3 + $0x8] sm:$0xff] %vm16, %v79
  // Predicated region
  $region14: #{augmentor_forward.22} parent=0 // pred_check
    _
  $region15: #{augmentor_forward.22} parent=0 // pred_check_branch
    %83 = sbr.rel (0) target = $region17
  $region16: #{augmentor_forward.22} parent=0 // pred_region
    _
  $region17: #{augmentor_forward.22} parent=0 // pred_fallthru
    _
  // Predicated region
  $region18: #{augmentor_forward.22} parent=0 // pred_check
    _
  $region19: #{augmentor_forward.22} parent=0 // pred_check_branch
    %85 = sbr.rel (0) target = $region21
  $region20: #{augmentor_forward.22} parent=0 // pred_region
    _
  $region21: #{augmentor_forward.22} parent=0 // pred_fallthru
    _

// kernel: augmentor_forward.23
$region0: #{augmentor_forward.23}
  #allocation0 [shape = 'u32[]', space=smem, size = 0x4, offset = 0x4, fixed_abs, tag = 'smem constant byte address 0x4 - core index']
  #allocation1 [shape = 'u32[72,128]{1,0:T(1,128)}', space=vmem, size = 0x9000, scoped, tag = 'internal scratch']
  #allocation2 [shape = 'f32[16,96]{1,0:T(8,128)}', space=vmem, size = 0x2000, scoped, tag = 'scratch operand']
  %s0 = inlined_call_operand.vmem [shape: f32[16,32], index: 0, kind: input, shape index: {}]
  %s1 = inlined_call_operand.vmem [shape: bf16[32,96], index: 1, kind: input, shape index: {}]
  %s2 = inlined_call_operand.vmem [shape: f32[1,96], index: 2, kind: input, shape index: {}]
  %s3 = inlined_call_operand.vmem [shape: f32[16,96], index: 3, kind: output, shape index: {}]
  %s4 = sld [smem:[#allocation0]]
  $region30: #{augmentor_forward.23} parent=0
    _
  %s6 = ssub.s32 1, %s4
  %s7 = scalar_select 0, %s6, %s4
  // Predicated region
  $region2: #{augmentor_forward.23} parent=0 // pred_check
    _
  $region3: #{augmentor_forward.23} parent=0 // pred_check_branch
    %9 = sbr.rel (0) target = $region5
  $region4: #{augmentor_forward.23} parent=0 // pred_region
    _
  $region5: #{augmentor_forward.23} parent=0 // pred_fallthru
    _
  // Predicated region
  $region6: #{augmentor_forward.23} parent=0 // pred_check
    _
  $region7: #{augmentor_forward.23} parent=0 // pred_check_branch
    %11 = sbr.rel (0) target = $region9
  $region8: #{augmentor_forward.23} parent=0 // pred_region
    _
  $region9: #{augmentor_forward.23} parent=0 // pred_fallthru
    _
  // Predicated region
  $region10: #{augmentor_forward.23} parent=0 // pred_check
    _
  $region11: #{augmentor_forward.23} parent=0 // pred_check_branch
    %13 = sbr.rel (0) target = $region13
  $region12: #{augmentor_forward.23} parent=0 // pred_region
    _
  $region13: #{augmentor_forward.23} parent=0 // pred_fallthru
    _
  %p15 = scmp.eq.s32.totalorder 0, 0
  // Predicated region
  $region14: #{augmentor_forward.23} parent=0 // pred_check
    %p16 = pneg %p15
  $region15: #{augmentor_forward.23} parent=0 // pred_check_branch
    %18 = sbr.rel (%p16) target = $region17
  $region16: #{augmentor_forward.23} parent=0 // pred_region
    %vm19 = vcmask 785408
    %20 = vst.msk [vmem:[#allocation2] sm:$0xff] %vm19, 0.0
    %21 = vst.msk [vmem:[#allocation2 + $0x8] sm:$0xff] %vm19, 0.0
  $region17: #{augmentor_forward.23} parent=0 // pred_fallthru
    _
  %v22 = vld [vmem:[#allocation2] sm:$0xff]
  %v23 = vld [vmem:[#allocation2 + $0x8] sm:$0xff]
  %v24 = vld [vmem:[%s0] sm:$0xff]
  %v25 = vld [vmem:[%s0 + $0x8] sm:$0xff]
  %v26 = vpack.c.bf16 %v25, %v24
  %v27 = vld [vmem:[%s1] sm:$0xf]
  %v28 = vld [vmem:[%s1 + $0x4] sm:$0xf]
  %v29 = vld [vmem:[%s1 + $0x8] sm:$0xf]
  %v30 = vld [vmem:[%s1 + $0xc] sm:$0xf]
  %v35 = vunpack.c.l.b16 %v27
  %v36 = vunpack.c.l.b16 %v28
  %v37 = vunpack.c.l.b16 %v29
  %v38 = vunpack.c.l.b16 %v30
  %v39 = vpack.c.b16 %v36, %v35
  %v40 = vpack.c.b16 %v38, %v37
  %vm43 = vcmask 261120
  %v45 = vsel %vm43, %v26, 0
  %47 = vmatpush.bf16.msra.mxu0 0
  %48 = vmatpush.bf16.msra.mxu0 0
  %49 = vmatpush.bf16.msra.mxu0 0
  %50 = vmatpush.bf16.msra.mxu0 0
  %51 = vmatpush.bf16.msra.mxu0 0
  %52 = vmatpush.bf16.msra.mxu0 0
  %53 = vmatpush.bf16.msra.mxu0 %v40
  %54 = vmatpush.bf16.msra.mxu0 %v39
  %55 = vmatmul.bf16.gmra.mxu0 %v45
  %v56 = vpop.f32.mrf.mxu0
  %v57 = vadd.f32 0.0, %v56
  %v58 = vpop.f32.mrf.mxu0
  %v59 = vadd.f32 0.0, %v58
  %60 = vdwg.mxu0
  %v61 = vadd.f32 %v22, %v57
  %v62 = vadd.f32 %v23, %v59
  %vm63 = vcmask 785408
  %64 = vst.msk [vmem:[#allocation2] sm:$0xff] %vm63, %v61
  %65 = vst.msk [vmem:[#allocation2 + $0x8] sm:$0xff] %vm63, %v62
  // Predicated region
  $region18: #{augmentor_forward.23} parent=0 // pred_check
    %p66 = pneg %p15
  $region19: #{augmentor_forward.23} parent=0 // pred_check_branch
    %68 = sbr.rel (%p66) target = $region21
  $region20: #{augmentor_forward.23} parent=0 // pred_region
    %v69 = vld [vmem:[#allocation2] sm:$0xff]
    %v70 = vld [vmem:[#allocation2 + $0x8] sm:$0xff]
    %v71 = vld [vmem:[%s2] sm:$0x1]
    %v73 = vperm.slane %v71, 0
    %v75 = vadd.f32 %v69, %v73
    %v76 = vadd.f32 %v70, %v73
    %77 = vst.msk [vmem:[%s3] sm:$0xff] %vm63, %v75
    %78 = vst.msk [vmem:[%s3 + $0x8] sm:$0xff] %vm63, %v76
  $region21: #{augmentor_forward.23} parent=0 // pred_fallthru
    _
  // Predicated region
  $region22: #{augmentor_forward.23} parent=0 // pred_check
    _
  $region23: #{augmentor_forward.23} parent=0 // pred_check_branch
    %80 = sbr.rel (0) target = $region25
  $region24: #{augmentor_forward.23} parent=0 // pred_region
    _
  $region25: #{augmentor_forward.23} parent=0 // pred_fallthru
    _
  // Predicated region
  $region26: #{augmentor_forward.23} parent=0 // pred_check
    _
  $region27: #{augmentor_forward.23} parent=0 // pred_check_branch
    %82 = sbr.rel (0) target = $region29
  $region28: #{augmentor_forward.23} parent=0 // pred_region
    _
  $region29: #{augmentor_forward.23} parent=0 // pred_fallthru
    _

// kernel: augmentor_forward.24
$region0: #{augmentor_forward.24}
  #allocation0 [shape = 'u32[]', space=smem, size = 0x4, offset = 0x4, fixed_abs, tag = 'smem constant byte address 0x4 - core index']
  #allocation1 [shape = 'u32[72,128]{1,0:T(1,128)}', space=vmem, size = 0x9000, scoped, tag = 'internal scratch']
  %s0 = inlined_call_operand.vmem [shape: f32[2,8,96], index: 0, kind: input, shape index: {}]
  %s1 = inlined_call_operand.vmem [shape: f32[2,8,32], index: 1, kind: output, shape index: {}]
  %s2 = sld [smem:[#allocation0]]
  $region37: #{augmentor_forward.24} parent=0
    _
  %s4 = ssub.s32 1, %s2
  %s5 = scalar_select 0, %s4, %s2
  loop: start=0, step=1, limit=4
  $region2: #{augmentor_forward.24} parent=0 // loop_pre_header
    _
  $region3: #{augmentor_forward.24} parent=0 // loop_header
    %s7 = sphi 0, %s11
    %p8 = scmp.ge.s32.totalorder %s7, 4
    %s17 = sphi 0, %s19
    %s20 = sphi 0, %s17
    %s21 = sphi 0, %s20
    %s37 = sphi 0, %s21
    %s43 = sphi 0, %s45
    %s46 = sphi 0, %s43
    %s47 = sphi 0, %s46
    %s63 = sphi 0, %s47
  $region4: #{augmentor_forward.24} parent=0 // loop_header_branch
    %10 = sbr.rel (%p8) target = $region8
  $region5: #{augmentor_forward.24} parent=0 // loop_body
    %s12 = ssub.s32 %s7, 1
    %s13 = ssub.s32 %s7, 2
    %s14 = sadd.s32 %s7, 1
    %s15 = ssub.s32 %s7, %s14
    %p16 = scmp.eq.s32.totalorder %s15, 0
    %s18 = sadd.s32 %s17, 1
    %s19 = scalar_select %p16, %s17, %s18
    %p22 = pneg %p16
    %p23 = scmp.eq.s32.totalorder %s7, 1
    %p24 = por %p22, %p23
    %p25 = scmp.ne.s32.totalorder %s17, %s20
    %p26 = scmp.eq.s32.totalorder %s7, 0
    %p27 = por %p25, %p26
    %p28 = scmp.ne.s32.totalorder %s17, %s20
    %p29 = scmp.eq.s32.totalorder %s12, 1
    %p30 = por %p28, %p29
    %p31 = scmp.ne.s32.totalorder %s20, %s21
    %p32 = scmp.eq.s32.totalorder %s12, 0
    %p33 = por %p31, %p32
    %p34 = scmp.ne.s32.totalorder %s20, %s21
    %p35 = scmp.eq.s32.totalorder %s13, 1
    %p36 = por %p34, %p35
    %p38 = scmp.ne.s32.totalorder %s21, %s37
    %p39 = scmp.eq.s32.totalorder %s13, 0
    %p40 = por %p38, %p39
    %s41 = ssub.s32 %s7, %s14
    %p42 = scmp.eq.s32.totalorder %s41, 0
    %s44 = sadd.s32 %s43, 1
    %s45 = scalar_select %p42, %s43, %s44
    %p48 = pneg %p42
    %p49 = scmp.eq.s32.totalorder %s7, 1
    %p50 = por %p48, %p49
    %p51 = scmp.ne.s32.totalorder %s43, %s46
    %p52 = scmp.eq.s32.totalorder %s7, 0
    %p53 = por %p51, %p52
    %p54 = scmp.ne.s32.totalorder %s43, %s46
    %p55 = scmp.eq.s32.totalorder %s12, 1
    %p56 = por %p54, %p55
    %p57 = scmp.ne.s32.totalorder %s46, %s47
    %p58 = scmp.eq.s32.totalorder %s12, 0
    %p59 = por %p57, %p58
    %p60 = scmp.ne.s32.totalorder %s46, %s47
    %p61 = scmp.eq.s32.totalorder %s13, 1
    %p62 = por %p60, %p61
    %p64 = scmp.ne.s32.totalorder %s47, %s63
    %p65 = scmp.eq.s32.totalorder %s13, 0
    %p66 = por %p64, %p65
    %p67 = scmp.le.s32.totalorder 1, %s7
    %p68 = scmp.lt.s32.totalorder %s7, 3
    %p69 = pnand %p67, %p68
    %p70 = pneg %p69
    // Predicated region
    $region9: #{augmentor_forward.24} parent=5 // pred_check
      _
    $region10: #{augmentor_forward.24} parent=5 // pred_check_branch
      %72 = sbr.rel (%p69) target = $region12
    $region11: #{augmentor_forward.24} parent=5 // pred_region
      %s73 = ssub.s32 %s7, 1
    $region12: #{augmentor_forward.24} parent=5 // pred_fallthru
      _
    %p74 = scmp.lt.s32.totalorder %s7, 2
    // Predicated region
    $region13: #{augmentor_forward.24} parent=5 // pred_check
      %p75 = pneg %p74
    $region14: #{augmentor_forward.24} parent=5 // pred_check_branch
      %77 = sbr.rel (%p75) target = $region16
    $region15: #{augmentor_forward.24} parent=5 // pred_region
      // Predicated region
      $region17: #{augmentor_forward.24} parent=15 // pred_check
        %p78 = pneg %p27
      $region18: #{augmentor_forward.24} parent=15 // pred_check_branch
        %80 = sbr.rel (%p78) target = $region20
      $region19: #{augmentor_forward.24} parent=15 // pred_region
        %p81 = scmp.lt.s32.totalorder %s7, 1
        %s82 = scalar_select %p81, %s7, 1
        %s83 = smul.addr %s82, 8
        %s84 = scalar_lea.vmem %s0, %s83
      $region20: #{augmentor_forward.24} parent=15 // pred_fallthru
        _
    $region16: #{augmentor_forward.24} parent=5 // pred_fallthru
      _
    %p85 = scmp.le.s32.totalorder 1, %s7
    %p86 = scmp.lt.s32.totalorder %s7, 3
    %p87 = pnand %p85, %p86
    %p88 = pneg %p87
    // Predicated region
    $region21: #{augmentor_forward.24} parent=5 // pred_check
      _
    $region22: #{augmentor_forward.24} parent=5 // pred_check_branch
      %90 = sbr.rel (%p87) target = $region24
    $region23: #{augmentor_forward.24} parent=5 // pred_region
      %s91 = ssub.s32 %s7, 1
      %p92 = scmp.lt.s32.totalorder %s12, 1
      %s93 = scalar_select %p92, %s12, 1
      %s94 = smul.addr %s93, 8
      %s95 = scalar_lea.vmem %s0, %s94
      %p96 = pneg %p33
      %p97 = pneg %p30
      %p98 = pneg %p59
      %p99 = pneg %p56
      %p100 = scmp.lt.s32.totalorder %s12, 1
      %s101 = scalar_select %p100, %s12, 1
      %s102 = smul.addr %s101, 8
      %s103 = scalar_lea.vmem %s1, %s102
      %p104 = scmp.lt.s32.totalorder %s12, 1
      %s105 = scalar_select %p104, %s12, 1
      %s106 = smul.addr %s105, 8
      %s107 = scalar_lea.vmem %s0, %s106
      %p108 = scmp.lt.s32.totalorder %s12, 1
      %s109 = scalar_select %p108, %s12, 1
      %s110 = smul.addr %s109, 8
      %s111 = scalar_lea.vmem %s1, %s110
      %v113 = vld [vmem:[%s107] sm:$0xff]
      %v114 = vmul.f32 %v113, 0.25
      %v115 = vpack.c.bf16 %v114, %v114
      %v116 = vpack.c.bf16 %v113, %v113
      %118 = vrot.lane.b32.xlu0 %v116, 96
      %v119 = vpop.permute.xlu0 %118
      %vm120 = vcmask 130048
      %v122 = vsel %vm120, %v115, 0
      %v125 = vsel %vm120, %v119, 0
      %127 = vmatpush.bf16.xpose.msra.mxu0 0
      %128 = vmatpush.bf16.xpose.msra.mxu0 0
      %129 = vmatpush.bf16.xpose.msra.mxu0 0
      %130 = vmatpush.bf16.xpose.msra.mxu0 0
      %131 = vmatpush.bf16.xpose.msra.mxu0 0
      %132 = vmatpush.bf16.xpose.msra.mxu0 0
      %133 = vmatpush.bf16.xpose.msra.mxu0 0
      %134 = vmatpush.bf16.xpose.msra.mxu0 %v125
      %135 = vmatmul.bf16.gmra.mxu0 %v122
      %v136 = vpop.f32.mrf.mxu0
      %v137 = vadd.f32 0.0, %v136
      %v138 = vpop.f32.mrf.mxu0
      %139 = vdwg.mxu0
      %vm140 = vcmask 64512
      %v141 = vsel %vm140, %v137, -inf
      %142 = vmax.xlane.f32.xlu0 %v141
      %v143 = vpop.xlane.xlu0 %142
      %v144 = vsub.f32 %v137, %v143
      %v145 = vmul.f32 %v144, 1.442695
      %v146 = vpow.pop %v145
      %v147 = vsel %vm140, %v146, 0.0
      %148 = vadd.xlane.f32.xlu0 %v147
      %v149 = vpop.xlane.xlu0 %148
      %v150 = vrcp.pop %v149
      %v151 = vpack.c.bf16 %v146, %v146
      %152 = vrot.lane.b32.xlu0 %v116, 64
      %v153 = vpop.permute.xlu0 %152
      %v155 = vsel %vm140, %v151, 0
      %vm157 = vcmask 1043456
      %v159 = vsel %vm157, %v153, 0
      %161 = vmatpush.bf16.msra.mxu0 0
      %162 = vmatpush.bf16.msra.mxu0 0
      %163 = vmatpush.bf16.msra.mxu0 0
      %164 = vmatpush.bf16.msra.mxu0 0
      %165 = vmatpush.bf16.msra.mxu0 0
      %166 = vmatpush.bf16.msra.mxu0 0
      %167 = vmatpush.bf16.msra.mxu0 0
      %168 = vmatpush.bf16.msra.mxu0 %v159
      %169 = vmatmul.bf16.gmra.mxu0 %v155
      %v170 = vpop.f32.mrf.mxu0
      %v171 = vadd.f32 0.0, %v170
      %v172 = vpop.f32.mrf.mxu0
      %173 = vdwg.mxu0
      %v174 = vmul.f32 %v171, %v150
      %176 = vrot.lane.b32.xlu0 %v115, 112
      %v177 = vpop.permute.xlu0 %176
      %178 = vrot.lane.b32.xlu0 %v116, 80
      %v179 = vpop.permute.xlu0 %178
      %v181 = vsel %vm120, %v177, 0
      %v184 = vsel %vm120, %v179, 0
      %186 = vmatpush.bf16.xpose.msra.mxu0 0
      %187 = vmatpush.bf16.xpose.msra.mxu0 0
      %188 = vmatpush.bf16.xpose.msra.mxu0 0
      %189 = vmatpush.bf16.xpose.msra.mxu0 0
      %190 = vmatpush.bf16.xpose.msra.mxu0 0
      %191 = vmatpush.bf16.xpose.msra.mxu0 0
      %192 = vmatpush.bf16.xpose.msra.mxu0 0
      %193 = vmatpush.bf16.xpose.msra.mxu0 %v184
      %194 = vmatmul.bf16.gmra.mxu0 %v181
      %v195 = vpop.f32.mrf.mxu0
      %v196 = vadd.f32 0.0, %v195
      %v197 = vpop.f32.mrf.mxu0
      %198 = vdwg.mxu0
      %v199 = vsel %vm140, %v196, -inf
      %200 = vmax.xlane.f32.xlu0 %v199
      %v201 = vpop.xlane.xlu0 %200
      %v202 = vsub.f32 %v196, %v201
      %v203 = vmul.f32 %v202, 1.442695
      %v204 = vpow.pop %v203
      %v205 = vsel %vm140, %v204, 0.0
      %206 = vadd.xlane.f32.xlu0 %v205
      %v207 = vpop.xlane.xlu0 %206
      %v208 = vrcp.pop %v207
      %v209 = vpack.c.bf16 %v204, %v204
      %210 = vrot.lane.b32.xlu0 %v116, 48
      %v211 = vpop.permute.xlu0 %210
      %v213 = vsel %vm140, %v209, 0
      %v216 = vsel %vm157, %v211, 0
      %218 = vmatpush.bf16.msra.mxu0 0
      %219 = vmatpush.bf16.msra.mxu0 0
      %220 = vmatpush.bf16.msra.mxu0 0
      %221 = vmatpush.bf16.msra.mxu0 0
      %222 = vmatpush.bf16.msra.mxu0 0
      %223 = vmatpush.bf16.msra.mxu0 0
      %224 = vmatpush.bf16.msra.mxu0 0
      %225 = vmatpush.bf16.msra.mxu0 %v216
      %226 = vmatmul.bf16.gmra.mxu0 %v213
      %v227 = vpop.f32.mrf.mxu0
      %v228 = vadd.f32 0.0, %v227
      %v229 = vpop.f32.mrf.mxu0
      %230 = vdwg.mxu0
      %v231 = vmul.f32 %v228, %v208
      %233 = vrot.lane.b32.xlu0 %v231, 16
      %v234 = vpop.permute.xlu0 %233
      %v236 = vsel %vm120, %v174, %v234
      %vm237 = vcmask 261120
      %238 = vst.msk [vmem:[%s111] sm:$0xff] %vm237, %v236
      %p239 = scmp.lt.s32.totalorder %s12, 1
      %s240 = scalar_select %p239, %s12, 1
      %s241 = smul.addr %s240, 8
      %s242 = scalar_lea.vmem %s1, %s241
      // Predicated region
      $region25: #{augmentor_forward.24} parent=23 // pred_check
        %p243 = pneg %p56
      $region26: #{augmentor_forward.24} parent=23 // pred_check_branch
        %245 = sbr.rel (%p243) target = $region28
      $region27: #{augmentor_forward.24} parent=23 // pred_region
        _
      $region28: #{augmentor_forward.24} parent=23 // pred_fallthru
        _
    $region24: #{augmentor_forward.24} parent=5 // pred_fallthru
      _
    %p246 = scmp.le.s32.totalorder 2, %s7
    // Predicated region
    $region29: #{augmentor_forward.24} parent=5 // pred_check
      %p247 = pneg %p246
    $region30: #{augmentor_forward.24} parent=5 // pred_check_branch
      %249 = sbr.rel (%p247) target = $region32
    $region31: #{augmentor_forward.24} parent=5 // pred_region
      %s250 = ssub.s32 %s7, 2
      // Predicated region
      $region33: #{augmentor_forward.24} parent=31 // pred_check
        %p251 = pneg %p62
      $region34: #{augmentor_forward.24} parent=31 // pred_check_branch
        %253 = sbr.rel (%p251) target = $region36
      $region35: #{augmentor_forward.24} parent=31 // pred_region
        %p254 = scmp.lt.s32.totalorder %s13, 1
        %s255 = scalar_select %p254, %s13, 1
        %s256 = smul.addr %s255, 8
        %s257 = scalar_lea.vmem %s1, %s256
      $region36: #{augmentor_forward.24} parent=31 // pred_fallthru
        _
    $region32: #{augmentor_forward.24} parent=5 // pred_fallthru
      _
  $region6: #{augmentor_forward.24} parent=0 // loop_footer
    %s11 = sadd.s32 1, %s7
  $region7: #{augmentor_forward.24} parent=0 // loop_footer_branch
    %6 = sbr.rel target = $region3
  $region8: #{augmentor_forward.24} parent=0 // loop_exit
    _

// kernel: augmentor_forward.25
$region0: #{augmentor_forward.25}
  #allocation0 [shape = 'u32[]', space=smem, size = 0x4, offset = 0x4, fixed_abs, tag = 'smem constant byte address 0x4 - core index']
  #allocation1 [shape = 'u32[72,128]{1,0:T(1,128)}', space=vmem, size = 0x9000, scoped, tag = 'internal scratch']
  #allocation2 [shape = 'f32[16,32]{1,0:T(8,128)}', space=vmem, size = 0x2000, scoped, tag = 'scratch operand']
  %s0 = inlined_call_operand.vmem [shape: f32[16,32], index: 0, kind: input, shape index: {}]
  %s1 = inlined_call_operand.vmem [shape: bf16[32,32], index: 1, kind: input, shape index: {}]
  %s2 = inlined_call_operand.vmem [shape: f32[1,32], index: 2, kind: input, shape index: {}]
  %s3 = inlined_call_operand.vmem [shape: f32[16,32], index: 3, kind: output, shape index: {}]
  %s4 = sld [smem:[#allocation0]]
  $region30: #{augmentor_forward.25} parent=0
    _
  %s6 = ssub.s32 1, %s4
  %s7 = scalar_select 0, %s6, %s4
  // Predicated region
  $region2: #{augmentor_forward.25} parent=0 // pred_check
    _
  $region3: #{augmentor_forward.25} parent=0 // pred_check_branch
    %9 = sbr.rel (0) target = $region5
  $region4: #{augmentor_forward.25} parent=0 // pred_region
    _
  $region5: #{augmentor_forward.25} parent=0 // pred_fallthru
    _
  // Predicated region
  $region6: #{augmentor_forward.25} parent=0 // pred_check
    _
  $region7: #{augmentor_forward.25} parent=0 // pred_check_branch
    %11 = sbr.rel (0) target = $region9
  $region8: #{augmentor_forward.25} parent=0 // pred_region
    _
  $region9: #{augmentor_forward.25} parent=0 // pred_fallthru
    _
  // Predicated region
  $region10: #{augmentor_forward.25} parent=0 // pred_check
    _
  $region11: #{augmentor_forward.25} parent=0 // pred_check_branch
    %13 = sbr.rel (0) target = $region13
  $region12: #{augmentor_forward.25} parent=0 // pred_region
    _
  $region13: #{augmentor_forward.25} parent=0 // pred_fallthru
    _
  %p15 = scmp.eq.s32.totalorder 0, 0
  // Predicated region
  $region14: #{augmentor_forward.25} parent=0 // pred_check
    %p16 = pneg %p15
  $region15: #{augmentor_forward.25} parent=0 // pred_check_branch
    %18 = sbr.rel (%p16) target = $region17
  $region16: #{augmentor_forward.25} parent=0 // pred_region
    %vm19 = vcmask 261120
    %20 = vst.msk [vmem:[#allocation2] sm:$0xff] %vm19, 0.0
    %21 = vst.msk [vmem:[#allocation2 + $0x8] sm:$0xff] %vm19, 0.0
  $region17: #{augmentor_forward.25} parent=0 // pred_fallthru
    _
  %v22 = vld [vmem:[#allocation2] sm:$0xff]
  %v23 = vld [vmem:[#allocation2 + $0x8] sm:$0xff]
  %v24 = vld [vmem:[%s0] sm:$0xff]
  %v25 = vld [vmem:[%s0 + $0x8] sm:$0xff]
  %v26 = vpack.c.bf16 %v25, %v24
  %v27 = vld [vmem:[%s1] sm:$0xf]
  %v28 = vld [vmem:[%s1 + $0x4] sm:$0xf]
  %v29 = vld [vmem:[%s1 + $0x8] sm:$0xf]
  %v30 = vld [vmem:[%s1 + $0xc] sm:$0xf]
  %v35 = vunpack.c.l.b16 %v27
  %v36 = vunpack.c.l.b16 %v28
  %v37 = vunpack.c.l.b16 %v29
  %v38 = vunpack.c.l.b16 %v30
  %v39 = vpack.c.b16 %v36, %v35
  %v40 = vpack.c.b16 %v38, %v37
  %vm43 = vcmask 261120
  %v45 = vsel %vm43, %v26, 0
  %47 = vmatpush.bf16.msra.mxu0 0
  %48 = vmatpush.bf16.msra.mxu0 0
  %49 = vmatpush.bf16.msra.mxu0 0
  %50 = vmatpush.bf16.msra.mxu0 0
  %51 = vmatpush.bf16.msra.mxu0 0
  %52 = vmatpush.bf16.msra.mxu0 0
  %53 = vmatpush.bf16.msra.mxu0 %v40
  %54 = vmatpush.bf16.msra.mxu0 %v39
  %55 = vmatmul.bf16.gmra.mxu0 %v45
  %v56 = vpop.f32.mrf.mxu0
  %v57 = vadd.f32 0.0, %v56
  %v58 = vpop.f32.mrf.mxu0
  %v59 = vadd.f32 0.0, %v58
  %60 = vdwg.mxu0
  %v61 = vadd.f32 %v22, %v57
  %v62 = vadd.f32 %v23, %v59
  %63 = vst.msk [vmem:[#allocation2] sm:$0xff] %vm43, %v61
  %64 = vst.msk [vmem:[#allocation2 + $0x8] sm:$0xff] %vm43, %v62
  // Predicated region
  $region18: #{augmentor_forward.25} parent=0 // pred_check
    %p65 = pneg %p15
  $region19: #{augmentor_forward.25} parent=0 // pred_check_branch
    %67 = sbr.rel (%p65) target = $region21
  $region20: #{augmentor_forward.25} parent=0 // pred_region
    %v68 = vld [vmem:[#allocation2] sm:$0xff]
    %v69 = vld [vmem:[#allocation2 + $0x8] sm:$0xff]
    %v70 = vld [vmem:[%s2] sm:$0x1]
    %v72 = vperm.slane %v70, 0
    %v74 = vadd.f32 %v68, %v72
    %v75 = vadd.f32 %v69, %v72
    %76 = vst.msk [vmem:[%s3] sm:$0xff] %vm43, %v74
    %77 = vst.msk [vmem:[%s3 + $0x8] sm:$0xff] %vm43, %v75
  $region21: #{augmentor_forward.25} parent=0 // pred_fallthru
    _
  // Predicated region
  $region22: #{augmentor_forward.25} parent=0 // pred_check
    _
  $region23: #{augmentor_forward.25} parent=0 // pred_check_branch
    %79 = sbr.rel (0) target = $region25
  $region24: #{augmentor_forward.25} parent=0 // pred_region
    _
  $region25: #{augmentor_forward.25} parent=0 // pred_fallthru
    _
  // Predicated region
  $region26: #{augmentor_forward.25} parent=0 // pred_check
    _
  $region27: #{augmentor_forward.25} parent=0 // pred_check_branch
    %81 = sbr.rel (0) target = $region29
  $region28: #{augmentor_forward.25} parent=0 // pred_region
    _
  $region29: #{augmentor_forward.25} parent=0 // pred_fallthru
    _

// kernel: augmentor_forward.26
$region0: #{augmentor_forward.26}
  #allocation0 [shape = 'u32[]', space=smem, size = 0x4, offset = 0x4, fixed_abs, tag = 'smem constant byte address 0x4 - core index']
  #allocation1 [shape = 'u32[72,128]{1,0:T(1,128)}', space=vmem, size = 0x9000, scoped, tag = 'internal scratch']
  %s0 = inlined_call_operand.vmem [shape: f32[16,32], index: 0, kind: input, shape index: {}]
  %s1 = inlined_call_operand.vmem [shape: f32[16,32], index: 1, kind: input, shape index: {}]
  %s2 = inlined_call_operand.vmem [shape: f32[1,32], index: 2, kind: input, shape index: {}]
  %s3 = inlined_call_operand.vmem [shape: f32[1,32], index: 3, kind: input, shape index: {}]
  %s4 = inlined_call_operand.vmem [shape: f32[16,32], index: 4, kind: output, shape index: {}]
  %s5 = sld [smem:[#allocation0]]
  $region26: #{augmentor_forward.26} parent=0
    _
  %s7 = ssub.s32 1, %s5
  %s8 = scalar_select 0, %s7, %s5
  // Predicated region
  $region2: #{augmentor_forward.26} parent=0 // pred_check
    _
  $region3: #{augmentor_forward.26} parent=0 // pred_check_branch
    %10 = sbr.rel (0) target = $region5
  $region4: #{augmentor_forward.26} parent=0 // pred_region
    _
  $region5: #{augmentor_forward.26} parent=0 // pred_fallthru
    _
  // Predicated region
  $region6: #{augmentor_forward.26} parent=0 // pred_check
    _
  $region7: #{augmentor_forward.26} parent=0 // pred_check_branch
    %12 = sbr.rel (0) target = $region9
  $region8: #{augmentor_forward.26} parent=0 // pred_region
    _
  $region9: #{augmentor_forward.26} parent=0 // pred_fallthru
    _
  // Predicated region
  $region10: #{augmentor_forward.26} parent=0 // pred_check
    _
  $region11: #{augmentor_forward.26} parent=0 // pred_check_branch
    %14 = sbr.rel (0) target = $region13
  $region12: #{augmentor_forward.26} parent=0 // pred_region
    _
  $region13: #{augmentor_forward.26} parent=0 // pred_fallthru
    _
  // Predicated region
  $region14: #{augmentor_forward.26} parent=0 // pred_check
    _
  $region15: #{augmentor_forward.26} parent=0 // pred_check_branch
    %16 = sbr.rel (0) target = $region17
  $region16: #{augmentor_forward.26} parent=0 // pred_region
    _
  $region17: #{augmentor_forward.26} parent=0 // pred_fallthru
    _
  %v17 = vld [vmem:[%s0] sm:$0xff]
  %v18 = vld [vmem:[%s0 + $0x8] sm:$0xff]
  %v19 = vld [vmem:[%s1] sm:$0xff]
  %v20 = vld [vmem:[%s1 + $0x8] sm:$0xff]
  %v21 = vadd.f32 %v17, %v19
  %v22 = vadd.f32 %v18, %v20
  %vm23 = vcmask 261120
  %v24 = vsel %vm23, %v21, 0.0
  %25 = vadd.xlane.f32.xlu0 %v24
  %v26 = vpop.xlane.xlu0 %25
  %v27 = vsel %vm23, %v22, 0.0
  %28 = vadd.xlane.f32.xlu0 %v27
  %v29 = vpop.xlane.xlu0 %28
  %v30 = vrcp.pop 32.0
  %v31 = vmul.f32 32.0, %v30
  %v32 = vsub.f32 1.0, %v31
  %v33 = vmul.f32 %v30, %v32
  %v34 = vadd.f32 %v30, %v33
  %vm35 = vweird.f32 %v30
  %v36 = vsel %vm35, %v30, %v34
  %v37 = vmul.f32 %v26, %v36
  %v38 = vmul.f32 %v29, %v36
  %v39 = vsub.f32 %v21, %v37
  %v40 = vsub.f32 %v22, %v38
  %v41 = vmul.f32 %v39, %v39
  %v42 = vmul.f32 %v40, %v40
  %v43 = vsel %vm23, %v41, 0.0
  %44 = vadd.xlane.f32.xlu0 %v43
  %v45 = vpop.xlane.xlu0 %44
  %v46 = vsel %vm23, %v42, 0.0
  %47 = vadd.xlane.f32.xlu0 %v46
  %v48 = vpop.xlane.xlu0 %47
  %v49 = vmul.f32 %v45, %v36
  %v50 = vmul.f32 %v48, %v36
  %v51 = vadd.f32 %v49, 1e-12
  %v52 = vadd.f32 %v50, 1e-12
  %v53 = vrsqrt.pop %v51
  %v54 = vmul.f32 %v53, %v51
  %v55 = vmul.f32 %v54, %v53
  %v56 = vmul.f32 0.5, %v55
  %v57 = vsub.f32 1.5, %v56
  %v58 = vmul.f32 %v53, %v57
  %vm59 = vweird.f32 %v51
  %vm60 = vweird.f32 %v53
  %vm61 = vmor %vm59, %vm60
  %v62 = vsel %vm61, %v53, %v58
  %v63 = vrsqrt.pop %v52
  %v64 = vmul.f32 %v63, %v52
  %v65 = vmul.f32 %v64, %v63
  %v66 = vmul.f32 0.5, %v65
  %v67 = vsub.f32 1.5, %v66
  %v68 = vmul.f32 %v63, %v67
  %vm69 = vweird.f32 %v52
  %vm70 = vweird.f32 %v63
  %vm71 = vmor %vm69, %vm70
  %v72 = vsel %vm71, %v63, %v68
  %v73 = vmul.f32 %v39, %v62
  %v74 = vmul.f32 %v40, %v72
  %v75 = vld [vmem:[%s2] sm:$0x1]
  %v77 = vperm.slane %v75, 0
  %v79 = vmul.f32 %v73, %v77
  %v80 = vmul.f32 %v74, %v77
  %v81 = vld [vmem:[%s3] sm:$0x1]
  %v83 = vperm.slane %v81, 0
  %v85 = vadd.f32 %v79, %v83
  %v86 = vadd.f32 %v80, %v83
  %87 = vst.msk [vmem:[%s4] sm:$0xff] %vm23, %v85
  %88 = vst.msk [vmem:[%s4 + $0x8] sm:$0xff] %vm23, %v86
  // Predicated region
  $region18: #{augmentor_forward.26} parent=0 // pred_check
    _
  $region19: #{augmentor_forward.26} parent=0 // pred_check_branch
    %90 = sbr.rel (0) target = $region21
  $region20: #{augmentor_forward.26} parent=0 // pred_region
    _
  $region21: #{augmentor_forward.26} parent=0 // pred_fallthru
    _
  // Predicated region
  $region22: #{augmentor_forward.26} parent=0 // pred_check
    _
  $region23: #{augmentor_forward.26} parent=0 // pred_check_branch
    %92 = sbr.rel (0) target = $region25
  $region24: #{augmentor_forward.26} parent=0 // pred_region
    _
  $region25: #{augmentor_forward.26} parent=0 // pred_fallthru
    _

// kernel: augmentor_forward.28
$region0: #{augmentor_forward.28}
  #allocation0 [shape = 'u32[]', space=smem, size = 0x4, offset = 0x4, fixed_abs, tag = 'smem constant byte address 0x4 - core index']
  #allocation1 [shape = 'u32[72,128]{1,0:T(1,128)}', space=vmem, size = 0x9000, scoped, tag = 'internal scratch']
  #allocation2 [shape = 'f32[16,32]{1,0:T(8,128)}', space=vmem, size = 0x2000, scoped, tag = 'scratch operand']
  %s0 = inlined_call_operand.vmem [shape: f32[16,64], index: 0, kind: input, shape index: {}]
  %s1 = inlined_call_operand.vmem [shape: bf16[64,32], index: 1, kind: input, shape index: {}]
  %s2 = inlined_call_operand.vmem [shape: f32[1,32], index: 2, kind: input, shape index: {}]
  %s3 = inlined_call_operand.vmem [shape: f32[16,32], index: 3, kind: output, shape index: {}]
  %s4 = sld [smem:[#allocation0]]
  $region30: #{augmentor_forward.28} parent=0
    _
  %s6 = ssub.s32 1, %s4
  %s7 = scalar_select 0, %s6, %s4
  // Predicated region
  $region2: #{augmentor_forward.28} parent=0 // pred_check
    _
  $region3: #{augmentor_forward.28} parent=0 // pred_check_branch
    %9 = sbr.rel (0) target = $region5
  $region4: #{augmentor_forward.28} parent=0 // pred_region
    _
  $region5: #{augmentor_forward.28} parent=0 // pred_fallthru
    _
  // Predicated region
  $region6: #{augmentor_forward.28} parent=0 // pred_check
    _
  $region7: #{augmentor_forward.28} parent=0 // pred_check_branch
    %11 = sbr.rel (0) target = $region9
  $region8: #{augmentor_forward.28} parent=0 // pred_region
    _
  $region9: #{augmentor_forward.28} parent=0 // pred_fallthru
    _
  // Predicated region
  $region10: #{augmentor_forward.28} parent=0 // pred_check
    _
  $region11: #{augmentor_forward.28} parent=0 // pred_check_branch
    %13 = sbr.rel (0) target = $region13
  $region12: #{augmentor_forward.28} parent=0 // pred_region
    _
  $region13: #{augmentor_forward.28} parent=0 // pred_fallthru
    _
  %p15 = scmp.eq.s32.totalorder 0, 0
  // Predicated region
  $region14: #{augmentor_forward.28} parent=0 // pred_check
    %p16 = pneg %p15
  $region15: #{augmentor_forward.28} parent=0 // pred_check_branch
    %18 = sbr.rel (%p16) target = $region17
  $region16: #{augmentor_forward.28} parent=0 // pred_region
    %vm19 = vcmask 261120
    %20 = vst.msk [vmem:[#allocation2] sm:$0xff] %vm19, 0.0
    %21 = vst.msk [vmem:[#allocation2 + $0x8] sm:$0xff] %vm19, 0.0
  $region17: #{augmentor_forward.28} parent=0 // pred_fallthru
    _
  %v22 = vld [vmem:[#allocation2] sm:$0xff]
  %v23 = vld [vmem:[#allocation2 + $0x8] sm:$0xff]
  %v24 = vld [vmem:[%s0] sm:$0xff]
  %v25 = vld [vmem:[%s0 + $0x8] sm:$0xff]
  %v26 = vpack.c.bf16 %v25, %v24
  %v27 = vld [vmem:[%s1] sm:$0xf]
  %v28 = vld [vmem:[%s1 + $0x4] sm:$0xf]
  %v29 = vld [vmem:[%s1 + $0x8] sm:$0xf]
  %v30 = vld [vmem:[%s1 + $0xc] sm:$0xf]
  %v31 = vld [vmem:[%s1 + $0x10] sm:$0xf]
  %v32 = vld [vmem:[%s1 + $0x14] sm:$0xf]
  %v33 = vld [vmem:[%s1 + $0x18] sm:$0xf]
  %v34 = vld [vmem:[%s1 + $0x1c] sm:$0xf]
  %v43 = vunpack.c.l.b16 %v27
  %v44 = vunpack.c.l.b16 %v28
  %v45 = vunpack.c.l.b16 %v29
  %v46 = vunpack.c.l.b16 %v30
  %v47 = vunpack.c.l.b16 %v31
  %v48 = vunpack.c.l.b16 %v32
  %v49 = vunpack.c.l.b16 %v33
  %v50 = vunpack.c.l.b16 %v34
  %v51 = vpack.c.b16 %v44, %v43
  %v52 = vpack.c.b16 %v46, %v45
  %v53 = vpack.c.b16 %v48, %v47
  %v54 = vpack.c.b16 %v50, %v49
  %vm59 = vcmask 523264
  %v61 = vsel %vm59, %v26, 0
  %63 = vmatpush.bf16.msra.mxu0 0
  %64 = vmatpush.bf16.msra.mxu0 0
  %65 = vmatpush.bf16.msra.mxu0 0
  %66 = vmatpush.bf16.msra.mxu0 0
  %67 = vmatpush.bf16.msra.mxu0 %v54
  %68 = vmatpush.bf16.msra.mxu0 %v53
  %69 = vmatpush.bf16.msra.mxu0 %v52
  %70 = vmatpush.bf16.msra.mxu0 %v51
  %71 = vmatmul.bf16.gmra.mxu0 %v61
  %v72 = vpop.f32.mrf.mxu0
  %v73 = vadd.f32 0.0, %v72
  %v74 = vpop.f32.mrf.mxu0
  %v75 = vadd.f32 0.0, %v74
  %76 = vdwg.mxu0
  %v77 = vadd.f32 %v22, %v73
  %v78 = vadd.f32 %v23, %v75
  %vm79 = vcmask 261120
  %80 = vst.msk [vmem:[#allocation2] sm:$0xff] %vm79, %v77
  %81 = vst.msk [vmem:[#allocation2 + $0x8] sm:$0xff] %vm79, %v78
  // Predicated region
  $region18: #{augmentor_forward.28} parent=0 // pred_check
    %p82 = pneg %p15
  $region19: #{augmentor_forward.28} parent=0 // pred_check_branch
    %84 = sbr.rel (%p82) target = $region21
  $region20: #{augmentor_forward.28} parent=0 // pred_region
    %v85 = vld [vmem:[#allocation2] sm:$0xff]
    %v86 = vld [vmem:[#allocation2 + $0x8] sm:$0xff]
    %v87 = vld [vmem:[%s2] sm:$0x1]
    %v89 = vperm.slane %v87, 0
    %v91 = vadd.f32 %v85, %v89
    %v92 = vadd.f32 %v86, %v89
    %93 = vst.msk [vmem:[%s3] sm:$0xff] %vm79, %v91
    %94 = vst.msk [vmem:[%s3 + $0x8] sm:$0xff] %vm79, %v92
  $region21: #{augmentor_forward.28} parent=0 // pred_fallthru
    _
  // Predicated region
  $region22: #{augmentor_forward.28} parent=0 // pred_check
    _
  $region23: #{augmentor_forward.28} parent=0 // pred_check_branch
    %96 = sbr.rel (0) target = $region25
  $region24: #{augmentor_forward.28} parent=0 // pred_region
    _
  $region25: #{augmentor_forward.28} parent=0 // pred_fallthru
    _
  // Predicated region
  $region26: #{augmentor_forward.28} parent=0 // pred_check
    _
  $region27: #{augmentor_forward.28} parent=0 // pred_check_branch
    %98 = sbr.rel (0) target = $region29
  $region28: #{augmentor_forward.28} parent=0 // pred_region
    _
  $region29: #{augmentor_forward.28} parent=0 // pred_fallthru
    _

// kernel: augmentor_forward.36
$region0: #{augmentor_forward.36}
  #allocation0 [shape = 'u32[]', space=smem, size = 0x4, offset = 0x4, fixed_abs, tag = 'smem constant byte address 0x4 - core index']
  #allocation1 [shape = 'u32[72,128]{1,0:T(1,128)}', space=vmem, size = 0x9000, scoped, tag = 'internal scratch']
  #allocation2 [shape = 'f32[16,64]{1,0:T(8,128)}', space=vmem, size = 0x2000, scoped, tag = 'scratch operand']
  %s0 = inlined_call_operand.vmem [shape: f32[16,32], index: 0, kind: input, shape index: {}]
  %s1 = inlined_call_operand.vmem [shape: bf16[32,64], index: 1, kind: input, shape index: {}]
  %s2 = inlined_call_operand.vmem [shape: f32[1,64], index: 2, kind: input, shape index: {}]
  %s3 = inlined_call_operand.vmem [shape: f32[16,64], index: 3, kind: output, shape index: {}]
  %s4 = sld [smem:[#allocation0]]
  $region30: #{augmentor_forward.36} parent=0
    _
  %s6 = ssub.s32 1, %s4
  %s7 = scalar_select 0, %s6, %s4
  // Predicated region
  $region2: #{augmentor_forward.36} parent=0 // pred_check
    _
  $region3: #{augmentor_forward.36} parent=0 // pred_check_branch
    %9 = sbr.rel (0) target = $region5
  $region4: #{augmentor_forward.36} parent=0 // pred_region
    _
  $region5: #{augmentor_forward.36} parent=0 // pred_fallthru
    _
  // Predicated region
  $region6: #{augmentor_forward.36} parent=0 // pred_check
    _
  $region7: #{augmentor_forward.36} parent=0 // pred_check_branch
    %11 = sbr.rel (0) target = $region9
  $region8: #{augmentor_forward.36} parent=0 // pred_region
    _
  $region9: #{augmentor_forward.36} parent=0 // pred_fallthru
    _
  // Predicated region
  $region10: #{augmentor_forward.36} parent=0 // pred_check
    _
  $region11: #{augmentor_forward.36} parent=0 // pred_check_branch
    %13 = sbr.rel (0) target = $region13
  $region12: #{augmentor_forward.36} parent=0 // pred_region
    _
  $region13: #{augmentor_forward.36} parent=0 // pred_fallthru
    _
  %p15 = scmp.eq.s32.totalorder 0, 0
  // Predicated region
  $region14: #{augmentor_forward.36} parent=0 // pred_check
    %p16 = pneg %p15
  $region15: #{augmentor_forward.36} parent=0 // pred_check_branch
    %18 = sbr.rel (%p16) target = $region17
  $region16: #{augmentor_forward.36} parent=0 // pred_region
    %vm19 = vcmask 523264
    %20 = vst.msk [vmem:[#allocation2] sm:$0xff] %vm19, 0.0
    %21 = vst.msk [vmem:[#allocation2 + $0x8] sm:$0xff] %vm19, 0.0
  $region17: #{augmentor_forward.36} parent=0 // pred_fallthru
    _
  %v22 = vld [vmem:[#allocation2] sm:$0xff]
  %v23 = vld [vmem:[#allocation2 + $0x8] sm:$0xff]
  %v24 = vld [vmem:[%s0] sm:$0xff]
  %v25 = vld [vmem:[%s0 + $0x8] sm:$0xff]
  %v26 = vpack.c.bf16 %v25, %v24
  %v27 = vld [vmem:[%s1] sm:$0xf]
  %v28 = vld [vmem:[%s1 + $0x4] sm:$0xf]
  %v29 = vld [vmem:[%s1 + $0x8] sm:$0xf]
  %v30 = vld [vmem:[%s1 + $0xc] sm:$0xf]
  %v35 = vunpack.c.l.b16 %v27
  %v36 = vunpack.c.l.b16 %v28
  %v37 = vunpack.c.l.b16 %v29
  %v38 = vunpack.c.l.b16 %v30
  %v39 = vpack.c.b16 %v36, %v35
  %v40 = vpack.c.b16 %v38, %v37
  %vm43 = vcmask 261120
  %v45 = vsel %vm43, %v26, 0
  %47 = vmatpush.bf16.msra.mxu0 0
  %48 = vmatpush.bf16.msra.mxu0 0
  %49 = vmatpush.bf16.msra.mxu0 0
  %50 = vmatpush.bf16.msra.mxu0 0
  %51 = vmatpush.bf16.msra.mxu0 0
  %52 = vmatpush.bf16.msra.mxu0 0
  %53 = vmatpush.bf16.msra.mxu0 %v40
  %54 = vmatpush.bf16.msra.mxu0 %v39
  %55 = vmatmul.bf16.gmra.mxu0 %v45
  %v56 = vpop.f32.mrf.mxu0
  %v57 = vadd.f32 0.0, %v56
  %v58 = vpop.f32.mrf.mxu0
  %v59 = vadd.f32 0.0, %v58
  %60 = vdwg.mxu0
  %v61 = vadd.f32 %v22, %v57
  %v62 = vadd.f32 %v23, %v59
  %vm63 = vcmask 523264
  %64 = vst.msk [vmem:[#allocation2] sm:$0xff] %vm63, %v61
  %65 = vst.msk [vmem:[#allocation2 + $0x8] sm:$0xff] %vm63, %v62
  // Predicated region
  $region18: #{augmentor_forward.36} parent=0 // pred_check
    %p66 = pneg %p15
  $region19: #{augmentor_forward.36} parent=0 // pred_check_branch
    %68 = sbr.rel (%p66) target = $region21
  $region20: #{augmentor_forward.36} parent=0 // pred_region
    %v69 = vld [vmem:[#allocation2] sm:$0xff]
    %v70 = vld [vmem:[#allocation2 + $0x8] sm:$0xff]
    %v71 = vld [vmem:[%s2] sm:$0x1]
    %v73 = vperm.slane %v71, 0
    %v75 = vadd.f32 %v69, %v73
    %v76 = vadd.f32 %v70, %v73
    %77 = vst.msk [vmem:[%s3] sm:$0xff] %vm63, %v75
    %78 = vst.msk [vmem:[%s3 + $0x8] sm:$0xff] %vm63, %v76
  $region21: #{augmentor_forward.36} parent=0 // pred_fallthru
    _
  // Predicated region
  $region22: #{augmentor_forward.36} parent=0 // pred_check
    _
  $region23: #{augmentor_forward.36} parent=0 // pred_check_branch
    %80 = sbr.rel (0) target = $region25
  $region24: #{augmentor_forward.36} parent=0 // pred_region
    _
  $region25: #{augmentor_forward.36} parent=0 // pred_fallthru
    _
  // Predicated region
  $region26: #{augmentor_forward.36} parent=0 // pred_check
    _
  $region27: #{augmentor_forward.36} parent=0 // pred_check_branch
    %82 = sbr.rel (0) target = $region29
  $region28: #{augmentor_forward.36} parent=0 // pred_region
    _
  $region29: #{augmentor_forward.36} parent=0 // pred_fallthru
    _

// kernel: augmentor_forward.27
$region0: #{augmentor_forward.27}
  #allocation0 [shape = 'u32[]', space=smem, size = 0x4, offset = 0x4, fixed_abs, tag = 'smem constant byte address 0x4 - core index']
  #allocation1 [shape = 'u32[72,128]{1,0:T(1,128)}', space=vmem, size = 0x9000, scoped, tag = 'internal scratch']
  #allocation2 [shape = 'f32[16,64]{1,0:T(8,128)}', space=vmem, size = 0x2000, scoped, tag = 'scratch operand']
  %s0 = inlined_call_operand.vmem [shape: f32[16,32], index: 0, kind: input, shape index: {}]
  %s1 = inlined_call_operand.vmem [shape: bf16[32,64], index: 1, kind: input, shape index: {}]
  %s2 = inlined_call_operand.vmem [shape: f32[1,64], index: 2, kind: input, shape index: {}]
  %s3 = inlined_call_operand.vmem [shape: f32[16,64], index: 3, kind: output, shape index: {}]
  %s4 = sld [smem:[#allocation0]]
  $region30: #{augmentor_forward.27} parent=0
    _
  %s6 = ssub.s32 1, %s4
  %s7 = scalar_select 0, %s6, %s4
  // Predicated region
  $region2: #{augmentor_forward.27} parent=0 // pred_check
    _
  $region3: #{augmentor_forward.27} parent=0 // pred_check_branch
    %9 = sbr.rel (0) target = $region5
  $region4: #{augmentor_forward.27} parent=0 // pred_region
    _
  $region5: #{augmentor_forward.27} parent=0 // pred_fallthru
    _
  // Predicated region
  $region6: #{augmentor_forward.27} parent=0 // pred_check
    _
  $region7: #{augmentor_forward.27} parent=0 // pred_check_branch
    %11 = sbr.rel (0) target = $region9
  $region8: #{augmentor_forward.27} parent=0 // pred_region
    _
  $region9: #{augmentor_forward.27} parent=0 // pred_fallthru
    _
  // Predicated region
  $region10: #{augmentor_forward.27} parent=0 // pred_check
    _
  $region11: #{augmentor_forward.27} parent=0 // pred_check_branch
    %13 = sbr.rel (0) target = $region13
  $region12: #{augmentor_forward.27} parent=0 // pred_region
    _
  $region13: #{augmentor_forward.27} parent=0 // pred_fallthru
    _
  %p15 = scmp.eq.s32.totalorder 0, 0
  // Predicated region
  $region14: #{augmentor_forward.27} parent=0 // pred_check
    %p16 = pneg %p15
  $region15: #{augmentor_forward.27} parent=0 // pred_check_branch
    %18 = sbr.rel (%p16) target = $region17
  $region16: #{augmentor_forward.27} parent=0 // pred_region
    %vm19 = vcmask 523264
    %20 = vst.msk [vmem:[#allocation2] sm:$0xff] %vm19, 0.0
    %21 = vst.msk [vmem:[#allocation2 + $0x8] sm:$0xff] %vm19, 0.0
  $region17: #{augmentor_forward.27} parent=0 // pred_fallthru
    _
  %v22 = vld [vmem:[#allocation2] sm:$0xff]
  %v23 = vld [vmem:[#allocation2 + $0x8] sm:$0xff]
  %v24 = vld [vmem:[%s0] sm:$0xff]
  %v25 = vld [vmem:[%s0 + $0x8] sm:$0xff]
  %v26 = vpack.c.bf16 %v25, %v24
  %v27 = vld [vmem:[%s1] sm:$0xf]
  %v28 = vld [vmem:[%s1 + $0x4] sm:$0xf]
  %v29 = vld [vmem:[%s1 + $0x8] sm:$0xf]
  %v30 = vld [vmem:[%s1 + $0xc] sm:$0xf]
  %v35 = vunpack.c.l.b16 %v27
  %v36 = vunpack.c.l.b16 %v28
  %v37 = vunpack.c.l.b16 %v29
  %v38 = vunpack.c.l.b16 %v30
  %v39 = vpack.c.b16 %v36, %v35
  %v40 = vpack.c.b16 %v38, %v37
  %vm43 = vcmask 261120
  %v45 = vsel %vm43, %v26, 0
  %47 = vmatpush.bf16.msra.mxu0 0
  %48 = vmatpush.bf16.msra.mxu0 0
  %49 = vmatpush.bf16.msra.mxu0 0
  %50 = vmatpush.bf16.msra.mxu0 0
  %51 = vmatpush.bf16.msra.mxu0 0
  %52 = vmatpush.bf16.msra.mxu0 0
  %53 = vmatpush.bf16.msra.mxu0 %v40
  %54 = vmatpush.bf16.msra.mxu0 %v39
  %55 = vmatmul.bf16.gmra.mxu0 %v45
  %v56 = vpop.f32.mrf.mxu0
  %v57 = vadd.f32 0.0, %v56
  %v58 = vpop.f32.mrf.mxu0
  %v59 = vadd.f32 0.0, %v58
  %60 = vdwg.mxu0
  %v61 = vadd.f32 %v22, %v57
  %v62 = vadd.f32 %v23, %v59
  %vm63 = vcmask 523264
  %64 = vst.msk [vmem:[#allocation2] sm:$0xff] %vm63, %v61
  %65 = vst.msk [vmem:[#allocation2 + $0x8] sm:$0xff] %vm63, %v62
  // Predicated region
  $region18: #{augmentor_forward.27} parent=0 // pred_check
    %p66 = pneg %p15
  $region19: #{augmentor_forward.27} parent=0 // pred_check_branch
    %68 = sbr.rel (%p66) target = $region21
  $region20: #{augmentor_forward.27} parent=0 // pred_region
    %v69 = vld [vmem:[#allocation2] sm:$0xff]
    %v70 = vld [vmem:[#allocation2 + $0x8] sm:$0xff]
    %v71 = vld [vmem:[%s2] sm:$0x1]
    %v73 = vperm.slane %v71, 0
    %v75 = vadd.f32 %v69, %v73
    %v76 = vadd.f32 %v70, %v73
    %v77 = vmul.f32 %v75, %v75
    %v78 = vmul.f32 %v76, %v76
    %v79 = vmul.f32 %v75, %v77
    %v80 = vmul.f32 %v76, %v78
    %v81 = vmul.f32 %v79, 0.044715
    %v82 = vmul.f32 %v80, 0.044715
    %v83 = vadd.f32 %v75, %v81
    %v84 = vadd.f32 %v76, %v82
    %v85 = vmul.f32 %v83, 0.7978846
    %v86 = vmul.f32 %v84, 0.7978846
    %v87 = vtanh.pop %v85
    %v88 = vtanh.pop %v86
    %v89 = vadd.f32 %v87, 1.0
    %v90 = vadd.f32 %v88, 1.0
    %v91 = vmul.f32 %v89, 0.5
    %v92 = vmul.f32 %v90, 0.5
    %v93 = vmul.f32 %v75, %v91
    %v94 = vmul.f32 %v76, %v92
    %95 = vst.msk [vmem:[%s3] sm:$0xff] %vm63, %v93
    %96 = vst.msk [vmem:[%s3 + $0x8] sm:$0xff] %vm63, %v94
  $region21: #{augmentor_forward.27} parent=0 // pred_fallthru
    _
  // Predicated region
  $region22: #{augmentor_forward.27} parent=0 // pred_check
    _
  $region23: #{augmentor_forward.27} parent=0 // pred_check_branch
    %98 = sbr.rel (0) target = $region25
  $region24: #{augmentor_forward.27} parent=0 // pred_region
    _
  $region25: #{augmentor_forward.27} parent=0 // pred_fallthru
    _
  // Predicated region
  $region26: #{augmentor_forward.27} parent=0 // pred_check
    _
  $region27: #{augmentor_forward.27} parent=0 // pred_check_branch
    %100 = sbr.rel (0) target = $region29
  $region28: #{augmentor_forward.27} parent=0 // pred_region
    _
  $region29: #{augmentor_forward.27} parent=0 // pred_fallthru
    _

// kernel: augmentor_forward.32
$region0: #{augmentor_forward.32}
  #allocation0 [shape = 'u32[]', space=smem, size = 0x4, offset = 0x4, fixed_abs, tag = 'smem constant byte address 0x4 - core index']
  #allocation1 [shape = 'u32[72,128]{1,0:T(1,128)}', space=vmem, size = 0x9000, scoped, tag = 'internal scratch']
  %s0 = inlined_call_operand.vmem [shape: f32[2,8,96], index: 0, kind: input, shape index: {}]
  %s1 = inlined_call_operand.vmem [shape: f32[2,8,32], index: 1, kind: output, shape index: {}]
  %s2 = sld [smem:[#allocation0]]
  $region37: #{augmentor_forward.32} parent=0
    _
  %s4 = ssub.s32 1, %s2
  %s5 = scalar_select 0, %s4, %s2
  loop: start=0, step=1, limit=4
  $region2: #{augmentor_forward.32} parent=0 // loop_pre_header
    _
  $region3: #{augmentor_forward.32} parent=0 // loop_header
    %s7 = sphi 0, %s11
    %p8 = scmp.ge.s32.totalorder %s7, 4
    %s17 = sphi 0, %s19
    %s20 = sphi 0, %s17
    %s21 = sphi 0, %s20
    %s37 = sphi 0, %s21
    %s43 = sphi 0, %s45
    %s46 = sphi 0, %s43
    %s47 = sphi 0, %s46
    %s63 = sphi 0, %s47
  $region4: #{augmentor_forward.32} parent=0 // loop_header_branch
    %10 = sbr.rel (%p8) target = $region8
  $region5: #{augmentor_forward.32} parent=0 // loop_body
    %s12 = ssub.s32 %s7, 1
    %s13 = ssub.s32 %s7, 2
    %s14 = sadd.s32 %s7, 1
    %s15 = ssub.s32 %s7, %s14
    %p16 = scmp.eq.s32.totalorder %s15, 0
    %s18 = sadd.s32 %s17, 1
    %s19 = scalar_select %p16, %s17, %s18
    %p22 = pneg %p16
    %p23 = scmp.eq.s32.totalorder %s7, 1
    %p24 = por %p22, %p23
    %p25 = scmp.ne.s32.totalorder %s17, %s20
    %p26 = scmp.eq.s32.totalorder %s7, 0
    %p27 = por %p25, %p26
    %p28 = scmp.ne.s32.totalorder %s17, %s20
    %p29 = scmp.eq.s32.totalorder %s12, 1
    %p30 = por %p28, %p29
    %p31 = scmp.ne.s32.totalorder %s20, %s21
    %p32 = scmp.eq.s32.totalorder %s12, 0
    %p33 = por %p31, %p32
    %p34 = scmp.ne.s32.totalorder %s20, %s21
    %p35 = scmp.eq.s32.totalorder %s13, 1
    %p36 = por %p34, %p35
    %p38 = scmp.ne.s32.totalorder %s21, %s37
    %p39 = scmp.eq.s32.totalorder %s13, 0
    %p40 = por %p38, %p39
    %s41 = ssub.s32 %s7, %s14
    %p42 = scmp.eq.s32.totalorder %s41, 0
    %s44 = sadd.s32 %s43, 1
    %s45 = scalar_select %p42, %s43, %s44
    %p48 = pneg %p42
    %p49 = scmp.eq.s32.totalorder %s7, 1
    %p50 = por %p48, %p49
    %p51 = scmp.ne.s32.totalorder %s43, %s46
    %p52 = scmp.eq.s32.totalorder %s7, 0
    %p53 = por %p51, %p52
    %p54 = scmp.ne.s32.totalorder %s43, %s46
    %p55 = scmp.eq.s32.totalorder %s12, 1
    %p56 = por %p54, %p55
    %p57 = scmp.ne.s32.totalorder %s46, %s47
    %p58 = scmp.eq.s32.totalorder %s12, 0
    %p59 = por %p57, %p58
    %p60 = scmp.ne.s32.totalorder %s46, %s47
    %p61 = scmp.eq.s32.totalorder %s13, 1
    %p62 = por %p60, %p61
    %p64 = scmp.ne.s32.totalorder %s47, %s63
    %p65 = scmp.eq.s32.totalorder %s13, 0
    %p66 = por %p64, %p65
    %p67 = scmp.le.s32.totalorder 1, %s7
    %p68 = scmp.lt.s32.totalorder %s7, 3
    %p69 = pnand %p67, %p68
    %p70 = pneg %p69
    // Predicated region
    $region9: #{augmentor_forward.32} parent=5 // pred_check
      _
    $region10: #{augmentor_forward.32} parent=5 // pred_check_branch
      %72 = sbr.rel (%p69) target = $region12
    $region11: #{augmentor_forward.32} parent=5 // pred_region
      %s73 = ssub.s32 %s7, 1
    $region12: #{augmentor_forward.32} parent=5 // pred_fallthru
      _
    %p74 = scmp.lt.s32.totalorder %s7, 2
    // Predicated region
    $region13: #{augmentor_forward.32} parent=5 // pred_check
      %p75 = pneg %p74
    $region14: #{augmentor_forward.32} parent=5 // pred_check_branch
      %77 = sbr.rel (%p75) target = $region16
    $region15: #{augmentor_forward.32} parent=5 // pred_region
      // Predicated region
      $region17: #{augmentor_forward.32} parent=15 // pred_check
        %p78 = pneg %p27
      $region18: #{augmentor_forward.32} parent=15 // pred_check_branch
        %80 = sbr.rel (%p78) target = $region20
      $region19: #{augmentor_forward.32} parent=15 // pred_region
        %p81 = scmp.lt.s32.totalorder %s7, 1
        %s82 = scalar_select %p81, %s7, 1
        %s83 = smul.addr %s82, 8
        %s84 = scalar_lea.vmem %s0, %s83
      $region20: #{augmentor_forward.32} parent=15 // pred_fallthru
        _
    $region16: #{augmentor_forward.32} parent=5 // pred_fallthru
      _
    %p85 = scmp.le.s32.totalorder 1, %s7
    %p86 = scmp.lt.s32.totalorder %s7, 3
    %p87 = pnand %p85, %p86
    %p88 = pneg %p87
    // Predicated region
    $region21: #{augmentor_forward.32} parent=5 // pred_check
      _
    $region22: #{augmentor_forward.32} parent=5 // pred_check_branch
      %90 = sbr.rel (%p87) target = $region24
    $region23: #{augmentor_forward.32} parent=5 // pred_region
      %s91 = ssub.s32 %s7, 1
      %p92 = scmp.lt.s32.totalorder %s12, 1
      %s93 = scalar_select %p92, %s12, 1
      %s94 = smul.addr %s93, 8
      %s95 = scalar_lea.vmem %s0, %s94
      %p96 = pneg %p33
      %p97 = pneg %p30
      %p98 = pneg %p59
      %p99 = pneg %p56
      %p100 = scmp.lt.s32.totalorder %s12, 1
      %s101 = scalar_select %p100, %s12, 1
      %s102 = smul.addr %s101, 8
      %s103 = scalar_lea.vmem %s1, %s102
      %p104 = scmp.lt.s32.totalorder %s12, 1
      %s105 = scalar_select %p104, %s12, 1
      %s106 = smul.addr %s105, 8
      %s107 = scalar_lea.vmem %s0, %s106
      %p108 = scmp.lt.s32.totalorder %s12, 1
      %s109 = scalar_select %p108, %s12, 1
      %s110 = smul.addr %s109, 8
      %s111 = scalar_lea.vmem %s1, %s110
      %v113 = vld [vmem:[%s107] sm:$0xff]
      %v114 = vmul.f32 %v113, 0.25
      %v115 = vpack.c.bf16 %v114, %v114
      %v116 = vpack.c.bf16 %v113, %v113
      %118 = vrot.lane.b32.xlu0 %v116, 96
      %v119 = vpop.permute.xlu0 %118
      %vm120 = vcmask 130048
      %v122 = vsel %vm120, %v115, 0
      %v125 = vsel %vm120, %v119, 0
      %127 = vmatpush.bf16.xpose.msra.mxu0 0
      %128 = vmatpush.bf16.xpose.msra.mxu0 0
      %129 = vmatpush.bf16.xpose.msra.mxu0 0
      %130 = vmatpush.bf16.xpose.msra.mxu0 0
      %131 = vmatpush.bf16.xpose.msra.mxu0 0
      %132 = vmatpush.bf16.xpose.msra.mxu0 0
      %133 = vmatpush.bf16.xpose.msra.mxu0 0
      %134 = vmatpush.bf16.xpose.msra.mxu0 %v125
      %135 = vmatmul.bf16.gmra.mxu0 %v122
      %v136 = vpop.f32.mrf.mxu0
      %v137 = vadd.f32 0.0, %v136
      %v138 = vpop.f32.mrf.mxu0
      %139 = vdwg.mxu0
      %v140 = vlaneseq
      %v141 = vshrl.u32 %v140, 7
      %v142 = vlaneseq
      %v143 = vand.u32 %v142, 127
      %vm144 = vcmp.le.s32.totalorder %v143, %v141
      %v145 = vsel %vm144, %v137, -1e+30
      %vm146 = vcmask 64512
      %v147 = vsel %vm146, %v145, -inf
      %148 = vmax.xlane.f32.xlu0 %v147
      %v149 = vpop.xlane.xlu0 %148
      %v150 = vsub.f32 %v145, %v149
      %v151 = vmul.f32 %v150, 1.442695
      %v152 = vpow.pop %v151
      %v153 = vsel %vm146, %v152, 0.0
      %154 = vadd.xlane.f32.xlu0 %v153
      %v155 = vpop.xlane.xlu0 %154
      %v156 = vrcp.pop %v155
      %v157 = vpack.c.bf16 %v152, %v152
      %158 = vrot.lane.b32.xlu0 %v116, 64
      %v159 = vpop.permute.xlu0 %158
      %v161 = vsel %vm146, %v157, 0
      %vm163 = vcmask 1043456
      %v165 = vsel %vm163, %v159, 0
      %167 = vmatpush.bf16.msra.mxu0 0
      %168 = vmatpush.bf16.msra.mxu0 0
      %169 = vmatpush.bf16.msra.mxu0 0
      %170 = vmatpush.bf16.msra.mxu0 0
      %171 = vmatpush.bf16.msra.mxu0 0
      %172 = vmatpush.bf16.msra.mxu0 0
      %173 = vmatpush.bf16.msra.mxu0 0
      %174 = vmatpush.bf16.msra.mxu0 %v165
      %175 = vmatmul.bf16.gmra.mxu0 %v161
      %v176 = vpop.f32.mrf.mxu0
      %v177 = vadd.f32 0.0, %v176
      %v178 = vpop.f32.mrf.mxu0
      %179 = vdwg.mxu0
      %v180 = vmul.f32 %v177, %v156
      %182 = vrot.lane.b32.xlu0 %v115, 112
      %v183 = vpop.permute.xlu0 %182
      %184 = vrot.lane.b32.xlu0 %v116, 80
      %v185 = vpop.permute.xlu0 %184
      %v187 = vsel %vm120, %v183, 0
      %v190 = vsel %vm120, %v185, 0
      %192 = vmatpush.bf16.xpose.msra.mxu0 0
      %193 = vmatpush.bf16.xpose.msra.mxu0 0
      %194 = vmatpush.bf16.xpose.msra.mxu0 0
      %195 = vmatpush.bf16.xpose.msra.mxu0 0
      %196 = vmatpush.bf16.xpose.msra.mxu0 0
      %197 = vmatpush.bf16.xpose.msra.mxu0 0
      %198 = vmatpush.bf16.xpose.msra.mxu0 0
      %199 = vmatpush.bf16.xpose.msra.mxu0 %v190
      %200 = vmatmul.bf16.gmra.mxu0 %v187
      %v201 = vpop.f32.mrf.mxu0
      %v202 = vadd.f32 0.0, %v201
      %v203 = vpop.f32.mrf.mxu0
      %204 = vdwg.mxu0
      %v205 = vsel %vm144, %v202, -1e+30
      %v206 = vsel %vm146, %v205, -inf
      %207 = vmax.xlane.f32.xlu0 %v206
      %v208 = vpop.xlane.xlu0 %207
      %v209 = vsub.f32 %v205, %v208
      %v210 = vmul.f32 %v209, 1.442695
      %v211 = vpow.pop %v210
      %v212 = vsel %vm146, %v211, 0.0
      %213 = vadd.xlane.f32.xlu0 %v212
      %v214 = vpop.xlane.xlu0 %213
      %v215 = vrcp.pop %v214
      %v216 = vpack.c.bf16 %v211, %v211
      %217 = vrot.lane.b32.xlu0 %v116, 48
      %v218 = vpop.permute.xlu0 %217
      %v220 = vsel %vm146, %v216, 0
      %v223 = vsel %vm163, %v218, 0
      %225 = vmatpush.bf16.msra.mxu0 0
      %226 = vmatpush.bf16.msra.mxu0 0
      %227 = vmatpush.bf16.msra.mxu0 0
      %228 = vmatpush.bf16.msra.mxu0 0
      %229 = vmatpush.bf16.msra.mxu0 0
      %230 = vmatpush.bf16.msra.mxu0 0
      %231 = vmatpush.bf16.msra.mxu0 0
      %232 = vmatpush.bf16.msra.mxu0 %v223
      %233 = vmatmul.bf16.gmra.mxu0 %v220
      %v234 = vpop.f32.mrf.mxu0
      %v235 = vadd.f32 0.0, %v234
      %v236 = vpop.f32.mrf.mxu0
      %237 = vdwg.mxu0
      %v238 = vmul.f32 %v235, %v215
      %240 = vrot.lane.b32.xlu0 %v238, 16
      %v241 = vpop.permute.xlu0 %240
      %v243 = vsel %vm120, %v180, %v241
      %vm244 = vcmask 261120
      %245 = vst.msk [vmem:[%s111] sm:$0xff] %vm244, %v243
      %p246 = scmp.lt.s32.totalorder %s12, 1
      %s247 = scalar_select %p246, %s12, 1
      %s248 = smul.addr %s247, 8
      %s249 = scalar_lea.vmem %s1, %s248
      // Predicated region
      $region25: #{augmentor_forward.32} parent=23 // pred_check
        %p250 = pneg %p56
      $region26: #{augmentor_forward.32} parent=23 // pred_check_branch
        %252 = sbr.rel (%p250) target = $region28
      $region27: #{augmentor_forward.32} parent=23 // pred_region
        _
      $region28: #{augmentor_forward.32} parent=23 // pred_fallthru
        _
    $region24: #{augmentor_forward.32} parent=5 // pred_fallthru
      _
    %p253 = scmp.le.s32.totalorder 2, %s7
    // Predicated region
    $region29: #{augmentor_forward.32} parent=5 // pred_check
      %p254 = pneg %p253
    $region30: #{augmentor_forward.32} parent=5 // pred_check_branch
      %256 = sbr.rel (%p254) target = $region32
    $region31: #{augmentor_forward.32} parent=5 // pred_region
      %s257 = ssub.s32 %s7, 2
      // Predicated region
      $region33: #{augmentor_forward.32} parent=31 // pred_check
        %p258 = pneg %p62
      $region34: #{augmentor_forward.32} parent=31 // pred_check_branch
        %260 = sbr.rel (%p258) target = $region36
      $region35: #{augmentor_forward.32} parent=31 // pred_region
        %p261 = scmp.lt.s32.totalorder %s13, 1
        %s262 = scalar_select %p261, %s13, 1
        %s263 = smul.addr %s262, 8
        %s264 = scalar_lea.vmem %s1, %s263
      $region36: #{augmentor_forward.32} parent=31 // pred_fallthru
        _
    $region32: #{augmentor_forward.32} parent=5 // pred_fallthru
      _
  $region6: #{augmentor_forward.32} parent=0 // loop_footer
    %s11 = sadd.s32 1, %s7
  $region7: #{augmentor_forward.32} parent=0 // loop_footer_branch
    %6 = sbr.rel target = $region3
  $region8: #{augmentor_forward.32} parent=0 // loop_exit
    _

// kernel: augmentor_forward.37
$region0: #{augmentor_forward.37}
  #allocation0 [shape = 'u32[]', space=smem, size = 0x4, offset = 0x4, fixed_abs, tag = 'smem constant byte address 0x4 - core index']
  #allocation1 [shape = 'u32[72,128]{1,0:T(1,128)}', space=vmem, size = 0x9000, scoped, tag = 'internal scratch']
  %s0 = inlined_call_operand.vmem [shape: f32[2,8,32], index: 0, kind: input, shape index: {}]
  %s1 = inlined_call_operand.vmem [shape: f32[2,8,64], index: 1, kind: input, shape index: {}]
  %s2 = inlined_call_operand.vmem [shape: f32[2,8,32], index: 2, kind: output, shape index: {}]
  %s3 = sld [smem:[#allocation0]]
  $region41: #{augmentor_forward.37} parent=0
    _
  %s5 = ssub.s32 1, %s3
  %s6 = scalar_select 0, %s5, %s3
  loop: start=0, step=1, limit=4
  $region2: #{augmentor_forward.37} parent=0 // loop_pre_header
    _
  $region3: #{augmentor_forward.37} parent=0 // loop_header
    %s8 = sphi 0, %s12
    %p9 = scmp.ge.s32.totalorder %s8, 4
    %s18 = sphi 0, %s20
    %s21 = sphi 0, %s18
    %s22 = sphi 0, %s21
    %s38 = sphi 0, %s22
    %s44 = sphi 0, %s46
    %s47 = sphi 0, %s44
    %s48 = sphi 0, %s47
    %s64 = sphi 0, %s48
    %s70 = sphi 0, %s72
    %s73 = sphi 0, %s70
    %s74 = sphi 0, %s73
    %s90 = sphi 0, %s74
  $region4: #{augmentor_forward.37} parent=0 // loop_header_branch
    %11 = sbr.rel (%p9) target = $region8
  $region5: #{augmentor_forward.37} parent=0 // loop_body
    %s13 = ssub.s32 %s8, 1
    %s14 = ssub.s32 %s8, 2
    %s15 = sadd.s32 %s8, 1
    %s16 = ssub.s32 %s8, %s15
    %p17 = scmp.eq.s32.totalorder %s16, 0
    %s19 = sadd.s32 %s18, 1
    %s20 = scalar_select %p17, %s18, %s19
    %p23 = pneg %p17
    %p24 = scmp.eq.s32.totalorder %s8, 1
    %p25 = por %p23, %p24
    %p26 = scmp.ne.s32.totalorder %s18, %s21
    %p27 = scmp.eq.s32.totalorder %s8, 0
    %p28 = por %p26, %p27
    %p29 = scmp.ne.s32.totalorder %s18, %s21
    %p30 = scmp.eq.s32.totalorder %s13, 1
    %p31 = por %p29, %p30
    %p32 = scmp.ne.s32.totalorder %s21, %s22
    %p33 = scmp.eq.s32.totalorder %s13, 0
    %p34 = por %p32, %p33
    %p35 = scmp.ne.s32.totalorder %s21, %s22
    %p36 = scmp.eq.s32.totalorder %s14, 1
    %p37 = por %p35, %p36
    %p39 = scmp.ne.s32.totalorder %s22, %s38
    %p40 = scmp.eq.s32.totalorder %s14, 0
    %p41 = por %p39, %p40
    %s42 = ssub.s32 %s8, %s15
    %p43 = scmp.eq.s32.totalorder %s42, 0
    %s45 = sadd.s32 %s44, 1
    %s46 = scalar_select %p43, %s44, %s45
    %p49 = pneg %p43
    %p50 = scmp.eq.s32.totalorder %s8, 1
    %p51 = por %p49, %p50
    %p52 = scmp.ne.s32.totalorder %s44, %s47
    %p53 = scmp.eq.s32.totalorder %s8, 0
    %p54 = por %p52, %p53
    %p55 = scmp.ne.s32.totalorder %s44, %s47
    %p56 = scmp.eq.s32.totalorder %s13, 1
    %p57 = por %p55, %p56
    %p58 = scmp.ne.s32.totalorder %s47, %s48
    %p59 = scmp.eq.s32.totalorder %s13, 0
    %p60 = por %p58, %p59
    %p61 = scmp.ne.s32.totalorder %s47, %s48
    %p62 = scmp.eq.s32.totalorder %s14, 1
    %p63 = por %p61, %p62
    %p65 = scmp.ne.s32.totalorder %s48, %s64
    %p66 = scmp.eq.s32.totalorder %s14, 0
    %p67 = por %p65, %p66
    %s68 = ssub.s32 %s8, %s15
    %p69 = scmp.eq.s32.totalorder %s68, 0
    %s71 = sadd.s32 %s70, 1
    %s72 = scalar_select %p69, %s70, %s71
    %p75 = pneg %p69
    %p76 = scmp.eq.s32.totalorder %s8, 1
    %p77 = por %p75, %p76
    %p78 = scmp.ne.s32.totalorder %s70, %s73
    %p79 = scmp.eq.s32.totalorder %s8, 0
    %p80 = por %p78, %p79
    %p81 = scmp.ne.s32.totalorder %s70, %s73
    %p82 = scmp.eq.s32.totalorder %s13, 1
    %p83 = por %p81, %p82
    %p84 = scmp.ne.s32.totalorder %s73, %s74
    %p85 = scmp.eq.s32.totalorder %s13, 0
    %p86 = por %p84, %p85
    %p87 = scmp.ne.s32.totalorder %s73, %s74
    %p88 = scmp.eq.s32.totalorder %s14, 1
    %p89 = por %p87, %p88
    %p91 = scmp.ne.s32.totalorder %s74, %s90
    %p92 = scmp.eq.s32.totalorder %s14, 0
    %p93 = por %p91, %p92
    %p94 = scmp.le.s32.totalorder 1, %s8
    %p95 = scmp.lt.s32.totalorder %s8, 3
    %p96 = pnand %p94, %p95
    %p97 = pneg %p96
    // Predicated region
    $region9: #{augmentor_forward.37} parent=5 // pred_check
      _
    $region10: #{augmentor_forward.37} parent=5 // pred_check_branch
      %99 = sbr.rel (%p96) target = $region12
    $region11: #{augmentor_forward.37} parent=5 // pred_region
      %s100 = ssub.s32 %s8, 1
    $region12: #{augmentor_forward.37} parent=5 // pred_fallthru
      _
    %p101 = scmp.lt.s32.totalorder %s8, 2
    // Predicated region
    $region13: #{augmentor_forward.37} parent=5 // pred_check
      %p102 = pneg %p101
    $region14: #{augmentor_forward.37} parent=5 // pred_check_branch
      %104 = sbr.rel (%p102) target = $region16
    $region15: #{augmentor_forward.37} parent=5 // pred_region
      // Predicated region
      $region17: #{augmentor_forward.37} parent=15 // pred_check
        %p105 = pneg %p28
      $region18: #{augmentor_forward.37} parent=15 // pred_check_branch
        %107 = sbr.rel (%p105) target = $region20
      $region19: #{augmentor_forward.37} parent=15 // pred_region
        %p108 = scmp.lt.s32.totalorder %s8, 1
        %s109 = scalar_select %p108, %s8, 1
        %s110 = smul.addr %s109, 8
        %s111 = scalar_lea.vmem %s0, %s110
      $region20: #{augmentor_forward.37} parent=15 // pred_fallthru
        _
      // Predicated region
      $region21: #{augmentor_forward.37} parent=15 // pred_check
        %p112 = pneg %p54
      $region22: #{augmentor_forward.37} parent=15 // pred_check_branch
        %114 = sbr.rel (%p112) target = $region24
      $region23: #{augmentor_forward.37} parent=15 // pred_region
        %p115 = scmp.lt.s32.totalorder %s8, 1
        %s116 = scalar_select %p115, %s8, 1
        %s117 = smul.addr %s116, 8
        %s118 = scalar_lea.vmem %s1, %s117
      $region24: #{augmentor_forward.37} parent=15 // pred_fallthru
        _
    $region16: #{augmentor_forward.37} parent=5 // pred_fallthru
      _
    %p119 = scmp.le.s32.totalorder 1, %s8
    %p120 = scmp.lt.s32.totalorder %s8, 3
    %p121 = pnand %p119, %p120
    %p122 = pneg %p121
    // Predicated region
    $region25: #{augmentor_forward.37} parent=5 // pred_check
      _
    $region26: #{augmentor_forward.37} parent=5 // pred_check_branch
      %124 = sbr.rel (%p121) target = $region28
    $region27: #{augmentor_forward.37} parent=5 // pred_region
      %s125 = ssub.s32 %s8, 1
      %p126 = scmp.lt.s32.totalorder %s13, 1
      %s127 = scalar_select %p126, %s13, 1
      %s128 = smul.addr %s127, 8
      %s129 = scalar_lea.vmem %s0, %s128
      %p130 = pneg %p34
      %p131 = pneg %p31
      %p132 = scmp.lt.s32.totalorder %s13, 1
      %s133 = scalar_select %p132, %s13, 1
      %s134 = smul.addr %s133, 8
      %s135 = scalar_lea.vmem %s1, %s134
      %p136 = pneg %p60
      %p137 = pneg %p57
      %p138 = pneg %p86
      %p139 = pneg %p83
      %p140 = scmp.lt.s32.totalorder %s13, 1
      %s141 = scalar_select %p140, %s13, 1
      %s142 = smul.addr %s141, 8
      %s143 = scalar_lea.vmem %s2, %s142
      %p144 = scmp.lt.s32.totalorder %s13, 1
      %s145 = scalar_select %p144, %s13, 1
      %s146 = smul.addr %s145, 8
      %s147 = scalar_lea.vmem %s0, %s146
      %p148 = scmp.lt.s32.totalorder %s13, 1
      %s149 = scalar_select %p148, %s13, 1
      %s150 = smul.addr %s149, 8
      %s151 = scalar_lea.vmem %s1, %s150
      %p152 = scmp.lt.s32.totalorder %s13, 1
      %s153 = scalar_select %p152, %s13, 1
      %s154 = smul.addr %s153, 8
      %s155 = scalar_lea.vmem %s2, %s154
      %v157 = vld [vmem:[%s147] sm:$0xff]
      %v158 = vld [vmem:[%s151] sm:$0xff]
      %v159 = vmul.f32 %v157, 0.25
      %v160 = vpack.c.bf16 %v159, %v159
      %v161 = vpack.c.bf16 %v158, %v158
      %vm162 = vcmask 130048
      %v164 = vsel %vm162, %v160, 0
      %v167 = vsel %vm162, %v161, 0
      %169 = vmatpush.bf16.xpose.msra.mxu0 0
      %170 = vmatpush.bf16.xpose.msra.mxu0 0
      %171 = vmatpush.bf16.xpose.msra.mxu0 0
      %172 = vmatpush.bf16.xpose.msra.mxu0 0
      %173 = vmatpush.bf16.xpose.msra.mxu0 0
      %174 = vmatpush.bf16.xpose.msra.mxu0 0
      %175 = vmatpush.bf16.xpose.msra.mxu0 0
      %176 = vmatpush.bf16.xpose.msra.mxu0 %v167
      %177 = vmatmul.bf16.gmra.mxu0 %v164
      %v178 = vpop.f32.mrf.mxu0
      %v179 = vadd.f32 0.0, %v178
      %v180 = vpop.f32.mrf.mxu0
      %181 = vdwg.mxu0
      %vm182 = vcmask 64512
      %v183 = vsel %vm182, %v179, -inf
      %184 = vmax.xlane.f32.xlu0 %v183
      %v185 = vpop.xlane.xlu0 %184
      %v186 = vsub.f32 %v179, %v185
      %v187 = vmul.f32 %v186, 1.442695
      %v188 = vpow.pop %v187
      %v189 = vsel %vm182, %v188, 0.0
      %190 = vadd.xlane.f32.xlu0 %v189
      %v191 = vpop.xlane.xlu0 %190
      %v192 = vrcp.pop %v191
      %v193 = vpack.c.bf16 %v188, %v188
      %195 = vrot.lane.b32.xlu0 %v161, 96
      %v196 = vpop.permute.xlu0 %195
      %v198 = vsel %vm182, %v193, 0
      %vm200 = vcmask 1043456
      %v202 = vsel %vm200, %v196, 0
      %204 = vmatpush.bf16.msra.mxu0 0
      %205 = vmatpush.bf16.msra.mxu0 0
      %206 = vmatpush.bf16.msra.mxu0 0
      %207 = vmatpush.bf16.msra.mxu0 0
      %208 = vmatpush.bf16.msra.mxu0 0
      %209 = vmatpush.bf16.msra.mxu0 0
      %210 = vmatpush.bf16.msra.mxu0 0
      %211 = vmatpush.bf16.msra.mxu0 %v202
      %212 = vmatmul.bf16.gmra.mxu0 %v198
      %v213 = vpop.f32.mrf.mxu0
      %v214 = vadd.f32 0.0, %v213
      %v215 = vpop.f32.mrf.mxu0
      %216 = vdwg.mxu0
      %v217 = vmul.f32 %v214, %v192
      %219 = vrot.lane.b32.xlu0 %v160, 112
      %v220 = vpop.permute.xlu0 %219
      %221 = vrot.lane.b32.xlu0 %v161, 112
      %v222 = vpop.permute.xlu0 %221
      %v224 = vsel %vm162, %v220, 0
      %v227 = vsel %vm162, %v222, 0
      %229 = vmatpush.bf16.xpose.msra.mxu0 0
      %230 = vmatpush.bf16.xpose.msra.mxu0 0
      %231 = vmatpush.bf16.xpose.msra.mxu0 0
      %232 = vmatpush.bf16.xpose.msra.mxu0 0
      %233 = vmatpush.bf16.xpose.msra.mxu0 0
      %234 = vmatpush.bf16.xpose.msra.mxu0 0
      %235 = vmatpush.bf16.xpose.msra.mxu0 0
      %236 = vmatpush.bf16.xpose.msra.mxu0 %v227
      %237 = vmatmul.bf16.gmra.mxu0 %v224
      %v238 = vpop.f32.mrf.mxu0
      %v239 = vadd.f32 0.0, %v238
      %v240 = vpop.f32.mrf.mxu0
      %241 = vdwg.mxu0
      %v242 = vsel %vm182, %v239, -inf
      %243 = vmax.xlane.f32.xlu0 %v242
      %v244 = vpop.xlane.xlu0 %243
      %v245 = vsub.f32 %v239, %v244
      %v246 = vmul.f32 %v245, 1.442695
      %v247 = vpow.pop %v246
      %v248 = vsel %vm182, %v247, 0.0
      %249 = vadd.xlane.f32.xlu0 %v248
      %v250 = vpop.xlane.xlu0 %249
      %v251 = vrcp.pop %v250
      %v252 = vpack.c.bf16 %v247, %v247
      %253 = vrot.lane.b32.xlu0 %v161, 80
      %v254 = vpop.permute.xlu0 %253
      %v256 = vsel %vm182, %v252, 0
      %v259 = vsel %vm200, %v254, 0
      %261 = vmatpush.bf16.msra.mxu0 0
      %262 = vmatpush.bf16.msra.mxu0 0
      %263 = vmatpush.bf16.msra.mxu0 0
      %264 = vmatpush.bf16.msra.mxu0 0
      %265 = vmatpush.bf16.msra.mxu0 0
      %266 = vmatpush.bf16.msra.mxu0 0
      %267 = vmatpush.bf16.msra.mxu0 0
      %268 = vmatpush.bf16.msra.mxu0 %v259
      %269 = vmatmul.bf16.gmra.mxu0 %v256
      %v270 = vpop.f32.mrf.mxu0
      %v271 = vadd.f32 0.0, %v270
      %v272 = vpop.f32.mrf.mxu0
      %273 = vdwg.mxu0
      %v274 = vmul.f32 %v271, %v251
      %276 = vrot.lane.b32.xlu0 %v274, 16
      %v277 = vpop.permute.xlu0 %276
      %v279 = vsel %vm162, %v217, %v277
      %vm280 = vcmask 261120
      %281 = vst.msk [vmem:[%s155] sm:$0xff] %vm280, %v279
      %p282 = scmp.lt.s32.totalorder %s13, 1
      %s283 = scalar_select %p282, %s13, 1
      %s284 = smul.addr %s283, 8
      %s285 = scalar_lea.vmem %s2, %s284
      // Predicated region
      $region29: #{augmentor_forward.37} parent=27 // pred_check
        %p286 = pneg %p83
      $region30: #{augmentor_forward.37} parent=27 // pred_check_branch
        %288 = sbr.rel (%p286) target = $region32
      $region31: #{augmentor_forward.37} parent=27 // pred_region
        _
      $region32: #{augmentor_forward.37} parent=27 // pred_fallthru
        _
    $region28: #{augmentor_forward.37} parent=5 // pred_fallthru
      _
    %p289 = scmp.le.s32.totalorder 2, %s8
    // Predicated region
    $region33: #{augmentor_forward.37} parent=5 // pred_check
      %p290 = pneg %p289
    $region34: #{augmentor_forward.37} parent=5 // pred_check_branch
      %292 = sbr.rel (%p290) target = $region36
    $region35: #{augmentor_forward.37} parent=5 // pred_region
      %s293 = ssub.s32 %s8, 2
      // Predicated region
      $region37: #{augmentor_forward.37} parent=35 // pred_check
        %p294 = pneg %p89
      $region38: #{augmentor_forward.37} parent=35 // pred_check_branch
        %296 = sbr.rel (%p294) target = $region40
      $region39: #{augmentor_forward.37} parent=35 // pred_region
        %p297 = scmp.lt.s32.totalorder %s14, 1
        %s298 = scalar_select %p297, %s14, 1
        %s299 = smul.addr %s298, 8
        %s300 = scalar_lea.vmem %s2, %s299
      $region40: #{augmentor_forward.37} parent=35 // pred_fallthru
        _
    $region36: #{augmentor_forward.37} parent=5 // pred_fallthru
      _
  $region6: #{augmentor_forward.37} parent=0 // loop_footer
    %s12 = sadd.s32 1, %s8
  $region7: #{augmentor_forward.37} parent=0 // loop_footer_branch
    %7 = sbr.rel target = $region3
  $region8: #{augmentor_forward.37} parent=0 // loop_exit
    _

// kernel: augmentor_forward.43
$region0: #{augmentor_forward.43}
  #allocation0 [shape = 'u32[]', space=smem, size = 0x4, offset = 0x4, fixed_abs, tag = 'smem constant byte address 0x4 - core index']
  #allocation1 [shape = 'u32[72,128]{1,0:T(1,128)}', space=vmem, size = 0x9000, scoped, tag = 'internal scratch']
  #allocation2 [shape = 'f32[16,1]{1,0:T(8,128)}', space=vmem, size = 0x2000, scoped, tag = 'scratch operand']
  #allocation3 [shape = 'f32[16,1]{1,0:T(8,128)}', space=vmem, size = 0x2000, scoped, tag = 'scratch operand']
  #allocation4 [shape = 'f32[16,1]{1,0:T(8,128)}', space=vmem, size = 0x2000, scoped, tag = 'scratch operand']
  %s0 = inlined_call_operand.vmem [shape: f32[16,32], index: 0, kind: input, shape index: {}]
  %s1 = inlined_call_operand.vmem [shape: bf16[32,128], index: 1, kind: input, shape index: {}]
  %s2 = inlined_call_operand.vmem [shape: f32[1,128], index: 2, kind: input, shape index: {}]
  %s3 = inlined_call_operand.vmem [shape: s32[16,1], index: 3, kind: input, shape index: {}]
  %s4 = inlined_call_operand.vmem [shape: f32[16,1], index: 4, kind: input, shape index: {}]
  %s5 = inlined_call_operand.hbm [shape: f32[1,1], index: 5, kind: output, shape index: {}]
  %s6 = sld [smem:[#allocation0]]
  $region38: #{augmentor_forward.43} parent=0
    _
  %s8 = ssub.s32 1, %s6
  %s9 = scalar_select 0, %s8, %s6
  $region1: #{augmentor_forward.43} parent=0
    #allocation5 [shape = 'u8[512]{0}', space=vmem, size = 0x400, scoped, tag = 'output window, operand 0, single buffered']
    #allocation6 [shape = 's32[1]{0}', space=sflag, size = 0x4, scoped, tag = 'scoped memory for augmentor_forward.43']
    %10 = vsyncpa [#allocation6], 0
    // Predicated region
    $region2: #{augmentor_forward.43} parent=1 // pred_check
      _
    $region3: #{augmentor_forward.43} parent=1 // pred_check_branch
      %12 = sbr.rel (0) target = $region5
    $region4: #{augmentor_forward.43} parent=1 // pred_region
      _
    $region5: #{augmentor_forward.43} parent=1 // pred_fallthru
      _
    // Predicated region
    $region6: #{augmentor_forward.43} parent=1 // pred_check
      _
    $region7: #{augmentor_forward.43} parent=1 // pred_check_branch
      %14 = sbr.rel (0) target = $region9
    $region8: #{augmentor_forward.43} parent=1 // pred_region
      _
    $region9: #{augmentor_forward.43} parent=1 // pred_fallthru
      _
    // Predicated region
    $region10: #{augmentor_forward.43} parent=1 // pred_check
      _
    $region11: #{augmentor_forward.43} parent=1 // pred_check_branch
      %16 = sbr.rel (0) target = $region13
    $region12: #{augmentor_forward.43} parent=1 // pred_region
      _
    $region13: #{augmentor_forward.43} parent=1 // pred_fallthru
      _
    // Predicated region
    $region14: #{augmentor_forward.43} parent=1 // pred_check
      _
    $region15: #{augmentor_forward.43} parent=1 // pred_check_branch
      %18 = sbr.rel (0) target = $region17
    $region16: #{augmentor_forward.43} parent=1 // pred_region
      _
    $region17: #{augmentor_forward.43} parent=1 // pred_fallthru
      _
    // Predicated region
    $region18: #{augmentor_forward.43} parent=1 // pred_check
      _
    $region19: #{augmentor_forward.43} parent=1 // pred_check_branch
      %20 = sbr.rel (0) target = $region21
    $region20: #{augmentor_forward.43} parent=1 // pred_region
      _
    $region21: #{augmentor_forward.43} parent=1 // pred_fallthru
      _
    %p22 = scmp.eq.s32.totalorder 0, 0
    // Predicated region
    $region22: #{augmentor_forward.43} parent=1 // pred_check
      %p23 = pneg %p22
    $region23: #{augmentor_forward.43} parent=1 // pred_check_branch
      %25 = sbr.rel (%p23) target = $region25
    $region24: #{augmentor_forward.43} parent=1 // pred_region
      %vm26 = vcmask 7168
      %27 = vst.msk [vmem:[#allocation2] sm:$0xff] %vm26, -1e+30
      %28 = vst.msk [vmem:[#allocation2 + $0x8] sm:$0xff] %vm26, -1e+30
      %29 = vst.msk [vmem:[#allocation3] sm:$0xff] %vm26, 0.0
      %30 = vst.msk [vmem:[#allocation3 + $0x8] sm:$0xff] %vm26, 0.0
      %31 = vst.msk [vmem:[#allocation4] sm:$0xff] %vm26, 0.0
      %32 = vst.msk [vmem:[#allocation4 + $0x8] sm:$0xff] %vm26, 0.0
    $region25: #{augmentor_forward.43} parent=1 // pred_fallthru
      _
    %v33 = vld [vmem:[%s0] sm:$0xff]
    %v34 = vld [vmem:[%s0 + $0x8] sm:$0xff]
    %v35 = vpack.c.bf16 %v34, %v33
    %v36 = vld [vmem:[%s1] sm:$0xf]
    %v37 = vld [vmem:[%s1 + $0x4] sm:$0xf]
    %v38 = vld [vmem:[%s1 + $0x8] sm:$0xf]
    %v39 = vld [vmem:[%s1 + $0xc] sm:$0xf]
    %v40 = vld [vmem:[%s2] sm:$0x1]
    %v42 = vperm.slane %v40, 0
    %v48 = vunpack.c.l.b16 %v36
    %v49 = vunpack.c.l.b16 %v37
    %v50 = vunpack.c.l.b16 %v38
    %v51 = vunpack.c.l.b16 %v39
    %v52 = vpack.c.b16 %v49, %v48
    %v53 = vpack.c.b16 %v51, %v50
    %vm56 = vcmask 261120
    %v58 = vsel %vm56, %v35, 0
    %60 = vmatpush.bf16.msra.mxu0 0
    %61 = vmatpush.bf16.msra.mxu0 0
    %62 = vmatpush.bf16.msra.mxu0 0
    %63 = vmatpush.bf16.msra.mxu0 0
    %64 = vmatpush.bf16.msra.mxu0 0
    %65 = vmatpush.bf16.msra.mxu0 0
    %66 = vmatpush.bf16.msra.mxu0 %v53
    %67 = vmatpush.bf16.msra.mxu0 %v52
    %68 = vmatmul.bf16.gmra.mxu0 %v58
    %v69 = vpop.f32.mrf.mxu0
    %v70 = vadd.f32 %v42, %v69
    %v71 = vpop.f32.mrf.mxu0
    %v72 = vadd.f32 %v42, %v71
    %73 = vdwg.mxu0
    %v74 = vld [vmem:[#allocation2] sm:$0xff]
    %v75 = vld [vmem:[#allocation2 + $0x8] sm:$0xff]
    %76 = vmax.xlane.f32.xlu0 %v70
    %v77 = vpop.xlane.xlu0 %76
    %78 = vmax.xlane.f32.xlu0 %v72
    %v79 = vpop.xlane.xlu0 %78
    %v80 = vmax.f32 %v74, %v77
    %v81 = vmax.f32 %v75, %v79
    %v82 = vld [vmem:[#allocation3] sm:$0xff]
    %v83 = vld [vmem:[#allocation3 + $0x8] sm:$0xff]
    %v84 = vsub.f32 %v74, %v80
    %v85 = vsub.f32 %v75, %v81
    %v86 = vmul.f32 %v84, 1.442695
    %v87 = vpow.pop %v86
    %v88 = vmul.f32 %v85, 1.442695
    %v89 = vpow.pop %v88
    %v90 = vmul.f32 %v82, %v87
    %v91 = vmul.f32 %v83, %v89
    %93 = vset.pattern.permute.xlu0 0
    %94 = vperm.xlu0 %93, %v80
    %v95 = vpop.permute.xlu0 %94
    %98 = vset.pattern.permute.xlu0 0
    %99 = vperm.xlu0 %98, %v81
    %v100 = vpop.permute.xlu0 %99
    %v102 = vsub.f32 %v70, %v95
    %v103 = vsub.f32 %v72, %v100
    %v104 = vmul.f32 %v102, 1.442695
    %v105 = vpow.pop %v104
    %v106 = vmul.f32 %v103, 1.442695
    %v107 = vpow.pop %v106
    %108 = vadd.xlane.f32.xlu0 %v105
    %v109 = vpop.xlane.xlu0 %108
    %110 = vadd.xlane.f32.xlu0 %v107
    %v111 = vpop.xlane.xlu0 %110
    %v112 = vadd.f32 %v90, %v109
    %v113 = vadd.f32 %v91, %v111
    %vm114 = vcmask 7168
    %115 = vst.msk [vmem:[#allocation3] sm:$0xff] %vm114, %v112
    %116 = vst.msk [vmem:[#allocation3 + $0x8] sm:$0xff] %vm114, %v113
    %117 = vst.msk [vmem:[#allocation2] sm:$0xff] %vm114, %v80
    %118 = vst.msk [vmem:[#allocation2 + $0x8] sm:$0xff] %vm114, %v81
    %v119 = vlaneseq
    %v120 = vand.u32 %v119, 127
    %s121 = smul.u32 0, 128
    %v122 = vstv %s121
    %v123 = vadd.s32 %v120, %v122
    %v124 = vld [vmem:[%s3] sm:$0xff]
    %v125 = vld [vmem:[%s3 + $0x8] sm:$0xff]
    %126 = vset.pattern.permute.xlu0 0
    %127 = vperm.xlu0 %126, %v124
    %v128 = vpop.permute.xlu0 %127
    %129 = vset.pattern.permute.xlu0 0
    %130 = vperm.xlu0 %129, %v125
    %v131 = vpop.permute.xlu0 %130
    %vm132 = vcmp.eq.s32.totalorder %v123, %v128
    %vm133 = vcmp.eq.s32.totalorder %v123, %v131
    %v134 = vsel %vm132, 1, 0
    %v135 = vsel %vm133, 1, 0
    %v136 = vcvt.s32.f32 %v134
    %v137 = vcvt.s32.f32 %v135
    %v138 = vld [vmem:[#allocation4] sm:$0xff]
    %v139 = vld [vmem:[#allocation4 + $0x8] sm:$0xff]
    %v140 = vmul.f32 %v70, %v136
    %v141 = vmul.f32 %v72, %v137
    %142 = vadd.xlane.f32.xlu0 %v140
    %v143 = vpop.xlane.xlu0 %142
    %144 = vadd.xlane.f32.xlu0 %v141
    %v145 = vpop.xlane.xlu0 %144
    %v146 = vadd.f32 %v138, %v143
    %v147 = vadd.f32 %v139, %v145
    %148 = vst.msk [vmem:[#allocation4] sm:$0xff] %vm114, %v146
    %149 = vst.msk [vmem:[#allocation4 + $0x8] sm:$0xff] %vm114, %v147
    // Predicated region
    $region26: #{augmentor_forward.43} parent=1 // pred_check
      %p150 = pneg %p22
    $region27: #{augmentor_forward.43} parent=1 // pred_check_branch
      %152 = sbr.rel (%p150) target = $region29
    $region28: #{augmentor_forward.43} parent=1 // pred_region
      %v153 = vld [vmem:[%s4] sm:$0xff]
      %v154 = vld [vmem:[%s4 + $0x8] sm:$0xff]
      %v155 = vld [vmem:[#allocation2] sm:$0xff]
      %v156 = vld [vmem:[#allocation2 + $0x8] sm:$0xff]
      %v157 = vld [vmem:[#allocation3] sm:$0xff]
      %v158 = vld [vmem:[#allocation3 + $0x8] sm:$0xff]
      %v159 = vlog2.pop %v157
      %v160 = vmul.f32 %v159, 0.6931472
      %v161 = vlog2.pop %v158
      %v162 = vmul.f32 %v161, 0.6931472
      %v163 = vadd.f32 %v155, %v160
      %v164 = vadd.f32 %v156, %v162
      %v165 = vld [vmem:[#allocation4] sm:$0xff]
      %v166 = vld [vmem:[#allocation4 + $0x8] sm:$0xff]
      %v167 = vsub.f32 %v163, %v165
      %v168 = vsub.f32 %v164, %v166
      %v169 = vmul.f32 %v167, %v153
      %v170 = vmul.f32 %v168, %v154
      %v171 = vsel %vm114, %v169, 0.0
      %v172 = vsel %vm114, %v170, 0.0
      %v173 = vadd.f32 %v171, %v172
      %v174 = vrot.slane %v173, 4
      %v175 = vadd.f32 %v173, %v174
      %v176 = vrot.slane %v175, 2
      %v177 = vadd.f32 %v175, %v176
      %v178 = vrot.slane %v177, 1
      %v179 = vadd.f32 %v177, %v178
      %v180 = vsel %vm114, %v153, 0.0
      %v181 = vsel %vm114, %v154, 0.0
      %v182 = vadd.f32 %v180, %v181
      %v183 = vrot.slane %v182, 4
      %v184 = vadd.f32 %v182, %v183
      %v185 = vrot.slane %v184, 2
      %v186 = vadd.f32 %v184, %v185
      %v187 = vrot.slane %v186, 1
      %v188 = vadd.f32 %v186, %v187
      %v189 = vmax.f32 %v188, 1.0
      %v190 = vrcp.pop %v189
      %v191 = vmul.f32 %v189, %v190
      %v192 = vsub.f32 1.0, %v191
      %v193 = vmul.f32 %v190, %v192
      %v194 = vadd.f32 %v190, %v193
      %vm195 = vweird.f32 %v189
      %vm196 = vweird.f32 %v190
      %vm197 = vmor %vm195, %vm196
      %v198 = vsel %vm197, %v190, %v194
      %v199 = vand.u32 2147483647, %v189
      %vm200 = vcmp.eq.f32.partialorder %v199, 8.507059e+37
      %v201 = vand.u32 %v189, 2147483648
      %v202 = vor.u32 1.1754944e-38, %v201
      %v203 = vsel %vm200, %v202, %v198
      %v204 = vmul.f32 %v179, %v203
      %vm205 = vcmask 0
      %206 = vst.msk [vmem:[#allocation5] sm:$0x1] %vm205, %v204
    $region29: #{augmentor_forward.43} parent=1 // pred_fallthru
      _
    // Predicated region
    $region30: #{augmentor_forward.43} parent=1 // pred_check
      _
    $region31: #{augmentor_forward.43} parent=1 // pred_check_branch
      %208 = sbr.rel (0) target = $region33
    $region32: #{augmentor_forward.43} parent=1 // pred_region
      %210 = vsyncadd [#allocation6], 0
      %s212 = sshll.u32 [#allocation5], 4
      %s213 = int_to_ptr.vmem [resolvable:$true] %s212
      %s214 = sshll.u32 %s5, 4
      %s215 = int_to_ptr.hbm [resolvable:$true] %s214
      %217 = dma.vmem_to_hbm [thread:$0]  %s213, 16, %s215, [#allocation6]
    $region33: #{augmentor_forward.43} parent=1 // pred_fallthru
      _
    // Predicated region
    $region34: #{augmentor_forward.43} parent=1 // pred_check
      _
    $region35: #{augmentor_forward.43} parent=1 // pred_check_branch
      %219 = sbr.rel (0) target = $region37
    $region36: #{augmentor_forward.43} parent=1 // pred_region
      %221 = dma.done [#allocation6], 16
    $region37: #{augmentor_forward.43} parent=1 // pred_fallthru
      _
    %222 = vsyncpa [#allocation6], 1

</llo_original>
